<compile_context>
chip_gen: v6e
topology: v6e:2x2x1
jax: 0.10.0
libtpu: 0.0.40
codegen_flags: <defaults>
</compile_context>

<pallas_src>
import numpy as np

import jax
import jax.numpy as jnp
from jax.experimental import pallas as pl
from jax.experimental.pallas import tpu as pltpu


def _round_up(n, m):
    return ((n + m - 1) // m) * m


def _const_spec(shape):
    zeros = (0,) * len(shape)
    return pl.BlockSpec(shape, lambda i, _z=zeros: _z)


# ----------------------------------------------------------------------------
# Fused forward kernel: one batch tile of TB samples per grid step.
# Activation layout: rows = h*TB + b   (spatial-row major, batch minor)
#                    lanes = w*C + c   (spatial-col major, channel minor)
# ----------------------------------------------------------------------------
def _net_kernel(x_ref, m1_ref, b1_ref, m2_ref, b2_ref,
                s1e_ref, s1o_ref, s2e_ref, s2o_ref,
                fw1_ref, fb1_ref, fw2_ref, fb2_ref,
                out_ref,
                a1_ref, p1_ref, a2_ref, p2_ref):
    f32 = jnp.float32
    tb = x_ref.shape[1]                       # batch-tile size (multiple of 8)

    # --- conv1: 1x28x28 -> 10x24x24  (5 banded matmuls, one per kernel row) --
    acc1 = jnp.dot(x_ref[pl.ds(0, 24), :, :].reshape(24 * tb, 28), m1_ref[0],
                   preferred_element_type=f32)
    for ki in range(1, 5):
        rows = x_ref[pl.ds(ki, 24), :, :].reshape(24 * tb, 28)
        acc1 = acc1 + jnp.dot(rows, m1_ref[ki], preferred_element_type=f32)
    acc1 = acc1 + b1_ref[...]                 # (24*TB, 240), lanes = wo*10+co
    a1_ref[...] = acc1.reshape(12, 2, tb, 240)

    # --- 2x2 max-pool + ReLU -> 10x12x12 -------------------------------------
    r1 = jnp.maximum(a1_ref[:, 0, :, :], a1_ref[:, 1, :, :]).reshape(12 * tb, 240)
    p1 = jnp.maximum(
        jnp.maximum(jnp.dot(r1, s1e_ref[...], preferred_element_type=f32),
                    jnp.dot(r1, s1o_ref[...], preferred_element_type=f32)),
        0.0)                                   # (12*TB, 120), lanes = w*10+c
    p1_ref[...] = p1.reshape(12, tb, 120)

    # --- conv2: 10x12x12 -> 20x8x8 -------------------------------------------
    # TODO(synk): training-mode nn.Dropout2d (whole-channel dropout) is not
    # implemented; eval-mode identity semantics are used.
    acc2 = jnp.dot(p1_ref[pl.ds(0, 8), :, :].reshape(8 * tb, 120), m2_ref[0],
                   preferred_element_type=f32)
    for ki in range(1, 5):
        rows = p1_ref[pl.ds(ki, 8), :, :].reshape(8 * tb, 120)
        acc2 = acc2 + jnp.dot(rows, m2_ref[ki], preferred_element_type=f32)
    acc2 = acc2 + b2_ref[...]                 # (8*TB, 160), lanes = wo*20+d
    a2_ref[...] = acc2.reshape(4, 2, tb, 160)

    # --- 2x2 max-pool + ReLU -> 20x4x4 ---------------------------------------
    r2 = jnp.maximum(a2_ref[:, 0, :, :], a2_ref[:, 1, :, :]).reshape(4 * tb, 160)
    p2 = jnp.maximum(
        jnp.maximum(jnp.dot(r2, s2e_ref[...], preferred_element_type=f32),
                    jnp.dot(r2, s2o_ref[...], preferred_element_type=f32)),
        0.0)                                   # (4*TB, 80), lanes = w*20+c
    p2_ref[...] = p2.reshape(4, tb, 80)

    # --- fc1 + ReLU (320 -> 50): contract the 4 spatial rows in-register -----
    h1 = jnp.dot(p2_ref[0], fw1_ref[0], preferred_element_type=f32)
    for i in range(1, 4):
        h1 = h1 + jnp.dot(p2_ref[i], fw1_ref[i], preferred_element_type=f32)
    h1 = jnp.maximum(h1 + fb1_ref[...], 0.0)   # (TB, 50)

    # --- fc2 (50 -> 10) + log_softmax ----------------------------------------
    logits = jnp.dot(h1, fw2_ref[...], preferred_element_type=f32) + fb2_ref[...]
    z = logits - jnp.max(logits, axis=-1, keepdims=True)
    out_ref[...] = (z - jnp.log(jnp.sum(jnp.exp(z), axis=-1, keepdims=True))
                    ).astype(out_ref.dtype)


# ----------------------------------------------------------------------------
# Weight preparation (pure JAX/NumPy glue; done once per call outside kernel).
# ----------------------------------------------------------------------------
def _prep_weights(p):
    f32 = jnp.float32
    w1 = p["conv1_w"].astype(f32)     # (10, 1, 5, 5)   [co, ci, ki, kj]
    b1 = p["conv1_b"].astype(f32)     # (10,)
    w2 = p["conv2_w"].astype(f32)     # (20, 10, 5, 5)  [d, c, ki, kj]
    b2 = p["conv2_b"].astype(f32)     # (20,)

    # Band selectors T[kj, w_in, w_out] = 1 iff w_in == w_out + kj.
    t1 = np.zeros((5, 28, 24), np.float32)
    t2 = np.zeros((5, 12, 8), np.float32)
    for kj in range(5):
        t1[kj, np.arange(24) + kj, np.arange(24)] = 1.0
        t2[kj, np.arange(8) + kj, np.arange(8)] = 1.0

    # conv1 banded weights: M1[ki, w_in, wo*10+co] = w1[co, 0, ki, w_in - wo]
    m1 = jnp.einsum("jlw,cakj->klwc", jnp.asarray(t1), w1).reshape(5, 28, 240)
    b1t = jnp.tile(b1, 24).reshape(1, 240)
    # conv2 banded weights: M2[ki, w*10+c, wo*20+d] = w2[d, c, ki, w - wo]
    m2 = jnp.einsum("jab,dckj->kacbd", jnp.asarray(t2), w2).reshape(5, 120, 160)
    b2t = jnp.tile(b2, 8).reshape(1, 160)

    # 2x2 max-pool column compaction: exact 0/1 selection matrices.
    s1e = np.zeros((240, 120), np.float32)
    s1o = np.zeros((240, 120), np.float32)
    for j in range(12):
        s1e[(2 * j) * 10:(2 * j) * 10 + 10, j * 10:j * 10 + 10] = np.eye(10)
        s1o[(2 * j + 1) * 10:(2 * j + 1) * 10 + 10, j * 10:j * 10 + 10] = np.eye(10)
    s2e = np.zeros((160, 80), np.float32)
    s2o = np.zeros((160, 80), np.float32)
    for j in range(4):
        s2e[(2 * j) * 20:(2 * j) * 20 + 20, j * 20:j * 20 + 20] = np.eye(20)
        s2o[(2 * j + 1) * 20:(2 * j + 1) * 20 + 20, j * 20:j * 20 + 20] = np.eye(20)

    # fc1: permute columns from PyTorch's (c, h, w) flatten order to the
    # kernel's (h, w, c) layout and split by spatial row h -> (4, 80, 50).
    fw1 = (p["fc1_w"].astype(f32).reshape(50, 20, 4, 4)
           .transpose(2, 3, 1, 0).reshape(4, 80, 50))
    fb1 = p["fc1_b"].astype(f32).reshape(1, 50)
    fw2 = p["fc2_w"].astype(f32).T            # (50, 10)
    fb2 = p["fc2_b"].astype(f32).reshape(1, 10)

    return (m1, b1t, m2, b2t,
            jnp.asarray(s1e), jnp.asarray(s1o), jnp.asarray(s2e), jnp.asarray(s2o),
            fw1, fb1, fw2, fb2)


# ----------------------------------------------------------------------------
# Full forward pass (matches PyTorch Net.forward, eval mode).
# ----------------------------------------------------------------------------
def net_forward(x, p, *, tile_batch=64):
    # x: (B, 1, 28, 28) float32, NCHW like PyTorch.
    B = x.shape[0]
    consts = _prep_weights(p)

    # Batch tile: a multiple of 8 (sublane tile) so every in-kernel row
    # regrouping is tile-aligned.
    tb = min(int(tile_batch), _round_up(B, 8))
    tb = _round_up(tb, 8)
    b_pad = _round_up(B, tb)

    # (B, 1, 28, 28) -> (28, B_pad, 28) = (h, b, w): W on lanes, batch tile on
    # the sublane axis.
    xt = jnp.transpose(x.reshape(B, 28, 28), (1, 0, 2))
    if b_pad != B:
        xt = jnp.pad(xt, ((0, 0), (0, b_pad - B), (0, 0)))

    in_specs = [pl.BlockSpec((28, tb, 28), lambda i: (0, i, 0))]
    in_specs += [_const_spec(c.shape) for c in consts]

    out = pl.pallas_call(
        _net_kernel,
        out_shape=jax.ShapeDtypeStruct((b_pad, 10), jnp.float32),
        grid_spec=pltpu.PrefetchScalarGridSpec(
            num_scalar_prefetch=0,
            grid=(b_pad // tb,),
            in_specs=in_specs,
            out_specs=pl.BlockSpec((tb, 10), lambda i: (i, 0)),
            scratch_shapes=[
                pltpu.VMEM((12, 2, tb, 240), jnp.float32),   # conv1 output
                pltpu.VMEM((12, tb, 120), jnp.float32),      # pool1 output
                pltpu.VMEM((4, 2, tb, 160), jnp.float32),    # conv2 output
                pltpu.VMEM((4, tb, 80), jnp.float32),        # pool2 output
            ]),
        compiler_params=pltpu.CompilerParams(
            dimension_semantics=("parallel",),   # shard batch tiles over TCs
            vmem_limit_bytes=32 * 1024 * 1024),
    )(xt, *consts)
    return out[:B]                               # drop batch padding


# ----------------------------------------------------------------------------
# Deterministic parameter init (PyTorch shapes, uniform(+-1/sqrt(fan_in)))
# ----------------------------------------------------------------------------
def init_params(key):
    ks = jax.random.split(key, 8)

    def u(k, shape, fan_in):
        bound = 1.0 / (fan_in ** 0.5)
        return jax.random.uniform(k, shape, jnp.float32, -bound, bound)

    return {
        "conv1_w": u(ks[0], (10, 1, 5, 5), 1 * 25),
        "conv1_b": u(ks[1], (10,), 1 * 25),
        "conv2_w": u(ks[2], (20, 10, 5, 5), 10 * 25),
        "conv2_b": u(ks[3], (20,), 10 * 25),
        "fc1_w":   u(ks[4], (50, 320), 320),
        "fc1_b":   u(ks[5], (50,), 320),
        "fc2_w":   u(ks[6], (10, 50), 50),
        "fc2_b":   u(ks[7], (10,), 50),
    }


# ----------------------------------------------------------------------------
# Pure-JAX reference (numerical sanity check)
# ----------------------------------------------------------------------------
def reference_forward(x, p):
    def conv(x, w, b):
        y = jax.lax.conv_general_dilated(
            x, w, (1, 1), "VALID",
            dimension_numbers=("NCHW", "OIHW", "NCHW"),
            precision=jax.lax.Precision.HIGHEST)
        return y + b[None, :, None, None]

    def pool_relu(x):
        y = jax.lax.reduce_window(x, -jnp.inf, jax.lax.max,
                                  (1, 1, 2, 2), (1, 1, 2, 2), "VALID")
        return jnp.maximum(y, 0.0)

    h = pool_relu(conv(x, p["conv1_w"], p["conv1_b"]))
    h = pool_relu(conv(h, p["conv2_w"], p["conv2_b"]))
    h = h.reshape(-1, 320)
    h = jnp.maximum(jnp.dot(h, p["fc1_w"].T, precision=jax.lax.Precision.HIGHEST)
                    + p["fc1_b"], 0.0)
    h = jnp.dot(h, p["fc2_w"].T, precision=jax.lax.Precision.HIGHEST) + p["fc2_b"]
    return jax.nn.log_softmax(h, axis=1)


if __name__ == "__main__":
    key = jax.random.PRNGKey(0)
    pkey, xkey = jax.random.split(key)
    params = init_params(pkey)
    x = jax.random.normal(xkey, (2, 1, 28, 28), jnp.float32)   # MNIST-sized NCHW

    out = jax.jit(net_forward)(x, params)
    out = jax.block_until_ready(out)

    assert out.shape == (2, 10), out.shape
    ref = reference_forward(x, params)
    if not bool(jnp.allclose(out, ref, atol=2e-3, rtol=2e-3)):
        raise AssertionError("Pallas output mismatches JAX reference")
    print("KERNEL_OK")
</pallas_src>

<mosaic_0001>
module attributes {stable_mosaic.version = 11 : i64} {
  func.func @_net_kernel(%arg0: i32, %arg1: memref<28x8x28xf32, #tpu.memory_space<vmem>>, %arg2: memref<5x28x240xf32, #tpu.memory_space<vmem>>, %arg3: memref<1x240xf32, #tpu.memory_space<vmem>>, %arg4: memref<5x120x160xf32, #tpu.memory_space<vmem>>, %arg5: memref<1x160xf32, #tpu.memory_space<vmem>>, %arg6: memref<240x120xf32, #tpu.memory_space<vmem>>, %arg7: memref<240x120xf32, #tpu.memory_space<vmem>>, %arg8: memref<160x80xf32, #tpu.memory_space<vmem>>, %arg9: memref<160x80xf32, #tpu.memory_space<vmem>>, %arg10: memref<4x80x50xf32, #tpu.memory_space<vmem>>, %arg11: memref<1x50xf32, #tpu.memory_space<vmem>>, %arg12: memref<50x10xf32, #tpu.memory_space<vmem>>, %arg13: memref<1x10xf32, #tpu.memory_space<vmem>>, %arg14: memref<8x10xf32, #tpu.memory_space<vmem>>, %arg15: memref<12x2x8x240xf32, #tpu.memory_space<vmem>>, %arg16: memref<12x8x120xf32, #tpu.memory_space<vmem>>, %arg17: memref<4x2x8x160xf32, #tpu.memory_space<vmem>>, %arg18: memref<4x8x80xf32, #tpu.memory_space<vmem>>) attributes {dimension_semantics = [#tpu.dimension_semantics<parallel>], iteration_bounds = array<i64: 1>, scalar_prefetch = 0 : i64, scratch_operands = 4 : i64, tpu.core_type = #tpu.core_type<tc>, window_params = [{transform_indices = @transform_0, window_bounds = array<i64: 28, 8, 28>}, {pipeline_mode = #tpu.pipeline_mode<synchronous>, transform_indices = @transform_1, window_bounds = array<i64: 5, 28, 240>}, {pipeline_mode = #tpu.pipeline_mode<synchronous>, transform_indices = @transform_2, window_bounds = array<i64: 1, 240>}, {pipeline_mode = #tpu.pipeline_mode<synchronous>, transform_indices = @transform_3, window_bounds = array<i64: 5, 120, 160>}, {pipeline_mode = #tpu.pipeline_mode<synchronous>, transform_indices = @transform_4, window_bounds = array<i64: 1, 160>}, {pipeline_mode = #tpu.pipeline_mode<synchronous>, transform_indices = @transform_5, window_bounds = array<i64: 240, 120>}, {pipeline_mode = #tpu.pipeline_mode<synchronous>, transform_indices = @transform_6, window_bounds = array<i64: 240, 120>}, {pipeline_mode = #tpu.pipeline_mode<synchronous>, transform_indices = @transform_7, window_bounds = array<i64: 160, 80>}, {pipeline_mode = #tpu.pipeline_mode<synchronous>, transform_indices = @transform_8, window_bounds = array<i64: 160, 80>}, {pipeline_mode = #tpu.pipeline_mode<synchronous>, transform_indices = @transform_9, window_bounds = array<i64: 4, 80, 50>}, {pipeline_mode = #tpu.pipeline_mode<synchronous>, transform_indices = @transform_10, window_bounds = array<i64: 1, 50>}, {pipeline_mode = #tpu.pipeline_mode<synchronous>, transform_indices = @transform_11, window_bounds = array<i64: 50, 10>}, {pipeline_mode = #tpu.pipeline_mode<synchronous>, transform_indices = @transform_12, window_bounds = array<i64: 1, 10>}, {transform_indices = @transform_13, window_bounds = array<i64: 8, 10>}]} {
    %c0 = arith.constant 0 : index
    %c0_0 = arith.constant 0 : index
    %c0_1 = arith.constant 0 : index
    %0 = vector.load %arg1[%c0, %c0_0, %c0_1] : memref<28x8x28xf32, #tpu.memory_space<vmem>>, vector<24x8x28xf32>
    %1 = vector.shape_cast %0 : vector<24x8x28xf32> to vector<192x28xf32>
    %c0_2 = arith.constant 0 : index
    %c0_3 = arith.constant 0 : index
    %c0_4 = arith.constant 0 : index
    %2 = vector.load %arg2[%c0_2, %c0_3, %c0_4] : memref<5x28x240xf32, #tpu.memory_space<vmem>>, vector<1x28x240xf32>
    %3 = vector.shape_cast %2 : vector<1x28x240xf32> to vector<28x240xf32>
    %cst = arith.constant dense<0.000000e+00> : vector<192x240xf32>
    %4 = tpu.matmul %1, %3, %cst {dimension_numbers = #tpu.dot_dimension_numbers<[1], [0], [0], [1], [0, 0, 1, 1], [], []>} : vector<192x28xf32>, vector<28x240xf32>, vector<192x240xf32> -> vector<192x240xf32>
    %c1 = arith.constant 1 : index
    %c0_5 = arith.constant 0 : index
    %c0_6 = arith.constant 0 : index
    %5 = vector.load %arg1[%c1, %c0_5, %c0_6] : memref<28x8x28xf32, #tpu.memory_space<vmem>>, vector<24x8x28xf32>
    %6 = vector.shape_cast %5 : vector<24x8x28xf32> to vector<192x28xf32>
    %c1_7 = arith.constant 1 : index
    %c0_8 = arith.constant 0 : index
    %c0_9 = arith.constant 0 : index
    %7 = vector.load %arg2[%c1_7, %c0_8, %c0_9] : memref<5x28x240xf32, #tpu.memory_space<vmem>>, vector<1x28x240xf32>
    %8 = vector.shape_cast %7 : vector<1x28x240xf32> to vector<28x240xf32>
    %cst_10 = arith.constant dense<0.000000e+00> : vector<192x240xf32>
    %9 = tpu.matmul %6, %8, %cst_10 {dimension_numbers = #tpu.dot_dimension_numbers<[1], [0], [0], [1], [0, 0, 1, 1], [], []>} : vector<192x28xf32>, vector<28x240xf32>, vector<192x240xf32> -> vector<192x240xf32>
    %10 = arith.addf %4, %9 : vector<192x240xf32>
    %c2 = arith.constant 2 : index
    %c0_11 = arith.constant 0 : index
    %c0_12 = arith.constant 0 : index
    %11 = vector.load %arg1[%c2, %c0_11, %c0_12] : memref<28x8x28xf32, #tpu.memory_space<vmem>>, vector<24x8x28xf32>
    %12 = vector.shape_cast %11 : vector<24x8x28xf32> to vector<192x28xf32>
    %c2_13 = arith.constant 2 : index
    %c0_14 = arith.constant 0 : index
    %c0_15 = arith.constant 0 : index
    %13 = vector.load %arg2[%c2_13, %c0_14, %c0_15] : memref<5x28x240xf32, #tpu.memory_space<vmem>>, vector<1x28x240xf32>
    %14 = vector.shape_cast %13 : vector<1x28x240xf32> to vector<28x240xf32>
    %cst_16 = arith.constant dense<0.000000e+00> : vector<192x240xf32>
    %15 = tpu.matmul %12, %14, %cst_16 {dimension_numbers = #tpu.dot_dimension_numbers<[1], [0], [0], [1], [0, 0, 1, 1], [], []>} : vector<192x28xf32>, vector<28x240xf32>, vector<192x240xf32> -> vector<192x240xf32>
    %16 = arith.addf %10, %15 : vector<192x240xf32>
    %c3 = arith.constant 3 : index
    %c0_17 = arith.constant 0 : index
    %c0_18 = arith.constant 0 : index
    %17 = vector.load %arg1[%c3, %c0_17, %c0_18] : memref<28x8x28xf32, #tpu.memory_space<vmem>>, vector<24x8x28xf32>
    %18 = vector.shape_cast %17 : vector<24x8x28xf32> to vector<192x28xf32>
    %c3_19 = arith.constant 3 : index
    %c0_20 = arith.constant 0 : index
    %c0_21 = arith.constant 0 : index
    %19 = vector.load %arg2[%c3_19, %c0_20, %c0_21] : memref<5x28x240xf32, #tpu.memory_space<vmem>>, vector<1x28x240xf32>
    %20 = vector.shape_cast %19 : vector<1x28x240xf32> to vector<28x240xf32>
    %cst_22 = arith.constant dense<0.000000e+00> : vector<192x240xf32>
    %21 = tpu.matmul %18, %20, %cst_22 {dimension_numbers = #tpu.dot_dimension_numbers<[1], [0], [0], [1], [0, 0, 1, 1], [], []>} : vector<192x28xf32>, vector<28x240xf32>, vector<192x240xf32> -> vector<192x240xf32>
    %22 = arith.addf %16, %21 : vector<192x240xf32>
    %c4 = arith.constant 4 : index
    %c0_23 = arith.constant 0 : index
    %c0_24 = arith.constant 0 : index
    %23 = vector.load %arg1[%c4, %c0_23, %c0_24] : memref<28x8x28xf32, #tpu.memory_space<vmem>>, vector<24x8x28xf32>
    %24 = vector.shape_cast %23 : vector<24x8x28xf32> to vector<192x28xf32>
    %c4_25 = arith.constant 4 : index
    %c0_26 = arith.constant 0 : index
    %c0_27 = arith.constant 0 : index
    %25 = vector.load %arg2[%c4_25, %c0_26, %c0_27] : memref<5x28x240xf32, #tpu.memory_space<vmem>>, vector<1x28x240xf32>
    %26 = vector.shape_cast %25 : vector<1x28x240xf32> to vector<28x240xf32>
    %cst_28 = arith.constant dense<0.000000e+00> : vector<192x240xf32>
    %27 = tpu.matmul %24, %26, %cst_28 {dimension_numbers = #tpu.dot_dimension_numbers<[1], [0], [0], [1], [0, 0, 1, 1], [], []>} : vector<192x28xf32>, vector<28x240xf32>, vector<192x240xf32> -> vector<192x240xf32>
    %28 = arith.addf %22, %27 : vector<192x240xf32>
    %c0_29 = arith.constant 0 : index
    %c0_30 = arith.constant 0 : index
    %29 = vector.load %arg3[%c0_29, %c0_30] : memref<1x240xf32, #tpu.memory_space<vmem>>, vector<1x240xf32>
    %30 = vector.broadcast %29 : vector<1x240xf32> to vector<192x240xf32>
    %31 = arith.addf %28, %30 : vector<192x240xf32>
    %32 = vector.shape_cast %31 : vector<192x240xf32> to vector<12x2x8x240xf32>
    %c0_31 = arith.constant 0 : index
    %c0_32 = arith.constant 0 : index
    %c0_33 = arith.constant 0 : index
    %c0_34 = arith.constant 0 : index
    %33 = vector.load %arg15[%c0_31, %c0_32, %c0_33, %c0_34] : memref<12x2x8x240xf32, #tpu.memory_space<vmem>>, vector<12x2x8x240xf32>
    tpu.vector_store %arg15[%c0_31, %c0_32, %c0_33, %c0_34], %32 {strides = array<i32>} : memref<12x2x8x240xf32, #tpu.memory_space<vmem>>, vector<12x2x8x240xf32>,
    %c0_35 = arith.constant 0 : index
    %c0_36 = arith.constant 0 : index
    %c0_37 = arith.constant 0 : index
    %c0_38 = arith.constant 0 : index
    %34 = vector.load %arg15[%c0_35, %c0_36, %c0_37, %c0_38] : memref<12x2x8x240xf32, #tpu.memory_space<vmem>>, vector<12x1x8x240xf32>
    %35 = vector.shape_cast %34 : vector<12x1x8x240xf32> to vector<12x8x240xf32>
    %c0_39 = arith.constant 0 : index
    %c1_40 = arith.constant 1 : index
    %c0_41 = arith.constant 0 : index
    %c0_42 = arith.constant 0 : index
    %36 = vector.load %arg15[%c0_39, %c1_40, %c0_41, %c0_42] : memref<12x2x8x240xf32, #tpu.memory_space<vmem>>, vector<12x1x8x240xf32>
    %37 = vector.shape_cast %36 : vector<12x1x8x240xf32> to vector<12x8x240xf32>
    %38 = arith.maximumf %35, %37 : vector<12x8x240xf32>
    %39 = vector.shape_cast %38 : vector<12x8x240xf32> to vector<96x240xf32>
    %c0_43 = arith.constant 0 : index
    %c0_44 = arith.constant 0 : index
    %40 = vector.load %arg6[%c0_43, %c0_44] : memref<240x120xf32, #tpu.memory_space<vmem>>, vector<240x120xf32>
    %cst_45 = arith.constant dense<0.000000e+00> : vector<96x120xf32>
    %41 = tpu.matmul %39, %40, %cst_45 {dimension_numbers = #tpu.dot_dimension_numbers<[1], [0], [0], [1], [0, 0, 1, 1], [], []>} : vector<96x240xf32>, vector<240x120xf32>, vector<96x120xf32> -> vector<96x120xf32>
    %c0_46 = arith.constant 0 : index
    %c0_47 = arith.constant 0 : index
    %42 = vector.load %arg7[%c0_46, %c0_47] : memref<240x120xf32, #tpu.memory_space<vmem>>, vector<240x120xf32>
    %cst_48 = arith.constant dense<0.000000e+00> : vector<96x120xf32>
    %43 = tpu.matmul %39, %42, %cst_48 {dimension_numbers = #tpu.dot_dimension_numbers<[1], [0], [0], [1], [0, 0, 1, 1], [], []>} : vector<96x240xf32>, vector<240x120xf32>, vector<96x120xf32> -> vector<96x120xf32>
    %44 = arith.maximumf %41, %43 : vector<96x120xf32>
    %cst_49 = arith.constant 0.000000e+00 : f32
    %45 = vector.broadcast %cst_49 : f32 to vector<96x120xf32>
    %46 = arith.maximumf %44, %45 : vector<96x120xf32>
    %47 = vector.shape_cast %46 : vector<96x120xf32> to vector<12x8x120xf32>
    %c0_50 = arith.constant 0 : index
    %c0_51 = arith.constant 0 : index
    %c0_52 = arith.constant 0 : index
    %48 = vector.load %arg16[%c0_50, %c0_51, %c0_52] : memref<12x8x120xf32, #tpu.memory_space<vmem>>, vector<12x8x120xf32>
    tpu.vector_store %arg16[%c0_50, %c0_51, %c0_52], %47 {strides = array<i32>} : memref<12x8x120xf32, #tpu.memory_space<vmem>>, vector<12x8x120xf32>,
    %c0_53 = arith.constant 0 : index
    %c0_54 = arith.constant 0 : index
    %c0_55 = arith.constant 0 : index
    %49 = vector.load %arg16[%c0_53, %c0_54, %c0_55] : memref<12x8x120xf32, #tpu.memory_space<vmem>>, vector<8x8x120xf32>
    %50 = vector.shape_cast %49 : vector<8x8x120xf32> to vector<64x120xf32>
    %c0_56 = arith.constant 0 : index
    %c0_57 = arith.constant 0 : index
    %c0_58 = arith.constant 0 : index
    %51 = vector.load %arg4[%c0_56, %c0_57, %c0_58] : memref<5x120x160xf32, #tpu.memory_space<vmem>>, vector<1x120x160xf32>
    %52 = vector.shape_cast %51 : vector<1x120x160xf32> to vector<120x160xf32>
    %cst_59 = arith.constant dense<0.000000e+00> : vector<64x160xf32>
    %53 = tpu.matmul %50, %52, %cst_59 {dimension_numbers = #tpu.dot_dimension_numbers<[1], [0], [0], [1], [0, 0, 1, 1], [], []>} : vector<64x120xf32>, vector<120x160xf32>, vector<64x160xf32> -> vector<64x160xf32>
    %c1_60 = arith.constant 1 : index
    %c0_61 = arith.constant 0 : index
    %c0_62 = arith.constant 0 : index
    %54 = vector.load %arg16[%c1_60, %c0_61, %c0_62] : memref<12x8x120xf32, #tpu.memory_space<vmem>>, vector<8x8x120xf32>
    %55 = vector.shape_cast %54 : vector<8x8x120xf32> to vector<64x120xf32>
    %c1_63 = arith.constant 1 : index
    %c0_64 = arith.constant 0 : index
    %c0_65 = arith.constant 0 : index
    %56 = vector.load %arg4[%c1_63, %c0_64, %c0_65] : memref<5x120x160xf32, #tpu.memory_space<vmem>>, vector<1x120x160xf32>
    %57 = vector.shape_cast %56 : vector<1x120x160xf32> to vector<120x160xf32>
    %cst_66 = arith.constant dense<0.000000e+00> : vector<64x160xf32>
    %58 = tpu.matmul %55, %57, %cst_66 {dimension_numbers = #tpu.dot_dimension_numbers<[1], [0], [0], [1], [0, 0, 1, 1], [], []>} : vector<64x120xf32>, vector<120x160xf32>, vector<64x160xf32> -> vector<64x160xf32>
    %59 = arith.addf %53, %58 : vector<64x160xf32>
    %c2_67 = arith.constant 2 : index
    %c0_68 = arith.constant 0 : index
    %c0_69 = arith.constant 0 : index
    %60 = vector.load %arg16[%c2_67, %c0_68, %c0_69] : memref<12x8x120xf32, #tpu.memory_space<vmem>>, vector<8x8x120xf32>
    %61 = vector.shape_cast %60 : vector<8x8x120xf32> to vector<64x120xf32>
    %c2_70 = arith.constant 2 : index
    %c0_71 = arith.constant 0 : index
    %c0_72 = arith.constant 0 : index
    %62 = vector.load %arg4[%c2_70, %c0_71, %c0_72] : memref<5x120x160xf32, #tpu.memory_space<vmem>>, vector<1x120x160xf32>
    %63 = vector.shape_cast %62 : vector<1x120x160xf32> to vector<120x160xf32>
    %cst_73 = arith.constant dense<0.000000e+00> : vector<64x160xf32>
    %64 = tpu.matmul %61, %63, %cst_73 {dimension_numbers = #tpu.dot_dimension_numbers<[1], [0], [0], [1], [0, 0, 1, 1], [], []>} : vector<64x120xf32>, vector<120x160xf32>, vector<64x160xf32> -> vector<64x160xf32>
    %65 = arith.addf %59, %64 : vector<64x160xf32>
    %c3_74 = arith.constant 3 : index
    %c0_75 = arith.constant 0 : index
    %c0_76 = arith.constant 0 : index
    %66 = vector.load %arg16[%c3_74, %c0_75, %c0_76] : memref<12x8x120xf32, #tpu.memory_space<vmem>>, vector<8x8x120xf32>
    %67 = vector.shape_cast %66 : vector<8x8x120xf32> to vector<64x120xf32>
    %c3_77 = arith.constant 3 : index
    %c0_78 = arith.constant 0 : index
    %c0_79 = arith.constant 0 : index
    %68 = vector.load %arg4[%c3_77, %c0_78, %c0_79] : memref<5x120x160xf32, #tpu.memory_space<vmem>>, vector<1x120x160xf32>
    %69 = vector.shape_cast %68 : vector<1x120x160xf32> to vector<120x160xf32>
    %cst_80 = arith.constant dense<0.000000e+00> : vector<64x160xf32>
    %70 = tpu.matmul %67, %69, %cst_80 {dimension_numbers = #tpu.dot_dimension_numbers<[1], [0], [0], [1], [0, 0, 1, 1], [], []>} : vector<64x120xf32>, vector<120x160xf32>, vector<64x160xf32> -> vector<64x160xf32>
    %71 = arith.addf %65, %70 : vector<64x160xf32>
    %c4_81 = arith.constant 4 : index
    %c0_82 = arith.constant 0 : index
    %c0_83 = arith.constant 0 : index
    %72 = vector.load %arg16[%c4_81, %c0_82, %c0_83] : memref<12x8x120xf32, #tpu.memory_space<vmem>>, vector<8x8x120xf32>
    %73 = vector.shape_cast %72 : vector<8x8x120xf32> to vector<64x120xf32>
    %c4_84 = arith.constant 4 : index
    %c0_85 = arith.constant 0 : index
    %c0_86 = arith.constant 0 : index
    %74 = vector.load %arg4[%c4_84, %c0_85, %c0_86] : memref<5x120x160xf32, #tpu.memory_space<vmem>>, vector<1x120x160xf32>
    %75 = vector.shape_cast %74 : vector<1x120x160xf32> to vector<120x160xf32>
    %cst_87 = arith.constant dense<0.000000e+00> : vector<64x160xf32>
    %76 = tpu.matmul %73, %75, %cst_87 {dimension_numbers = #tpu.dot_dimension_numbers<[1], [0], [0], [1], [0, 0, 1, 1], [], []>} : vector<64x120xf32>, vector<120x160xf32>, vector<64x160xf32> -> vector<64x160xf32>
    %77 = arith.addf %71, %76 : vector<64x160xf32>
    %c0_88 = arith.constant 0 : index
    %c0_89 = arith.constant 0 : index
    %78 = vector.load %arg5[%c0_88, %c0_89] : memref<1x160xf32, #tpu.memory_space<vmem>>, vector<1x160xf32>
    %79 = vector.broadcast %78 : vector<1x160xf32> to vector<64x160xf32>
    %80 = arith.addf %77, %79 : vector<64x160xf32>
    %81 = vector.shape_cast %80 : vector<64x160xf32> to vector<4x2x8x160xf32>
    %c0_90 = arith.constant 0 : index
    %c0_91 = arith.constant 0 : index
    %c0_92 = arith.constant 0 : index
    %c0_93 = arith.constant 0 : index
    %82 = vector.load %arg17[%c0_90, %c0_91, %c0_92, %c0_93] : memref<4x2x8x160xf32, #tpu.memory_space<vmem>>, vector<4x2x8x160xf32>
    tpu.vector_store %arg17[%c0_90, %c0_91, %c0_92, %c0_93], %81 {strides = array<i32>} : memref<4x2x8x160xf32, #tpu.memory_space<vmem>>, vector<4x2x8x160xf32>,
    %c0_94 = arith.constant 0 : index
    %c0_95 = arith.constant 0 : index
    %c0_96 = arith.constant 0 : index
    %c0_97 = arith.constant 0 : index
    %83 = vector.load %arg17[%c0_94, %c0_95, %c0_96, %c0_97] : memref<4x2x8x160xf32, #tpu.memory_space<vmem>>, vector<4x1x8x160xf32>
    %84 = vector.shape_cast %83 : vector<4x1x8x160xf32> to vector<4x8x160xf32>
    %c0_98 = arith.constant 0 : index
    %c1_99 = arith.constant 1 : index
    %c0_100 = arith.constant 0 : index
    %c0_101 = arith.constant 0 : index
    %85 = vector.load %arg17[%c0_98, %c1_99, %c0_100, %c0_101] : memref<4x2x8x160xf32, #tpu.memory_space<vmem>>, vector<4x1x8x160xf32>
    %86 = vector.shape_cast %85 : vector<4x1x8x160xf32> to vector<4x8x160xf32>
    %87 = arith.maximumf %84, %86 : vector<4x8x160xf32>
    %88 = vector.shape_cast %87 : vector<4x8x160xf32> to vector<32x160xf32>
    %c0_102 = arith.constant 0 : index
    %c0_103 = arith.constant 0 : index
    %89 = vector.load %arg8[%c0_102, %c0_103] : memref<160x80xf32, #tpu.memory_space<vmem>>, vector<160x80xf32>
    %cst_104 = arith.constant dense<0.000000e+00> : vector<32x80xf32>
    %90 = tpu.matmul %88, %89, %cst_104 {dimension_numbers = #tpu.dot_dimension_numbers<[1], [0], [0], [1], [0, 0, 1, 1], [], []>} : vector<32x160xf32>, vector<160x80xf32>, vector<32x80xf32> -> vector<32x80xf32>
    %c0_105 = arith.constant 0 : index
    %c0_106 = arith.constant 0 : index
    %91 = vector.load %arg9[%c0_105, %c0_106] : memref<160x80xf32, #tpu.memory_space<vmem>>, vector<160x80xf32>
    %cst_107 = arith.constant dense<0.000000e+00> : vector<32x80xf32>
    %92 = tpu.matmul %88, %91, %cst_107 {dimension_numbers = #tpu.dot_dimension_numbers<[1], [0], [0], [1], [0, 0, 1, 1], [], []>} : vector<32x160xf32>, vector<160x80xf32>, vector<32x80xf32> -> vector<32x80xf32>
    %93 = arith.maximumf %90, %92 : vector<32x80xf32>
    %cst_108 = arith.constant 0.000000e+00 : f32
    %94 = vector.broadcast %cst_108 : f32 to vector<32x80xf32>
    %95 = arith.maximumf %93, %94 : vector<32x80xf32>
    %96 = vector.shape_cast %95 : vector<32x80xf32> to vector<4x8x80xf32>
    %c0_109 = arith.constant 0 : index
    %c0_110 = arith.constant 0 : index
    %c0_111 = arith.constant 0 : index
    %97 = vector.load %arg18[%c0_109, %c0_110, %c0_111] : memref<4x8x80xf32, #tpu.memory_space<vmem>>, vector<4x8x80xf32>
    tpu.vector_store %arg18[%c0_109, %c0_110, %c0_111], %96 {strides = array<i32>} : memref<4x8x80xf32, #tpu.memory_space<vmem>>, vector<4x8x80xf32>,
    %c0_112 = arith.constant 0 : index
    %c0_113 = arith.constant 0 : index
    %c0_114 = arith.constant 0 : index
    %98 = vector.load %arg18[%c0_112, %c0_113, %c0_114] : memref<4x8x80xf32, #tpu.memory_space<vmem>>, vector<1x8x80xf32>
    %99 = vector.shape_cast %98 : vector<1x8x80xf32> to vector<8x80xf32>
    %c0_115 = arith.constant 0 : index
    %c0_116 = arith.constant 0 : index
    %c0_117 = arith.constant 0 : index
    %100 = vector.load %arg10[%c0_115, %c0_116, %c0_117] : memref<4x80x50xf32, #tpu.memory_space<vmem>>, vector<1x80x50xf32>
    %101 = vector.shape_cast %100 : vector<1x80x50xf32> to vector<80x50xf32>
    %cst_118 = arith.constant dense<0.000000e+00> : vector<8x50xf32>
    %102 = tpu.matmul %99, %101, %cst_118 {dimension_numbers = #tpu.dot_dimension_numbers<[1], [0], [0], [1], [0, 0, 1, 1], [], []>} : vector<8x80xf32>, vector<80x50xf32>, vector<8x50xf32> -> vector<8x50xf32>
    %c1_119 = arith.constant 1 : index
    %c0_120 = arith.constant 0 : index
    %c0_121 = arith.constant 0 : index
    %103 = vector.load %arg18[%c1_119, %c0_120, %c0_121] : memref<4x8x80xf32, #tpu.memory_space<vmem>>, vector<1x8x80xf32>
    %104 = vector.shape_cast %103 : vector<1x8x80xf32> to vector<8x80xf32>
    %c1_122 = arith.constant 1 : index
    %c0_123 = arith.constant 0 : index
    %c0_124 = arith.constant 0 : index
    %105 = vector.load %arg10[%c1_122, %c0_123, %c0_124] : memref<4x80x50xf32, #tpu.memory_space<vmem>>, vector<1x80x50xf32>
    %106 = vector.shape_cast %105 : vector<1x80x50xf32> to vector<80x50xf32>
    %cst_125 = arith.constant dense<0.000000e+00> : vector<8x50xf32>
    %107 = tpu.matmul %104, %106, %cst_125 {dimension_numbers = #tpu.dot_dimension_numbers<[1], [0], [0], [1], [0, 0, 1, 1], [], []>} : vector<8x80xf32>, vector<80x50xf32>, vector<8x50xf32> -> vector<8x50xf32>
    %108 = arith.addf %102, %107 : vector<8x50xf32>
    %c2_126 = arith.constant 2 : index
    %c0_127 = arith.constant 0 : index
    %c0_128 = arith.constant 0 : index
    %109 = vector.load %arg18[%c2_126, %c0_127, %c0_128] : memref<4x8x80xf32, #tpu.memory_space<vmem>>, vector<1x8x80xf32>
    %110 = vector.shape_cast %109 : vector<1x8x80xf32> to vector<8x80xf32>
    %c2_129 = arith.constant 2 : index
    %c0_130 = arith.constant 0 : index
    %c0_131 = arith.constant 0 : index
    %111 = vector.load %arg10[%c2_129, %c0_130, %c0_131] : memref<4x80x50xf32, #tpu.memory_space<vmem>>, vector<1x80x50xf32>
    %112 = vector.shape_cast %111 : vector<1x80x50xf32> to vector<80x50xf32>
    %cst_132 = arith.constant dense<0.000000e+00> : vector<8x50xf32>
    %113 = tpu.matmul %110, %112, %cst_132 {dimension_numbers = #tpu.dot_dimension_numbers<[1], [0], [0], [1], [0, 0, 1, 1], [], []>} : vector<8x80xf32>, vector<80x50xf32>, vector<8x50xf32> -> vector<8x50xf32>
    %114 = arith.addf %108, %113 : vector<8x50xf32>
    %c3_133 = arith.constant 3 : index
    %c0_134 = arith.constant 0 : index
    %c0_135 = arith.constant 0 : index
    %115 = vector.load %arg18[%c3_133, %c0_134, %c0_135] : memref<4x8x80xf32, #tpu.memory_space<vmem>>, vector<1x8x80xf32>
    %116 = vector.shape_cast %115 : vector<1x8x80xf32> to vector<8x80xf32>
    %c3_136 = arith.constant 3 : index
    %c0_137 = arith.constant 0 : index
    %c0_138 = arith.constant 0 : index
    %117 = vector.load %arg10[%c3_136, %c0_137, %c0_138] : memref<4x80x50xf32, #tpu.memory_space<vmem>>, vector<1x80x50xf32>
    %118 = vector.shape_cast %117 : vector<1x80x50xf32> to vector<80x50xf32>
    %cst_139 = arith.constant dense<0.000000e+00> : vector<8x50xf32>
    %119 = tpu.matmul %116, %118, %cst_139 {dimension_numbers = #tpu.dot_dimension_numbers<[1], [0], [0], [1], [0, 0, 1, 1], [], []>} : vector<8x80xf32>, vector<80x50xf32>, vector<8x50xf32> -> vector<8x50xf32>
    %120 = arith.addf %114, %119 : vector<8x50xf32>
    %c0_140 = arith.constant 0 : index
    %c0_141 = arith.constant 0 : index
    %121 = vector.load %arg11[%c0_140, %c0_141] : memref<1x50xf32, #tpu.memory_space<vmem>>, vector<1x50xf32>
    %122 = vector.broadcast %121 : vector<1x50xf32> to vector<8x50xf32>
    %123 = arith.addf %120, %122 : vector<8x50xf32>
    %cst_142 = arith.constant 0.000000e+00 : f32
    %124 = vector.broadcast %cst_142 : f32 to vector<8x50xf32>
    %125 = arith.maximumf %123, %124 : vector<8x50xf32>
    %c0_143 = arith.constant 0 : index
    %c0_144 = arith.constant 0 : index
    %126 = vector.load %arg12[%c0_143, %c0_144] : memref<50x10xf32, #tpu.memory_space<vmem>>, vector<50x10xf32>
    %cst_145 = arith.constant dense<0.000000e+00> : vector<8x10xf32>
    %127 = tpu.matmul %125, %126, %cst_145 {dimension_numbers = #tpu.dot_dimension_numbers<[1], [0], [0], [1], [0, 0, 1, 1], [], []>} : vector<8x50xf32>, vector<50x10xf32>, vector<8x10xf32> -> vector<8x10xf32>
    %c0_146 = arith.constant 0 : index
    %c0_147 = arith.constant 0 : index
    %128 = vector.load %arg13[%c0_146, %c0_147] : memref<1x10xf32, #tpu.memory_space<vmem>>, vector<1x10xf32>
    %129 = vector.broadcast %128 : vector<1x10xf32> to vector<8x10xf32>
    %130 = arith.addf %127, %129 : vector<8x10xf32>
    %cst_148 = arith.constant dense<0xFF800000> : vector<8xf32>
    %131 = vector.multi_reduction <maximumf>, %130, %cst_148 [1] : vector<8x10xf32> to vector<8xf32>
    %132 = vector.shape_cast %131 : vector<8xf32> to vector<8x1xf32>
    %133 = vector.broadcast %132 : vector<8x1xf32> to vector<8x10xf32>
    %134 = arith.subf %130, %133 : vector<8x10xf32>
    %135 = math.exp %134 : vector<8x10xf32>
    %cst_149 = arith.constant dense<0.000000e+00> : vector<8xf32>
    %136 = vector.multi_reduction <add>, %135, %cst_149 [1] : vector<8x10xf32> to vector<8xf32>
    %137 = vector.shape_cast %136 : vector<8xf32> to vector<8x1xf32>
    %138 = math.log %137 : vector<8x1xf32>
    %139 = vector.broadcast %138 : vector<8x1xf32> to vector<8x10xf32>
    %140 = arith.subf %134, %139 : vector<8x10xf32>
    %c0_150 = arith.constant 0 : index
    %c0_151 = arith.constant 0 : index
    %141 = vector.load %arg14[%c0_150, %c0_151] : memref<8x10xf32, #tpu.memory_space<vmem>>, vector<8x10xf32>
    tpu.vector_store %arg14[%c0_150, %c0_151], %140 {strides = array<i32>} : memref<8x10xf32, #tpu.memory_space<vmem>>, vector<8x10xf32>,
    return
  }
  func.func @transform_0(%arg0: i32) -> (i32, i32, i32) {
    %c0_i32 = arith.constant 0 : i32
    %c0_i32_0 = arith.constant 0 : i32
    %c0_i32_1 = arith.constant 0 : i32
    return %c0_i32, %arg0, %c0_i32_0 : i32, i32, i32
  }
  func.func @transform_1(%arg0: i32) -> (i32, i32, i32) {
    %c0_i32 = arith.constant 0 : i32
    %c0_i32_0 = arith.constant 0 : i32
    %c0_i32_1 = arith.constant 0 : i32
    %c0_i32_2 = arith.constant 0 : i32
    return %c0_i32, %c0_i32_0, %c0_i32_1 : i32, i32, i32
  }
  func.func @transform_2(%arg0: i32) -> (i32, i32) {
    %c0_i32 = arith.constant 0 : i32
    %c0_i32_0 = arith.constant 0 : i32
    %c0_i32_1 = arith.constant 0 : i32
    return %c0_i32, %c0_i32_0 : i32, i32
  }
  func.func @transform_3(%arg0: i32) -> (i32, i32, i32) {
    %c0_i32 = arith.constant 0 : i32
    %c0_i32_0 = arith.constant 0 : i32
    %c0_i32_1 = arith.constant 0 : i32
    %c0_i32_2 = arith.constant 0 : i32
    return %c0_i32, %c0_i32_0, %c0_i32_1 : i32, i32, i32
  }
  func.func @transform_4(%arg0: i32) -> (i32, i32) {
    %c0_i32 = arith.constant 0 : i32
    %c0_i32_0 = arith.constant 0 : i32
    %c0_i32_1 = arith.constant 0 : i32
    return %c0_i32, %c0_i32_0 : i32, i32
  }
  func.func @transform_5(%arg0: i32) -> (i32, i32) {
    %c0_i32 = arith.constant 0 : i32
    %c0_i32_0 = arith.constant 0 : i32
    %c0_i32_1 = arith.constant 0 : i32
    return %c0_i32, %c0_i32_0 : i32, i32
  }
  func.func @transform_6(%arg0: i32) -> (i32, i32) {
    %c0_i32 = arith.constant 0 : i32
    %c0_i32_0 = arith.constant 0 : i32
    %c0_i32_1 = arith.constant 0 : i32
    return %c0_i32, %c0_i32_0 : i32, i32
  }
  func.func @transform_7(%arg0: i32) -> (i32, i32) {
    %c0_i32 = arith.constant 0 : i32
    %c0_i32_0 = arith.constant 0 : i32
    %c0_i32_1 = arith.constant 0 : i32
    return %c0_i32, %c0_i32_0 : i32, i32
  }
  func.func @transform_8(%arg0: i32) -> (i32, i32) {
    %c0_i32 = arith.constant 0 : i32
    %c0_i32_0 = arith.constant 0 : i32
    %c0_i32_1 = arith.constant 0 : i32
    return %c0_i32, %c0_i32_0 : i32, i32
  }
  func.func @transform_9(%arg0: i32) -> (i32, i32, i32) {
    %c0_i32 = arith.constant 0 : i32
    %c0_i32_0 = arith.constant 0 : i32
    %c0_i32_1 = arith.constant 0 : i32
    %c0_i32_2 = arith.constant 0 : i32
    return %c0_i32, %c0_i32_0, %c0_i32_1 : i32, i32, i32
  }
  func.func @transform_10(%arg0: i32) -> (i32, i32) {
    %c0_i32 = arith.constant 0 : i32
    %c0_i32_0 = arith.constant 0 : i32
    %c0_i32_1 = arith.constant 0 : i32
    return %c0_i32, %c0_i32_0 : i32, i32
  }
  func.func @transform_11(%arg0: i32) -> (i32, i32) {
    %c0_i32 = arith.constant 0 : i32
    %c0_i32_0 = arith.constant 0 : i32
    %c0_i32_1 = arith.constant 0 : i32
    return %c0_i32, %c0_i32_0 : i32, i32
  }
  func.func @transform_12(%arg0: i32) -> (i32, i32) {
    %c0_i32 = arith.constant 0 : i32
    %c0_i32_0 = arith.constant 0 : i32
    %c0_i32_1 = arith.constant 0 : i32
    return %c0_i32, %c0_i32_0 : i32, i32
  }
  func.func @transform_13(%arg0: i32) -> (i32, i32) {
    %c0_i32 = arith.constant 0 : i32
    %c0_i32_0 = arith.constant 0 : i32
    return %arg0, %c0_i32 : i32, i32
  }
}

</mosaic_0001>

<llo_original>
// kernel: tile.13
$region0: #{tile.13}
  #allocation0 [shape = 's32[1]{0}', space=sflag, size = 0x4, scoped, tag = 'scoped memory for tile.13']
  %s0 = inlined_call_operand.vmem [shape: f32[10], index: 0, kind: input, shape index: {}]
  %s1 = inlined_call_operand.vmem [shape: f32[24,10], index: 1, kind: output, shape index: {}]
  // Predicated region
  $region2: #{tile.13} parent=0 // pred_check
    _
  $region3: #{tile.13} parent=0 // pred_check_branch
    %3 = sbr.rel (0) target = $region5
  $region4: #{tile.13} parent=0 // pred_region
    _
  $region5: #{tile.13} parent=0 // pred_fallthru
    _
  %v4 = vld [vmem:[%s0] ss:$0 sm:$0xff]
  %5 = vst [vmem:[%s1] sm:$0xff] %v4
  %s6 = scalar_lea.vmem %s1, 8
  %7 = vst [vmem:[%s6] sm:$0xff] %v4
  %s8 = scalar_lea.vmem %s1, 16
  %9 = vst [vmem:[%s8] sm:$0xff] %v4

// kernel: tile.14
$region0: #{tile.14}
  %s0 = inlined_call_operand.vmem [shape: f32[24,10], index: 0, kind: input, shape index: {}]
  %s1 = inlined_call_operand.vmem [shape: f32[1,240], index: 1, kind: output, shape index: {}]
  $region1: #{tile.14} parent=0
    #allocation0 [shape = 'u8[8192]{0}', space=vmem, size = 0x2000, scoped, tag = 'scoped mem for output reshape']
    %v2 = vld [vmem:[%s0] sm:$0x1]
    %vm3 = vcmask 80896
    %4 = vst.msk [vmem:[#allocation0] sm:$0x1] %vm3, %v2
    %s5 = scalar_lea.vmem %s0, 12
    %v6 = vld [vmem:[%s5] sm:$0x1]
    %s7 = scalar_lea.vmem %s0, 12
    %v8 = vld [vmem:[%s7] sm:$0x1]
    %vm9 = vcmask 64512
    %v10 = vsel %vm9, %v8, %v6
    %11 = vrot.lane.b32.xlu0 %v10, 120
    %v12 = vpop.permute.xlu0 %11
    %vm13 = vcmask 15360
    %s14 = scalar_lea.vmem [#allocation0], 8
    %15 = vst.msk [vmem:[%s14] sm:$0x1] %vm13, %v12
    %vm16 = vcmask 1048512
    %17 = vst.msk [vmem:[#allocation0] sm:$0x1] %vm16, %v12
    %s18 = scalar_lea.vmem %s0, 11
    %v19 = vld [vmem:[%s18] sm:$0x1]
    %20 = vrot.lane.b32.xlu0 %v19, 110
    %v21 = vpop.permute.xlu0 %20
    %vm22 = vcmask 982896
    %23 = vst.msk [vmem:[#allocation0] sm:$0x1] %vm22, %v21
    %s24 = scalar_lea.vmem %s0, 23
    %v25 = vld [vmem:[%s24] sm:$0x1]
    %26 = vrot.lane.b32.xlu0 %v25, 102
    %v27 = vpop.permute.xlu0 %26
    %vm28 = vcmask 917296
    %s29 = scalar_lea.vmem [#allocation0], 8
    %30 = vst.msk [vmem:[%s29] sm:$0x1] %vm28, %v27
    %s31 = scalar_lea.vmem %s0, 10
    %v32 = vld [vmem:[%s31] sm:$0x1]
    %33 = vrot.lane.b32.xlu0 %v32, 100
    %v34 = vpop.permute.xlu0 %33
    %vm35 = vcmask 900896
    %36 = vst.msk [vmem:[#allocation0] sm:$0x1] %vm35, %v34
    %s37 = scalar_lea.vmem %s0, 22
    %v38 = vld [vmem:[%s37] sm:$0x1]
    %39 = vrot.lane.b32.xlu0 %v38, 92
    %v40 = vpop.permute.xlu0 %39
    %vm41 = vcmask 835296
    %s42 = scalar_lea.vmem [#allocation0], 8
    %43 = vst.msk [vmem:[%s42] sm:$0x1] %vm41, %v40
    %s44 = scalar_lea.vmem %s0, 9
    %v45 = vld [vmem:[%s44] sm:$0x1]
    %46 = vrot.lane.b32.xlu0 %v45, 90
    %v47 = vpop.permute.xlu0 %46
    %vm48 = vcmask 818896
    %49 = vst.msk [vmem:[#allocation0] sm:$0x1] %vm48, %v47
    %s50 = scalar_lea.vmem %s0, 21
    %v51 = vld [vmem:[%s50] sm:$0x1]
    %52 = vrot.lane.b32.xlu0 %v51, 82
    %v53 = vpop.permute.xlu0 %52
    %vm54 = vcmask 753296
    %s55 = scalar_lea.vmem [#allocation0], 8
    %56 = vst.msk [vmem:[%s55] sm:$0x1] %vm54, %v53
    %s57 = scalar_lea.vmem %s0, 8
    %v58 = vld [vmem:[%s57] sm:$0x1]
    %59 = vrot.lane.b32.xlu0 %v58, 80
    %v60 = vpop.permute.xlu0 %59
    %vm61 = vcmask 736896
    %62 = vst.msk [vmem:[#allocation0] sm:$0x1] %vm61, %v60
    %s63 = scalar_lea.vmem %s0, 20
    %v64 = vld [vmem:[%s63] sm:$0x1]
    %65 = vrot.lane.b32.xlu0 %v64, 72
    %v66 = vpop.permute.xlu0 %65
    %vm67 = vcmask 671296
    %s68 = scalar_lea.vmem [#allocation0], 8
    %69 = vst.msk [vmem:[%s68] sm:$0x1] %vm67, %v66
    %s70 = scalar_lea.vmem %s0, 7
    %v71 = vld [vmem:[%s70] sm:$0x1]
    %72 = vrot.lane.b32.xlu0 %v71, 70
    %v73 = vpop.permute.xlu0 %72
    %vm74 = vcmask 654896
    %75 = vst.msk [vmem:[#allocation0] sm:$0x1] %vm74, %v73
    %s76 = scalar_lea.vmem %s0, 19
    %v77 = vld [vmem:[%s76] sm:$0x1]
    %78 = vrot.lane.b32.xlu0 %v77, 62
    %v79 = vpop.permute.xlu0 %78
    %vm80 = vcmask 589296
    %s81 = scalar_lea.vmem [#allocation0], 8
    %82 = vst.msk [vmem:[%s81] sm:$0x1] %vm80, %v79
    %s83 = scalar_lea.vmem %s0, 6
    %v84 = vld [vmem:[%s83] sm:$0x1]
    %85 = vrot.lane.b32.xlu0 %v84, 60
    %v86 = vpop.permute.xlu0 %85
    %vm87 = vcmask 572896
    %88 = vst.msk [vmem:[#allocation0] sm:$0x1] %vm87, %v86
    %s89 = scalar_lea.vmem %s0, 18
    %v90 = vld [vmem:[%s89] sm:$0x1]
    %91 = vrot.lane.b32.xlu0 %v90, 52
    %v92 = vpop.permute.xlu0 %91
    %vm93 = vcmask 507296
    %s94 = scalar_lea.vmem [#allocation0], 8
    %95 = vst.msk [vmem:[%s94] sm:$0x1] %vm93, %v92
    %s96 = scalar_lea.vmem %s0, 5
    %v97 = vld [vmem:[%s96] sm:$0x1]
    %98 = vrot.lane.b32.xlu0 %v97, 50
    %v99 = vpop.permute.xlu0 %98
    %vm100 = vcmask 490896
    %101 = vst.msk [vmem:[#allocation0] sm:$0x1] %vm100, %v99
    %s102 = scalar_lea.vmem %s0, 17
    %v103 = vld [vmem:[%s102] sm:$0x1]
    %104 = vrot.lane.b32.xlu0 %v103, 42
    %v105 = vpop.permute.xlu0 %104
    %vm106 = vcmask 425296
    %s107 = scalar_lea.vmem [#allocation0], 8
    %108 = vst.msk [vmem:[%s107] sm:$0x1] %vm106, %v105
    %s109 = scalar_lea.vmem %s0, 4
    %v110 = vld [vmem:[%s109] sm:$0x1]
    %111 = vrot.lane.b32.xlu0 %v110, 40
    %v112 = vpop.permute.xlu0 %111
    %vm113 = vcmask 408896
    %114 = vst.msk [vmem:[#allocation0] sm:$0x1] %vm113, %v112
    %s115 = scalar_lea.vmem %s0, 16
    %v116 = vld [vmem:[%s115] sm:$0x1]
    %117 = vrot.lane.b32.xlu0 %v116, 32
    %v118 = vpop.permute.xlu0 %117
    %vm119 = vcmask 343296
    %s120 = scalar_lea.vmem [#allocation0], 8
    %121 = vst.msk [vmem:[%s120] sm:$0x1] %vm119, %v118
    %s122 = scalar_lea.vmem %s0, 3
    %v123 = vld [vmem:[%s122] sm:$0x1]
    %124 = vrot.lane.b32.xlu0 %v123, 30
    %v125 = vpop.permute.xlu0 %124
    %vm126 = vcmask 326896
    %127 = vst.msk [vmem:[#allocation0] sm:$0x1] %vm126, %v125
    %s128 = scalar_lea.vmem %s0, 15
    %v129 = vld [vmem:[%s128] sm:$0x1]
    %130 = vrot.lane.b32.xlu0 %v129, 22
    %v131 = vpop.permute.xlu0 %130
    %vm132 = vcmask 261296
    %s133 = scalar_lea.vmem [#allocation0], 8
    %134 = vst.msk [vmem:[%s133] sm:$0x1] %vm132, %v131
    %s135 = scalar_lea.vmem %s0, 2
    %v136 = vld [vmem:[%s135] sm:$0x1]
    %137 = vrot.lane.b32.xlu0 %v136, 20
    %v138 = vpop.permute.xlu0 %137
    %vm139 = vcmask 244896
    %140 = vst.msk [vmem:[#allocation0] sm:$0x1] %vm139, %v138
    %s141 = scalar_lea.vmem %s0, 14
    %v142 = vld [vmem:[%s141] sm:$0x1]
    %143 = vrot.lane.b32.xlu0 %v142, 12
    %v144 = vpop.permute.xlu0 %143
    %vm145 = vcmask 179296
    %s146 = scalar_lea.vmem [#allocation0], 8
    %147 = vst.msk [vmem:[%s146] sm:$0x1] %vm145, %v144
    %s148 = scalar_lea.vmem %s0, 1
    %v149 = vld [vmem:[%s148] sm:$0x1]
    %150 = vrot.lane.b32.xlu0 %v149, 10
    %v151 = vpop.permute.xlu0 %150
    %vm152 = vcmask 162896
    %153 = vst.msk [vmem:[#allocation0] sm:$0x1] %vm152, %v151
    %s154 = scalar_lea.vmem %s0, 13
    %v155 = vld [vmem:[%s154] sm:$0x1]
    %156 = vrot.lane.b32.xlu0 %v155, 2
    %v157 = vpop.permute.xlu0 %156
    %vm158 = vcmask 97296
    %s159 = scalar_lea.vmem [#allocation0], 8
    %160 = vst.msk [vmem:[%s159] sm:$0x1] %vm158, %v157
    %s162 = sshll.u32 1, 1
    %s163 = ssub.s32 %s162, 1
    %v165 = vld [vmem:[#allocation0] sm:%s163]
    %s166 = sshll.u32 1, 1
    %s167 = ssub.s32 %s166, 1
    %168 = vst [vmem:[%s1] sm:%s167] %v165
    %s169 = scalar_lea.vmem [#allocation0], 8
    %v170 = vld [vmem:[%s169] sm:%s163]
    %s171 = sshll.u32 1, 1
    %s172 = ssub.s32 %s171, 1
    %s173 = scalar_lea.vmem %s1, 1
    %174 = vst [vmem:[%s173] sm:%s172] %v170

// kernel: tile.18
$region0: #{tile.18}
  #allocation0 [shape = 's32[1]{0}', space=sflag, size = 0x4, scoped, tag = 'scoped memory for tile.18']
  %s0 = inlined_call_operand.vmem [shape: f32[20], index: 0, kind: input, shape index: {}]
  %s1 = inlined_call_operand.vmem [shape: f32[8,20], index: 1, kind: output, shape index: {}]
  // Predicated region
  $region2: #{tile.18} parent=0 // pred_check
    _
  $region3: #{tile.18} parent=0 // pred_check_branch
    %3 = sbr.rel (0) target = $region5
  $region4: #{tile.18} parent=0 // pred_region
    _
  $region5: #{tile.18} parent=0 // pred_fallthru
    _
  %v4 = vld [vmem:[%s0] ss:$0 sm:$0xff]
  %5 = vst [vmem:[%s1] sm:$0xff] %v4

// kernel: tile.19
$region0: #{tile.19}
  %s0 = inlined_call_operand.vmem [shape: f32[8,20], index: 0, kind: input, shape index: {}]
  %s1 = inlined_call_operand.vmem [shape: f32[1,160], index: 1, kind: output, shape index: {}]
  $region1: #{tile.19} parent=0
    #allocation0 [shape = 'u8[8192]{0}', space=vmem, size = 0x2000, scoped, tag = 'scoped mem for output reshape']
    %v2 = vld [vmem:[%s0] sm:$0x1]
    %vm3 = vcmask 162816
    %4 = vst.msk [vmem:[#allocation0] sm:$0x1] %vm3, %v2
    %s5 = scalar_lea.vmem %s0, 6
    %v6 = vld [vmem:[%s5] sm:$0x1]
    %s7 = scalar_lea.vmem %s0, 6
    %v8 = vld [vmem:[%s7] sm:$0x1]
    %vm9 = vcmask 64512
    %v10 = vsel %vm9, %v8, %v6
    %11 = vrot.lane.b32.xlu0 %v10, 120
    %v12 = vpop.permute.xlu0 %11
    %vm13 = vcmask 97280
    %s14 = scalar_lea.vmem [#allocation0], 8
    %15 = vst.msk [vmem:[%s14] sm:$0x1] %vm13, %v12
    %vm16 = vcmask 1048512
    %17 = vst.msk [vmem:[#allocation0] sm:$0x1] %vm16, %v12
    %s18 = scalar_lea.vmem %s0, 5
    %v19 = vld [vmem:[%s18] sm:$0x1]
    %20 = vrot.lane.b32.xlu0 %v19, 100
    %v21 = vpop.permute.xlu0 %20
    %vm22 = vcmask 982816
    %23 = vst.msk [vmem:[#allocation0] sm:$0x1] %vm22, %v21
    %s24 = scalar_lea.vmem %s0, 4
    %v25 = vld [vmem:[%s24] sm:$0x1]
    %26 = vrot.lane.b32.xlu0 %v25, 80
    %v27 = vpop.permute.xlu0 %26
    %vm28 = vcmask 818816
    %29 = vst.msk [vmem:[#allocation0] sm:$0x1] %vm28, %v27
    %s30 = scalar_lea.vmem %s0, 3
    %v31 = vld [vmem:[%s30] sm:$0x1]
    %32 = vrot.lane.b32.xlu0 %v31, 60
    %v33 = vpop.permute.xlu0 %32
    %vm34 = vcmask 654816
    %35 = vst.msk [vmem:[#allocation0] sm:$0x1] %vm34, %v33
    %s36 = scalar_lea.vmem %s0, 2
    %v37 = vld [vmem:[%s36] sm:$0x1]
    %38 = vrot.lane.b32.xlu0 %v37, 40
    %v39 = vpop.permute.xlu0 %38
    %vm40 = vcmask 490816
    %41 = vst.msk [vmem:[#allocation0] sm:$0x1] %vm40, %v39
    %s42 = scalar_lea.vmem %s0, 1
    %v43 = vld [vmem:[%s42] sm:$0x1]
    %44 = vrot.lane.b32.xlu0 %v43, 20
    %v45 = vpop.permute.xlu0 %44
    %vm46 = vcmask 326816
    %47 = vst.msk [vmem:[#allocation0] sm:$0x1] %vm46, %v45
    %s48 = scalar_lea.vmem %s0, 7
    %v49 = vld [vmem:[%s48] sm:$0x1]
    %50 = vrot.lane.b32.xlu0 %v49, 12
    %v51 = vpop.permute.xlu0 %50
    %vm52 = vcmask 261216
    %s53 = scalar_lea.vmem [#allocation0], 8
    %54 = vst.msk [vmem:[%s53] sm:$0x1] %vm52, %v51
    %s56 = sshll.u32 1, 1
    %s57 = ssub.s32 %s56, 1
    %v59 = vld [vmem:[#allocation0] sm:%s57]
    %s60 = sshll.u32 1, 1
    %s61 = ssub.s32 %s60, 1
    %62 = vst [vmem:[%s1] sm:%s61] %v59
    %s63 = scalar_lea.vmem [#allocation0], 8
    %v64 = vld [vmem:[%s63] sm:%s57]
    %s65 = sshll.u32 1, 1
    %s66 = ssub.s32 %s65, 1
    %s67 = scalar_lea.vmem %s1, 1
    %68 = vst [vmem:[%s67] sm:%s66] %v64

// kernel: net_forward.1
$region0: #{net_forward.1}
  #allocation0 [shape = 'u32[]', space=smem, size = 0x4, offset = 0x4, fixed_abs, tag = 'smem constant byte address 0x4 - core index']
  #allocation1 [shape = 'u32[144,128]{1,0:T(1,128)}', space=vmem, size = 0x12000, scoped, tag = 'internal scratch']
  #allocation2 [shape = 'f32[12,2,8,240]{3,2,1,0:T(8,128)}', space=vmem, size = 0x30000, scoped, tag = 'scratch operand']
  #allocation3 [shape = 'f32[12,8,120]{2,1,0:T(8,128)}', space=vmem, size = 0xc000, scoped, tag = 'scratch operand']
  #allocation4 [shape = 'f32[4,2,8,160]{3,2,1,0:T(8,128)}', space=vmem, size = 0x10000, scoped, tag = 'scratch operand']
  #allocation5 [shape = 'f32[4,8,80]{2,1,0:T(8,128)}', space=vmem, size = 0x4000, scoped, tag = 'scratch operand']
  %s0 = inlined_call_operand.vmem [shape: f32[28,8,28], index: 0, kind: input, shape index: {}]
  %s1 = inlined_call_operand.vmem [shape: f32[5,28,240], index: 1, kind: input, shape index: {}]
  %s2 = inlined_call_operand.vmem [shape: f32[1,240], index: 2, kind: input, shape index: {}]
  %s3 = inlined_call_operand.vmem [shape: f32[5,120,160], index: 3, kind: input, shape index: {}]
  %s4 = inlined_call_operand.vmem [shape: f32[1,160], index: 4, kind: input, shape index: {}]
  %s5 = inlined_call_operand.vmem [shape: f32[240,120], index: 5, kind: input, shape index: {}]
  %s6 = inlined_call_operand.vmem [shape: f32[240,120], index: 6, kind: input, shape index: {}]
  %s7 = inlined_call_operand.vmem [shape: f32[160,80], index: 7, kind: input, shape index: {}]
  %s8 = inlined_call_operand.vmem [shape: f32[160,80], index: 8, kind: input, shape index: {}]
  %s9 = inlined_call_operand.vmem [shape: f32[4,80,50], index: 9, kind: input, shape index: {}]
  %s10 = inlined_call_operand.vmem [shape: f32[1,50], index: 10, kind: input, shape index: {}]
  %s11 = inlined_call_operand.vmem [shape: f32[50,10], index: 11, kind: input, shape index: {}]
  %s12 = inlined_call_operand.vmem [shape: f32[1,10], index: 12, kind: input, shape index: {}]
  %s13 = inlined_call_operand.vmem [shape: f32[8,10], index: 13, kind: output, shape index: {}]
  %s14 = sld [smem:[#allocation0]]
  $region62: #{net_forward.1} parent=0
    _
  %s16 = ssub.s32 1, %s14
  %s17 = scalar_select 0, %s16, %s14
  // Predicated region
  $region2: #{net_forward.1} parent=0 // pred_check
    _
  $region3: #{net_forward.1} parent=0 // pred_check_branch
    %19 = sbr.rel (0) target = $region5
  $region4: #{net_forward.1} parent=0 // pred_region
    _
  $region5: #{net_forward.1} parent=0 // pred_fallthru
    _
  // Predicated region
  $region6: #{net_forward.1} parent=0 // pred_check
    _
  $region7: #{net_forward.1} parent=0 // pred_check_branch
    %21 = sbr.rel (0) target = $region9
  $region8: #{net_forward.1} parent=0 // pred_region
    _
  $region9: #{net_forward.1} parent=0 // pred_fallthru
    _
  // Predicated region
  $region10: #{net_forward.1} parent=0 // pred_check
    _
  $region11: #{net_forward.1} parent=0 // pred_check_branch
    %23 = sbr.rel (0) target = $region13
  $region12: #{net_forward.1} parent=0 // pred_region
    _
  $region13: #{net_forward.1} parent=0 // pred_fallthru
    _
  // Predicated region
  $region14: #{net_forward.1} parent=0 // pred_check
    _
  $region15: #{net_forward.1} parent=0 // pred_check_branch
    %25 = sbr.rel (0) target = $region17
  $region16: #{net_forward.1} parent=0 // pred_region
    _
  $region17: #{net_forward.1} parent=0 // pred_fallthru
    _
  // Predicated region
  $region18: #{net_forward.1} parent=0 // pred_check
    _
  $region19: #{net_forward.1} parent=0 // pred_check_branch
    %27 = sbr.rel (0) target = $region21
  $region20: #{net_forward.1} parent=0 // pred_region
    _
  $region21: #{net_forward.1} parent=0 // pred_fallthru
    _
  // Predicated region
  $region22: #{net_forward.1} parent=0 // pred_check
    _
  $region23: #{net_forward.1} parent=0 // pred_check_branch
    %29 = sbr.rel (0) target = $region25
  $region24: #{net_forward.1} parent=0 // pred_region
    _
  $region25: #{net_forward.1} parent=0 // pred_fallthru
    _
  // Predicated region
  $region26: #{net_forward.1} parent=0 // pred_check
    _
  $region27: #{net_forward.1} parent=0 // pred_check_branch
    %31 = sbr.rel (0) target = $region29
  $region28: #{net_forward.1} parent=0 // pred_region
    _
  $region29: #{net_forward.1} parent=0 // pred_fallthru
    _
  // Predicated region
  $region30: #{net_forward.1} parent=0 // pred_check
    _
  $region31: #{net_forward.1} parent=0 // pred_check_branch
    %33 = sbr.rel (0) target = $region33
  $region32: #{net_forward.1} parent=0 // pred_region
    _
  $region33: #{net_forward.1} parent=0 // pred_fallthru
    _
  // Predicated region
  $region34: #{net_forward.1} parent=0 // pred_check
    _
  $region35: #{net_forward.1} parent=0 // pred_check_branch
    %35 = sbr.rel (0) target = $region37
  $region36: #{net_forward.1} parent=0 // pred_region
    _
  $region37: #{net_forward.1} parent=0 // pred_fallthru
    _
  // Predicated region
  $region38: #{net_forward.1} parent=0 // pred_check
    _
  $region39: #{net_forward.1} parent=0 // pred_check_branch
    %37 = sbr.rel (0) target = $region41
  $region40: #{net_forward.1} parent=0 // pred_region
    _
  $region41: #{net_forward.1} parent=0 // pred_fallthru
    _
  // Predicated region
  $region42: #{net_forward.1} parent=0 // pred_check
    _
  $region43: #{net_forward.1} parent=0 // pred_check_branch
    %39 = sbr.rel (0) target = $region45
  $region44: #{net_forward.1} parent=0 // pred_region
    _
  $region45: #{net_forward.1} parent=0 // pred_fallthru
    _
  // Predicated region
  $region46: #{net_forward.1} parent=0 // pred_check
    _
  $region47: #{net_forward.1} parent=0 // pred_check_branch
    %41 = sbr.rel (0) target = $region49
  $region48: #{net_forward.1} parent=0 // pred_region
    _
  $region49: #{net_forward.1} parent=0 // pred_fallthru
    _
  // Predicated region
  $region50: #{net_forward.1} parent=0 // pred_check
    _
  $region51: #{net_forward.1} parent=0 // pred_check_branch
    %43 = sbr.rel (0) target = $region53
  $region52: #{net_forward.1} parent=0 // pred_region
    _
  $region53: #{net_forward.1} parent=0 // pred_fallthru
    _
  %v44 = vld [vmem:[%s0] sm:$0xff]
  %v45 = vld [vmem:[%s0 + $0x8] sm:$0xff]
  %v46 = vld [vmem:[%s0 + $0x10] sm:$0xff]
  %v47 = vld [vmem:[%s0 + $0x18] sm:$0xff]
  %v48 = vld [vmem:[%s0 + $0x20] sm:$0xff]
  %v49 = vld [vmem:[%s0 + $0x28] sm:$0xff]
  %v50 = vld [vmem:[%s0 + $0x30] sm:$0xff]
  %v51 = vld [vmem:[%s0 + $0x38] sm:$0xff]
  %v52 = vld [vmem:[%s0 + $0x40] sm:$0xff]
  %v53 = vld [vmem:[%s0 + $0x48] sm:$0xff]
  %v54 = vld [vmem:[%s0 + $0x50] sm:$0xff]
  %v55 = vld [vmem:[%s0 + $0x58] sm:$0xff]
  %v56 = vld [vmem:[%s0 + $0x60] sm:$0xff]
  %v57 = vld [vmem:[%s0 + $0x68] sm:$0xff]
  %v58 = vld [vmem:[%s0 + $0x70] sm:$0xff]
  %v59 = vld [vmem:[%s0 + $0x78] sm:$0xff]
  %v60 = vld [vmem:[%s0 + $0x80] sm:$0xff]
  %v61 = vld [vmem:[%s0 + $0x88] sm:$0xff]
  %v62 = vld [vmem:[%s0 + $0x90] sm:$0xff]
  %v63 = vld [vmem:[%s0 + $0x98] sm:$0xff]
  %v64 = vld [vmem:[%s0 + $0xa0] sm:$0xff]
  %v65 = vld [vmem:[%s0 + $0xa8] sm:$0xff]
  %v66 = vld [vmem:[%s0 + $0xb0] sm:$0xff]
  %v67 = vld [vmem:[%s0 + $0xb8] sm:$0xff]
  %v68 = vld [vmem:[%s1] sm:$0xff]
  %v69 = vld [vmem:[%s1 + $0x8] sm:$0xff]
  %v70 = vld [vmem:[%s1 + $0x10] sm:$0xff]
  %v71 = vld [vmem:[%s1 + $0x18] sm:$0xff]
  %v72 = vld [vmem:[%s1 + $0x20] sm:$0xff]
  %v73 = vld [vmem:[%s1 + $0x28] sm:$0xff]
  %v74 = vld [vmem:[%s1 + $0x30] sm:$0xf]
  %v75 = vld [vmem:[%s1 + $0x38] sm:$0xf]
  %s76 = scalar_lea.vmem %s0, 8
  %v77 = vld [vmem:[%s76] sm:$0xff]
  %v78 = vld [vmem:[%s76 + $0x8] sm:$0xff]
  %v79 = vld [vmem:[%s76 + $0x10] sm:$0xff]
  %v80 = vld [vmem:[%s76 + $0x18] sm:$0xff]
  %v81 = vld [vmem:[%s76 + $0x20] sm:$0xff]
  %v82 = vld [vmem:[%s76 + $0x28] sm:$0xff]
  %v83 = vld [vmem:[%s76 + $0x30] sm:$0xff]
  %v84 = vld [vmem:[%s76 + $0x38] sm:$0xff]
  %v85 = vld [vmem:[%s76 + $0x40] sm:$0xff]
  %v86 = vld [vmem:[%s76 + $0x48] sm:$0xff]
  %v87 = vld [vmem:[%s76 + $0x50] sm:$0xff]
  %v88 = vld [vmem:[%s76 + $0x58] sm:$0xff]
  %v89 = vld [vmem:[%s76 + $0x60] sm:$0xff]
  %v90 = vld [vmem:[%s76 + $0x68] sm:$0xff]
  %v91 = vld [vmem:[%s76 + $0x70] sm:$0xff]
  %v92 = vld [vmem:[%s76 + $0x78] sm:$0xff]
  %v93 = vld [vmem:[%s76 + $0x80] sm:$0xff]
  %v94 = vld [vmem:[%s76 + $0x88] sm:$0xff]
  %v95 = vld [vmem:[%s76 + $0x90] sm:$0xff]
  %v96 = vld [vmem:[%s76 + $0x98] sm:$0xff]
  %v97 = vld [vmem:[%s76 + $0xa0] sm:$0xff]
  %v98 = vld [vmem:[%s76 + $0xa8] sm:$0xff]
  %v99 = vld [vmem:[%s76 + $0xb0] sm:$0xff]
  %v100 = vld [vmem:[%s76 + $0xb8] sm:$0xff]
  %s101 = scalar_lea.vmem %s1, 64
  %v102 = vld [vmem:[%s101] sm:$0xff]
  %v103 = vld [vmem:[%s101 + $0x8] sm:$0xff]
  %v104 = vld [vmem:[%s101 + $0x10] sm:$0xff]
  %v105 = vld [vmem:[%s101 + $0x18] sm:$0xff]
  %v106 = vld [vmem:[%s101 + $0x20] sm:$0xff]
  %v107 = vld [vmem:[%s101 + $0x28] sm:$0xff]
  %v108 = vld [vmem:[%s101 + $0x30] sm:$0xf]
  %v109 = vld [vmem:[%s101 + $0x38] sm:$0xf]
  %vm110 = vcmask 228352
  %v112 = vsel %vm110, %v77, 0
  %v115 = vsel %vm110, %v78, 0
  %v118 = vsel %vm110, %v79, 0
  %v121 = vsel %vm110, %v80, 0
  %v124 = vsel %vm110, %v81, 0
  %v127 = vsel %vm110, %v82, 0
  %v130 = vsel %vm110, %v83, 0
  %v133 = vsel %vm110, %v84, 0
  %v136 = vsel %vm110, %v85, 0
  %v139 = vsel %vm110, %v86, 0
  %v142 = vsel %vm110, %v87, 0
  %v145 = vsel %vm110, %v88, 0
  %v148 = vsel %vm110, %v89, 0
  %v151 = vsel %vm110, %v90, 0
  %v154 = vsel %vm110, %v91, 0
  %v157 = vsel %vm110, %v92, 0
  %v160 = vsel %vm110, %v93, 0
  %v163 = vsel %vm110, %v94, 0
  %v166 = vsel %vm110, %v95, 0
  %v169 = vsel %vm110, %v96, 0
  %v172 = vsel %vm110, %v97, 0
  %v175 = vsel %vm110, %v98, 0
  %v178 = vsel %vm110, %v99, 0
  %v181 = vsel %vm110, %v100, 0
  %vm183 = vcmask 1043456
  %v185 = vsel %vm183, %v108, 0
  %v188 = vsel %vm183, %v109, 0
  %190 = vmatprep.subr.mxu0 0.0
  %191 = vmatpush1.msra.mxu0 0.0
  %192 = vmatprep.subr.mxu0 0.0
  %193 = vmatpush1.msra.mxu0 0.0
  %194 = vmatprep.subr.mxu0 0.0
  %195 = vmatpush1.msra.mxu0 0.0
  %196 = vmatprep.subr.mxu0 0.0
  %197 = vmatpush1.msra.mxu0 0.0
  %198 = vmatprep.subr.mxu0 0.0
  %199 = vmatpush1.msra.mxu0 0.0
  %200 = vmatprep.subr.mxu0 0.0
  %201 = vmatpush1.msra.mxu0 0.0
  %202 = vmatprep.subr.mxu0 0.0
  %203 = vmatpush1.msra.mxu0 0.0
  %204 = vmatprep.subr.mxu0 0.0
  %205 = vmatpush1.msra.mxu0 0.0
  %206 = vmatprep.subr.mxu0 0.0
  %207 = vmatpush1.msra.mxu0 0.0
  %208 = vmatprep.subr.mxu0 0.0
  %209 = vmatpush1.msra.mxu0 0.0
  %210 = vmatprep.subr.mxu0 0.0
  %211 = vmatpush1.msra.mxu0 0.0
  %212 = vmatprep.subr.mxu0 0.0
  %213 = vmatpush1.msra.mxu0 0.0
  %214 = vmatprep.subr.mxu0 %v188
  %215 = vmatpush1.msra.mxu0 %v185
  %216 = vmatprep.subr.mxu0 %v107
  %217 = vmatpush1.msra.mxu0 %v106
  %218 = vmatprep.subr.mxu0 %v105
  %219 = vmatpush1.msra.mxu0 %v104
  %220 = vmatprep.subr.mxu0 %v103
  %221 = vmatpush1.msra.mxu0 %v102
  %222 = vmatprep.subr.mxu0 0.0
  %223 = vmatpush2.msra.mxu0 0.0
  %224 = vmatprep.subr.mxu0 0.0
  %225 = vmatpush2.msra.mxu0 0.0
  %226 = vmatprep.subr.mxu0 0.0
  %227 = vmatpush2.msra.mxu0 0.0
  %228 = vmatprep.subr.mxu0 0.0
  %229 = vmatpush2.msra.mxu0 0.0
  %230 = vmatprep.subr.mxu0 0.0
  %231 = vmatpush2.msra.mxu0 0.0
  %232 = vmatprep.subr.mxu0 0.0
  %233 = vmatpush2.msra.mxu0 0.0
  %234 = vmatprep.subr.mxu0 0.0
  %235 = vmatpush2.msra.mxu0 0.0
  %236 = vmatprep.subr.mxu0 0.0
  %237 = vmatpush2.msra.mxu0 0.0
  %238 = vmatprep.subr.mxu0 0.0
  %239 = vmatpush2.msra.mxu0 0.0
  %240 = vmatprep.subr.mxu0 0.0
  %241 = vmatpush2.msra.mxu0 0.0
  %242 = vmatprep.subr.mxu0 0.0
  %243 = vmatpush2.msra.mxu0 0.0
  %244 = vmatprep.subr.mxu0 0.0
  %245 = vmatpush2.msra.mxu0 0.0
  %246 = vmatprep.subr.mxu0 0.0
  %247 = vmatpush2.msra.mxu0 0.0
  %248 = vmatprep.subr.mxu0 0.0
  %249 = vmatpush2.msra.mxu0 0.0
  %250 = vmatprep.subr.mxu0 0.0
  %251 = vmatpush2.msra.mxu0 0.0
  %252 = vmatprep.subr.mxu0 0.0
  %253 = vmatpush2.msra.mxu0 0.0
  %254 = vmatprep.mubr.f32.mxu0 0.0
  %255 = vmatmul.mubr.f32.gmra.mxu0 %v112
  %v256 = vpop.f32.mrf.mxu0
  %v257 = vadd.f32 0.0, %v256
  %v258 = vpop.f32.mrf.mxu0
  %v259 = vadd.f32 0.0, %v258
  %260 = vmatprep.mubr.f32.mxu0 0.0
  %261 = vmatmul.mubr.f32.gmra.mxu0 %v115
  %v262 = vpop.f32.mrf.mxu0
  %v263 = vadd.f32 0.0, %v262
  %v264 = vpop.f32.mrf.mxu0
  %v265 = vadd.f32 0.0, %v264
  %266 = vmatprep.mubr.f32.mxu0 0.0
  %267 = vmatmul.mubr.f32.gmra.mxu0 %v118
  %v268 = vpop.f32.mrf.mxu0
  %v269 = vadd.f32 0.0, %v268
  %v270 = vpop.f32.mrf.mxu0
  %v271 = vadd.f32 0.0, %v270
  %272 = vmatprep.mubr.f32.mxu0 0.0
  %273 = vmatmul.mubr.f32.gmra.mxu0 %v121
  %v274 = vpop.f32.mrf.mxu0
  %v275 = vadd.f32 0.0, %v274
  %v276 = vpop.f32.mrf.mxu0
  %v277 = vadd.f32 0.0, %v276
  %278 = vmatprep.mubr.f32.mxu0 0.0
  %279 = vmatmul.mubr.f32.gmra.mxu0 %v124
  %v280 = vpop.f32.mrf.mxu0
  %v281 = vadd.f32 0.0, %v280
  %v282 = vpop.f32.mrf.mxu0
  %v283 = vadd.f32 0.0, %v282
  %284 = vmatprep.mubr.f32.mxu0 0.0
  %285 = vmatmul.mubr.f32.gmra.mxu0 %v127
  %v286 = vpop.f32.mrf.mxu0
  %v287 = vadd.f32 0.0, %v286
  %v288 = vpop.f32.mrf.mxu0
  %v289 = vadd.f32 0.0, %v288
  %290 = vmatprep.mubr.f32.mxu0 0.0
  %291 = vmatmul.mubr.f32.gmra.mxu0 %v130
  %v292 = vpop.f32.mrf.mxu0
  %v293 = vadd.f32 0.0, %v292
  %v294 = vpop.f32.mrf.mxu0
  %v295 = vadd.f32 0.0, %v294
  %296 = vmatprep.mubr.f32.mxu0 0.0
  %297 = vmatmul.mubr.f32.gmra.mxu0 %v133
  %v298 = vpop.f32.mrf.mxu0
  %v299 = vadd.f32 0.0, %v298
  %v300 = vpop.f32.mrf.mxu0
  %v301 = vadd.f32 0.0, %v300
  %302 = vmatprep.mubr.f32.mxu0 0.0
  %303 = vmatmul.mubr.f32.gmra.mxu0 %v136
  %v304 = vpop.f32.mrf.mxu0
  %v305 = vadd.f32 0.0, %v304
  %v306 = vpop.f32.mrf.mxu0
  %v307 = vadd.f32 0.0, %v306
  %308 = vmatprep.mubr.f32.mxu0 0.0
  %309 = vmatmul.mubr.f32.gmra.mxu0 %v139
  %v310 = vpop.f32.mrf.mxu0
  %v311 = vadd.f32 0.0, %v310
  %v312 = vpop.f32.mrf.mxu0
  %v313 = vadd.f32 0.0, %v312
  %314 = vmatprep.mubr.f32.mxu0 0.0
  %315 = vmatmul.mubr.f32.gmra.mxu0 %v142
  %v316 = vpop.f32.mrf.mxu0
  %v317 = vadd.f32 0.0, %v316
  %v318 = vpop.f32.mrf.mxu0
  %v319 = vadd.f32 0.0, %v318
  %320 = vmatprep.mubr.f32.mxu0 0.0
  %321 = vmatmul.mubr.f32.gmra.mxu0 %v145
  %v322 = vpop.f32.mrf.mxu0
  %v323 = vadd.f32 0.0, %v322
  %v324 = vpop.f32.mrf.mxu0
  %v325 = vadd.f32 0.0, %v324
  %326 = vmatprep.mubr.f32.mxu0 0.0
  %327 = vmatmul.mubr.f32.gmra.mxu0 %v148
  %v328 = vpop.f32.mrf.mxu0
  %v329 = vadd.f32 0.0, %v328
  %v330 = vpop.f32.mrf.mxu0
  %v331 = vadd.f32 0.0, %v330
  %332 = vmatprep.mubr.f32.mxu0 0.0
  %333 = vmatmul.mubr.f32.gmra.mxu0 %v151
  %v334 = vpop.f32.mrf.mxu0
  %v335 = vadd.f32 0.0, %v334
  %v336 = vpop.f32.mrf.mxu0
  %v337 = vadd.f32 0.0, %v336
  %338 = vmatprep.mubr.f32.mxu0 0.0
  %339 = vmatmul.mubr.f32.gmra.mxu0 %v154
  %v340 = vpop.f32.mrf.mxu0
  %v341 = vadd.f32 0.0, %v340
  %v342 = vpop.f32.mrf.mxu0
  %v343 = vadd.f32 0.0, %v342
  %344 = vmatprep.mubr.f32.mxu0 0.0
  %345 = vmatmul.mubr.f32.gmra.mxu0 %v157
  %v346 = vpop.f32.mrf.mxu0
  %v347 = vadd.f32 0.0, %v346
  %v348 = vpop.f32.mrf.mxu0
  %v349 = vadd.f32 0.0, %v348
  %350 = vmatprep.mubr.f32.mxu0 0.0
  %351 = vmatmul.mubr.f32.gmra.mxu0 %v160
  %v352 = vpop.f32.mrf.mxu0
  %v353 = vadd.f32 0.0, %v352
  %v354 = vpop.f32.mrf.mxu0
  %v355 = vadd.f32 0.0, %v354
  %356 = vmatprep.mubr.f32.mxu0 0.0
  %357 = vmatmul.mubr.f32.gmra.mxu0 %v163
  %v358 = vpop.f32.mrf.mxu0
  %v359 = vadd.f32 0.0, %v358
  %v360 = vpop.f32.mrf.mxu0
  %v361 = vadd.f32 0.0, %v360
  %362 = vmatprep.mubr.f32.mxu0 0.0
  %363 = vmatmul.mubr.f32.gmra.mxu0 %v166
  %v364 = vpop.f32.mrf.mxu0
  %v365 = vadd.f32 0.0, %v364
  %v366 = vpop.f32.mrf.mxu0
  %v367 = vadd.f32 0.0, %v366
  %368 = vmatprep.mubr.f32.mxu0 0.0
  %369 = vmatmul.mubr.f32.gmra.mxu0 %v169
  %v370 = vpop.f32.mrf.mxu0
  %v371 = vadd.f32 0.0, %v370
  %v372 = vpop.f32.mrf.mxu0
  %v373 = vadd.f32 0.0, %v372
  %374 = vmatprep.mubr.f32.mxu0 0.0
  %375 = vmatmul.mubr.f32.gmra.mxu0 %v172
  %v376 = vpop.f32.mrf.mxu0
  %v377 = vadd.f32 0.0, %v376
  %v378 = vpop.f32.mrf.mxu0
  %v379 = vadd.f32 0.0, %v378
  %380 = vmatprep.mubr.f32.mxu0 0.0
  %381 = vmatmul.mubr.f32.gmra.mxu0 %v175
  %v382 = vpop.f32.mrf.mxu0
  %v383 = vadd.f32 0.0, %v382
  %v384 = vpop.f32.mrf.mxu0
  %v385 = vadd.f32 0.0, %v384
  %386 = vmatprep.mubr.f32.mxu0 0.0
  %387 = vmatmul.mubr.f32.gmra.mxu0 %v178
  %v388 = vpop.f32.mrf.mxu0
  %v389 = vadd.f32 0.0, %v388
  %v390 = vpop.f32.mrf.mxu0
  %v391 = vadd.f32 0.0, %v390
  %392 = vmatprep.mubr.f32.mxu0 0.0
  %393 = vmatmul.mubr.f32.gmra.mxu0 %v181
  %v394 = vpop.f32.mrf.mxu0
  %v395 = vadd.f32 0.0, %v394
  %v396 = vpop.f32.mrf.mxu0
  %v397 = vadd.f32 0.0, %v396
  %398 = vdwg.mxu0
  %v400 = vsel %vm110, %v44, 0
  %v403 = vsel %vm110, %v45, 0
  %v406 = vsel %vm110, %v46, 0
  %v409 = vsel %vm110, %v47, 0
  %v412 = vsel %vm110, %v48, 0
  %v415 = vsel %vm110, %v49, 0
  %v418 = vsel %vm110, %v50, 0
  %v421 = vsel %vm110, %v51, 0
  %v424 = vsel %vm110, %v52, 0
  %v427 = vsel %vm110, %v53, 0
  %v430 = vsel %vm110, %v54, 0
  %v433 = vsel %vm110, %v55, 0
  %v436 = vsel %vm110, %v56, 0
  %v439 = vsel %vm110, %v57, 0
  %v442 = vsel %vm110, %v58, 0
  %v445 = vsel %vm110, %v59, 0
  %v448 = vsel %vm110, %v60, 0
  %v451 = vsel %vm110, %v61, 0
  %v454 = vsel %vm110, %v62, 0
  %v457 = vsel %vm110, %v63, 0
  %v460 = vsel %vm110, %v64, 0
  %v463 = vsel %vm110, %v65, 0
  %v466 = vsel %vm110, %v66, 0
  %v469 = vsel %vm110, %v67, 0
  %v472 = vsel %vm183, %v74, 0
  %v475 = vsel %vm183, %v75, 0
  %477 = vmatprep.subr.mxu0 0.0
  %478 = vmatpush1.msra.mxu0 0.0
  %479 = vmatprep.subr.mxu0 0.0
  %480 = vmatpush1.msra.mxu0 0.0
  %481 = vmatprep.subr.mxu0 0.0
  %482 = vmatpush1.msra.mxu0 0.0
  %483 = vmatprep.subr.mxu0 0.0
  %484 = vmatpush1.msra.mxu0 0.0
  %485 = vmatprep.subr.mxu0 0.0
  %486 = vmatpush1.msra.mxu0 0.0
  %487 = vmatprep.subr.mxu0 0.0
  %488 = vmatpush1.msra.mxu0 0.0
  %489 = vmatprep.subr.mxu0 0.0
  %490 = vmatpush1.msra.mxu0 0.0
  %491 = vmatprep.subr.mxu0 0.0
  %492 = vmatpush1.msra.mxu0 0.0
  %493 = vmatprep.subr.mxu0 0.0
  %494 = vmatpush1.msra.mxu0 0.0
  %495 = vmatprep.subr.mxu0 0.0
  %496 = vmatpush1.msra.mxu0 0.0
  %497 = vmatprep.subr.mxu0 0.0
  %498 = vmatpush1.msra.mxu0 0.0
  %499 = vmatprep.subr.mxu0 0.0
  %500 = vmatpush1.msra.mxu0 0.0
  %501 = vmatprep.subr.mxu0 %v475
  %502 = vmatpush1.msra.mxu0 %v472
  %503 = vmatprep.subr.mxu0 %v73
  %504 = vmatpush1.msra.mxu0 %v72
  %505 = vmatprep.subr.mxu0 %v71
  %506 = vmatpush1.msra.mxu0 %v70
  %507 = vmatprep.subr.mxu0 %v69
  %508 = vmatpush1.msra.mxu0 %v68
  %509 = vmatprep.subr.mxu0 0.0
  %510 = vmatpush2.msra.mxu0 0.0
  %511 = vmatprep.subr.mxu0 0.0
  %512 = vmatpush2.msra.mxu0 0.0
  %513 = vmatprep.subr.mxu0 0.0
  %514 = vmatpush2.msra.mxu0 0.0
  %515 = vmatprep.subr.mxu0 0.0
  %516 = vmatpush2.msra.mxu0 0.0
  %517 = vmatprep.subr.mxu0 0.0
  %518 = vmatpush2.msra.mxu0 0.0
  %519 = vmatprep.subr.mxu0 0.0
  %520 = vmatpush2.msra.mxu0 0.0
  %521 = vmatprep.subr.mxu0 0.0
  %522 = vmatpush2.msra.mxu0 0.0
  %523 = vmatprep.subr.mxu0 0.0
  %524 = vmatpush2.msra.mxu0 0.0
  %525 = vmatprep.subr.mxu0 0.0
  %526 = vmatpush2.msra.mxu0 0.0
  %527 = vmatprep.subr.mxu0 0.0
  %528 = vmatpush2.msra.mxu0 0.0
  %529 = vmatprep.subr.mxu0 0.0
  %530 = vmatpush2.msra.mxu0 0.0
  %531 = vmatprep.subr.mxu0 0.0
  %532 = vmatpush2.msra.mxu0 0.0
  %533 = vmatprep.subr.mxu0 0.0
  %534 = vmatpush2.msra.mxu0 0.0
  %535 = vmatprep.subr.mxu0 0.0
  %536 = vmatpush2.msra.mxu0 0.0
  %537 = vmatprep.subr.mxu0 0.0
  %538 = vmatpush2.msra.mxu0 0.0
  %539 = vmatprep.subr.mxu0 0.0
  %540 = vmatpush2.msra.mxu0 0.0
  %541 = vmatprep.mubr.f32.mxu0 0.0
  %542 = vmatmul.mubr.f32.gmra.mxu0 %v400
  %v543 = vpop.f32.mrf.mxu0
  %v544 = vadd.f32 %v257, %v543
  %v545 = vpop.f32.mrf.mxu0
  %v546 = vadd.f32 %v259, %v545
  %547 = vmatprep.mubr.f32.mxu0 0.0
  %548 = vmatmul.mubr.f32.gmra.mxu0 %v403
  %v549 = vpop.f32.mrf.mxu0
  %v550 = vadd.f32 %v263, %v549
  %v551 = vpop.f32.mrf.mxu0
  %v552 = vadd.f32 %v265, %v551
  %553 = vmatprep.mubr.f32.mxu0 0.0
  %554 = vmatmul.mubr.f32.gmra.mxu0 %v406
  %v555 = vpop.f32.mrf.mxu0
  %v556 = vadd.f32 %v269, %v555
  %v557 = vpop.f32.mrf.mxu0
  %v558 = vadd.f32 %v271, %v557
  %559 = vmatprep.mubr.f32.mxu0 0.0
  %560 = vmatmul.mubr.f32.gmra.mxu0 %v409
  %v561 = vpop.f32.mrf.mxu0
  %v562 = vadd.f32 %v275, %v561
  %v563 = vpop.f32.mrf.mxu0
  %v564 = vadd.f32 %v277, %v563
  %565 = vmatprep.mubr.f32.mxu0 0.0
  %566 = vmatmul.mubr.f32.gmra.mxu0 %v412
  %v567 = vpop.f32.mrf.mxu0
  %v568 = vadd.f32 %v281, %v567
  %v569 = vpop.f32.mrf.mxu0
  %v570 = vadd.f32 %v283, %v569
  %571 = vmatprep.mubr.f32.mxu0 0.0
  %572 = vmatmul.mubr.f32.gmra.mxu0 %v415
  %v573 = vpop.f32.mrf.mxu0
  %v574 = vadd.f32 %v287, %v573
  %v575 = vpop.f32.mrf.mxu0
  %v576 = vadd.f32 %v289, %v575
  %577 = vmatprep.mubr.f32.mxu0 0.0
  %578 = vmatmul.mubr.f32.gmra.mxu0 %v418
  %v579 = vpop.f32.mrf.mxu0
  %v580 = vadd.f32 %v293, %v579
  %v581 = vpop.f32.mrf.mxu0
  %v582 = vadd.f32 %v295, %v581
  %583 = vmatprep.mubr.f32.mxu0 0.0
  %584 = vmatmul.mubr.f32.gmra.mxu0 %v421
  %v585 = vpop.f32.mrf.mxu0
  %v586 = vadd.f32 %v299, %v585
  %v587 = vpop.f32.mrf.mxu0
  %v588 = vadd.f32 %v301, %v587
  %589 = vmatprep.mubr.f32.mxu0 0.0
  %590 = vmatmul.mubr.f32.gmra.mxu0 %v424
  %v591 = vpop.f32.mrf.mxu0
  %v592 = vadd.f32 %v305, %v591
  %v593 = vpop.f32.mrf.mxu0
  %v594 = vadd.f32 %v307, %v593
  %595 = vmatprep.mubr.f32.mxu0 0.0
  %596 = vmatmul.mubr.f32.gmra.mxu0 %v427
  %v597 = vpop.f32.mrf.mxu0
  %v598 = vadd.f32 %v311, %v597
  %v599 = vpop.f32.mrf.mxu0
  %v600 = vadd.f32 %v313, %v599
  %601 = vmatprep.mubr.f32.mxu0 0.0
  %602 = vmatmul.mubr.f32.gmra.mxu0 %v430
  %v603 = vpop.f32.mrf.mxu0
  %v604 = vadd.f32 %v317, %v603
  %v605 = vpop.f32.mrf.mxu0
  %v606 = vadd.f32 %v319, %v605
  %607 = vmatprep.mubr.f32.mxu0 0.0
  %608 = vmatmul.mubr.f32.gmra.mxu0 %v433
  %v609 = vpop.f32.mrf.mxu0
  %v610 = vadd.f32 %v323, %v609
  %v611 = vpop.f32.mrf.mxu0
  %v612 = vadd.f32 %v325, %v611
  %613 = vmatprep.mubr.f32.mxu0 0.0
  %614 = vmatmul.mubr.f32.gmra.mxu0 %v436
  %v615 = vpop.f32.mrf.mxu0
  %v616 = vadd.f32 %v329, %v615
  %v617 = vpop.f32.mrf.mxu0
  %v618 = vadd.f32 %v331, %v617
  %619 = vmatprep.mubr.f32.mxu0 0.0
  %620 = vmatmul.mubr.f32.gmra.mxu0 %v439
  %v621 = vpop.f32.mrf.mxu0
  %v622 = vadd.f32 %v335, %v621
  %v623 = vpop.f32.mrf.mxu0
  %v624 = vadd.f32 %v337, %v623
  %625 = vmatprep.mubr.f32.mxu0 0.0
  %626 = vmatmul.mubr.f32.gmra.mxu0 %v442
  %v627 = vpop.f32.mrf.mxu0
  %v628 = vadd.f32 %v341, %v627
  %v629 = vpop.f32.mrf.mxu0
  %v630 = vadd.f32 %v343, %v629
  %631 = vmatprep.mubr.f32.mxu0 0.0
  %632 = vmatmul.mubr.f32.gmra.mxu0 %v445
  %v633 = vpop.f32.mrf.mxu0
  %v634 = vadd.f32 %v347, %v633
  %v635 = vpop.f32.mrf.mxu0
  %v636 = vadd.f32 %v349, %v635
  %637 = vmatprep.mubr.f32.mxu0 0.0
  %638 = vmatmul.mubr.f32.gmra.mxu0 %v448
  %v639 = vpop.f32.mrf.mxu0
  %v640 = vadd.f32 %v353, %v639
  %v641 = vpop.f32.mrf.mxu0
  %v642 = vadd.f32 %v355, %v641
  %643 = vmatprep.mubr.f32.mxu0 0.0
  %644 = vmatmul.mubr.f32.gmra.mxu0 %v451
  %v645 = vpop.f32.mrf.mxu0
  %v646 = vadd.f32 %v359, %v645
  %v647 = vpop.f32.mrf.mxu0
  %v648 = vadd.f32 %v361, %v647
  %649 = vmatprep.mubr.f32.mxu0 0.0
  %650 = vmatmul.mubr.f32.gmra.mxu0 %v454
  %v651 = vpop.f32.mrf.mxu0
  %v652 = vadd.f32 %v365, %v651
  %v653 = vpop.f32.mrf.mxu0
  %v654 = vadd.f32 %v367, %v653
  %655 = vmatprep.mubr.f32.mxu0 0.0
  %656 = vmatmul.mubr.f32.gmra.mxu0 %v457
  %v657 = vpop.f32.mrf.mxu0
  %v658 = vadd.f32 %v371, %v657
  %v659 = vpop.f32.mrf.mxu0
  %v660 = vadd.f32 %v373, %v659
  %661 = vmatprep.mubr.f32.mxu0 0.0
  %662 = vmatmul.mubr.f32.gmra.mxu0 %v460
  %v663 = vpop.f32.mrf.mxu0
  %v664 = vadd.f32 %v377, %v663
  %v665 = vpop.f32.mrf.mxu0
  %v666 = vadd.f32 %v379, %v665
  %667 = vmatprep.mubr.f32.mxu0 0.0
  %668 = vmatmul.mubr.f32.gmra.mxu0 %v463
  %v669 = vpop.f32.mrf.mxu0
  %v670 = vadd.f32 %v383, %v669
  %v671 = vpop.f32.mrf.mxu0
  %v672 = vadd.f32 %v385, %v671
  %673 = vmatprep.mubr.f32.mxu0 0.0
  %674 = vmatmul.mubr.f32.gmra.mxu0 %v466
  %v675 = vpop.f32.mrf.mxu0
  %v676 = vadd.f32 %v389, %v675
  %v677 = vpop.f32.mrf.mxu0
  %v678 = vadd.f32 %v391, %v677
  %679 = vmatprep.mubr.f32.mxu0 0.0
  %680 = vmatmul.mubr.f32.gmra.mxu0 %v469
  %v681 = vpop.f32.mrf.mxu0
  %v682 = vadd.f32 %v395, %v681
  %v683 = vpop.f32.mrf.mxu0
  %v684 = vadd.f32 %v397, %v683
  %685 = vdwg.mxu0
  %s686 = scalar_lea.vmem %s0, 16
  %v687 = vld [vmem:[%s686] sm:$0xff]
  %v688 = vld [vmem:[%s686 + $0x8] sm:$0xff]
  %v689 = vld [vmem:[%s686 + $0x10] sm:$0xff]
  %v690 = vld [vmem:[%s686 + $0x18] sm:$0xff]
  %v691 = vld [vmem:[%s686 + $0x20] sm:$0xff]
  %v692 = vld [vmem:[%s686 + $0x28] sm:$0xff]
  %v693 = vld [vmem:[%s686 + $0x30] sm:$0xff]
  %v694 = vld [vmem:[%s686 + $0x38] sm:$0xff]
  %v695 = vld [vmem:[%s686 + $0x40] sm:$0xff]
  %v696 = vld [vmem:[%s686 + $0x48] sm:$0xff]
  %v697 = vld [vmem:[%s686 + $0x50] sm:$0xff]
  %v698 = vld [vmem:[%s686 + $0x58] sm:$0xff]
  %v699 = vld [vmem:[%s686 + $0x60] sm:$0xff]
  %v700 = vld [vmem:[%s686 + $0x68] sm:$0xff]
  %v701 = vld [vmem:[%s686 + $0x70] sm:$0xff]
  %v702 = vld [vmem:[%s686 + $0x78] sm:$0xff]
  %v703 = vld [vmem:[%s686 + $0x80] sm:$0xff]
  %v704 = vld [vmem:[%s686 + $0x88] sm:$0xff]
  %v705 = vld [vmem:[%s686 + $0x90] sm:$0xff]
  %v706 = vld [vmem:[%s686 + $0x98] sm:$0xff]
  %v707 = vld [vmem:[%s686 + $0xa0] sm:$0xff]
  %v708 = vld [vmem:[%s686 + $0xa8] sm:$0xff]
  %v709 = vld [vmem:[%s686 + $0xb0] sm:$0xff]
  %v710 = vld [vmem:[%s686 + $0xb8] sm:$0xff]
  %s711 = scalar_lea.vmem %s1, 128
  %v712 = vld [vmem:[%s711] sm:$0xff]
  %v713 = vld [vmem:[%s711 + $0x8] sm:$0xff]
  %v714 = vld [vmem:[%s711 + $0x10] sm:$0xff]
  %v715 = vld [vmem:[%s711 + $0x18] sm:$0xff]
  %v716 = vld [vmem:[%s711 + $0x20] sm:$0xff]
  %v717 = vld [vmem:[%s711 + $0x28] sm:$0xff]
  %v718 = vld [vmem:[%s711 + $0x30] sm:$0xf]
  %v719 = vld [vmem:[%s711 + $0x38] sm:$0xf]
  %v721 = vsel %vm110, %v687, 0
  %v724 = vsel %vm110, %v688, 0
  %v727 = vsel %vm110, %v689, 0
  %v730 = vsel %vm110, %v690, 0
  %v733 = vsel %vm110, %v691, 0
  %v736 = vsel %vm110, %v692, 0
  %v739 = vsel %vm110, %v693, 0
  %v742 = vsel %vm110, %v694, 0
  %v745 = vsel %vm110, %v695, 0
  %v748 = vsel %vm110, %v696, 0
  %v751 = vsel %vm110, %v697, 0
  %v754 = vsel %vm110, %v698, 0
  %v757 = vsel %vm110, %v699, 0
  %v760 = vsel %vm110, %v700, 0
  %v763 = vsel %vm110, %v701, 0
  %v766 = vsel %vm110, %v702, 0
  %v769 = vsel %vm110, %v703, 0
  %v772 = vsel %vm110, %v704, 0
  %v775 = vsel %vm110, %v705, 0
  %v778 = vsel %vm110, %v706, 0
  %v781 = vsel %vm110, %v707, 0
  %v784 = vsel %vm110, %v708, 0
  %v787 = vsel %vm110, %v709, 0
  %v790 = vsel %vm110, %v710, 0
  %v793 = vsel %vm183, %v718, 0
  %v796 = vsel %vm183, %v719, 0
  %798 = vmatprep.subr.mxu0 0.0
  %799 = vmatpush1.msra.mxu0 0.0
  %800 = vmatprep.subr.mxu0 0.0
  %801 = vmatpush1.msra.mxu0 0.0
  %802 = vmatprep.subr.mxu0 0.0
  %803 = vmatpush1.msra.mxu0 0.0
  %804 = vmatprep.subr.mxu0 0.0
  %805 = vmatpush1.msra.mxu0 0.0
  %806 = vmatprep.subr.mxu0 0.0
  %807 = vmatpush1.msra.mxu0 0.0
  %808 = vmatprep.subr.mxu0 0.0
  %809 = vmatpush1.msra.mxu0 0.0
  %810 = vmatprep.subr.mxu0 0.0
  %811 = vmatpush1.msra.mxu0 0.0
  %812 = vmatprep.subr.mxu0 0.0
  %813 = vmatpush1.msra.mxu0 0.0
  %814 = vmatprep.subr.mxu0 0.0
  %815 = vmatpush1.msra.mxu0 0.0
  %816 = vmatprep.subr.mxu0 0.0
  %817 = vmatpush1.msra.mxu0 0.0
  %818 = vmatprep.subr.mxu0 0.0
  %819 = vmatpush1.msra.mxu0 0.0
  %820 = vmatprep.subr.mxu0 0.0
  %821 = vmatpush1.msra.mxu0 0.0
  %822 = vmatprep.subr.mxu0 %v796
  %823 = vmatpush1.msra.mxu0 %v793
  %824 = vmatprep.subr.mxu0 %v717
  %825 = vmatpush1.msra.mxu0 %v716
  %826 = vmatprep.subr.mxu0 %v715
  %827 = vmatpush1.msra.mxu0 %v714
  %828 = vmatprep.subr.mxu0 %v713
  %829 = vmatpush1.msra.mxu0 %v712
  %830 = vmatprep.subr.mxu0 0.0
  %831 = vmatpush2.msra.mxu0 0.0
  %832 = vmatprep.subr.mxu0 0.0
  %833 = vmatpush2.msra.mxu0 0.0
  %834 = vmatprep.subr.mxu0 0.0
  %835 = vmatpush2.msra.mxu0 0.0
  %836 = vmatprep.subr.mxu0 0.0
  %837 = vmatpush2.msra.mxu0 0.0
  %838 = vmatprep.subr.mxu0 0.0
  %839 = vmatpush2.msra.mxu0 0.0
  %840 = vmatprep.subr.mxu0 0.0
  %841 = vmatpush2.msra.mxu0 0.0
  %842 = vmatprep.subr.mxu0 0.0
  %843 = vmatpush2.msra.mxu0 0.0
  %844 = vmatprep.subr.mxu0 0.0
  %845 = vmatpush2.msra.mxu0 0.0
  %846 = vmatprep.subr.mxu0 0.0
  %847 = vmatpush2.msra.mxu0 0.0
  %848 = vmatprep.subr.mxu0 0.0
  %849 = vmatpush2.msra.mxu0 0.0
  %850 = vmatprep.subr.mxu0 0.0
  %851 = vmatpush2.msra.mxu0 0.0
  %852 = vmatprep.subr.mxu0 0.0
  %853 = vmatpush2.msra.mxu0 0.0
  %854 = vmatprep.subr.mxu0 0.0
  %855 = vmatpush2.msra.mxu0 0.0
  %856 = vmatprep.subr.mxu0 0.0
  %857 = vmatpush2.msra.mxu0 0.0
  %858 = vmatprep.subr.mxu0 0.0
  %859 = vmatpush2.msra.mxu0 0.0
  %860 = vmatprep.subr.mxu0 0.0
  %861 = vmatpush2.msra.mxu0 0.0
  %862 = vmatprep.mubr.f32.mxu0 0.0
  %863 = vmatmul.mubr.f32.gmra.mxu0 %v721
  %v864 = vpop.f32.mrf.mxu0
  %v865 = vadd.f32 0.0, %v864
  %v866 = vpop.f32.mrf.mxu0
  %v867 = vadd.f32 0.0, %v866
  %868 = vmatprep.mubr.f32.mxu0 0.0
  %869 = vmatmul.mubr.f32.gmra.mxu0 %v724
  %v870 = vpop.f32.mrf.mxu0
  %v871 = vadd.f32 0.0, %v870
  %v872 = vpop.f32.mrf.mxu0
  %v873 = vadd.f32 0.0, %v872
  %874 = vmatprep.mubr.f32.mxu0 0.0
  %875 = vmatmul.mubr.f32.gmra.mxu0 %v727
  %v876 = vpop.f32.mrf.mxu0
  %v877 = vadd.f32 0.0, %v876
  %v878 = vpop.f32.mrf.mxu0
  %v879 = vadd.f32 0.0, %v878
  %880 = vmatprep.mubr.f32.mxu0 0.0
  %881 = vmatmul.mubr.f32.gmra.mxu0 %v730
  %v882 = vpop.f32.mrf.mxu0
  %v883 = vadd.f32 0.0, %v882
  %v884 = vpop.f32.mrf.mxu0
  %v885 = vadd.f32 0.0, %v884
  %886 = vmatprep.mubr.f32.mxu0 0.0
  %887 = vmatmul.mubr.f32.gmra.mxu0 %v733
  %v888 = vpop.f32.mrf.mxu0
  %v889 = vadd.f32 0.0, %v888
  %v890 = vpop.f32.mrf.mxu0
  %v891 = vadd.f32 0.0, %v890
  %892 = vmatprep.mubr.f32.mxu0 0.0
  %893 = vmatmul.mubr.f32.gmra.mxu0 %v736
  %v894 = vpop.f32.mrf.mxu0
  %v895 = vadd.f32 0.0, %v894
  %v896 = vpop.f32.mrf.mxu0
  %v897 = vadd.f32 0.0, %v896
  %898 = vmatprep.mubr.f32.mxu0 0.0
  %899 = vmatmul.mubr.f32.gmra.mxu0 %v739
  %v900 = vpop.f32.mrf.mxu0
  %v901 = vadd.f32 0.0, %v900
  %v902 = vpop.f32.mrf.mxu0
  %v903 = vadd.f32 0.0, %v902
  %904 = vmatprep.mubr.f32.mxu0 0.0
  %905 = vmatmul.mubr.f32.gmra.mxu0 %v742
  %v906 = vpop.f32.mrf.mxu0
  %v907 = vadd.f32 0.0, %v906
  %v908 = vpop.f32.mrf.mxu0
  %v909 = vadd.f32 0.0, %v908
  %910 = vmatprep.mubr.f32.mxu0 0.0
  %911 = vmatmul.mubr.f32.gmra.mxu0 %v745
  %v912 = vpop.f32.mrf.mxu0
  %v913 = vadd.f32 0.0, %v912
  %v914 = vpop.f32.mrf.mxu0
  %v915 = vadd.f32 0.0, %v914
  %916 = vmatprep.mubr.f32.mxu0 0.0
  %917 = vmatmul.mubr.f32.gmra.mxu0 %v748
  %v918 = vpop.f32.mrf.mxu0
  %v919 = vadd.f32 0.0, %v918
  %v920 = vpop.f32.mrf.mxu0
  %v921 = vadd.f32 0.0, %v920
  %922 = vmatprep.mubr.f32.mxu0 0.0
  %923 = vmatmul.mubr.f32.gmra.mxu0 %v751
  %v924 = vpop.f32.mrf.mxu0
  %v925 = vadd.f32 0.0, %v924
  %v926 = vpop.f32.mrf.mxu0
  %v927 = vadd.f32 0.0, %v926
  %928 = vmatprep.mubr.f32.mxu0 0.0
  %929 = vmatmul.mubr.f32.gmra.mxu0 %v754
  %v930 = vpop.f32.mrf.mxu0
  %v931 = vadd.f32 0.0, %v930
  %v932 = vpop.f32.mrf.mxu0
  %v933 = vadd.f32 0.0, %v932
  %934 = vmatprep.mubr.f32.mxu0 0.0
  %935 = vmatmul.mubr.f32.gmra.mxu0 %v757
  %v936 = vpop.f32.mrf.mxu0
  %v937 = vadd.f32 0.0, %v936
  %v938 = vpop.f32.mrf.mxu0
  %v939 = vadd.f32 0.0, %v938
  %940 = vmatprep.mubr.f32.mxu0 0.0
  %941 = vmatmul.mubr.f32.gmra.mxu0 %v760
  %v942 = vpop.f32.mrf.mxu0
  %v943 = vadd.f32 0.0, %v942
  %v944 = vpop.f32.mrf.mxu0
  %v945 = vadd.f32 0.0, %v944
  %946 = vmatprep.mubr.f32.mxu0 0.0
  %947 = vmatmul.mubr.f32.gmra.mxu0 %v763
  %v948 = vpop.f32.mrf.mxu0
  %v949 = vadd.f32 0.0, %v948
  %v950 = vpop.f32.mrf.mxu0
  %v951 = vadd.f32 0.0, %v950
  %952 = vmatprep.mubr.f32.mxu0 0.0
  %953 = vmatmul.mubr.f32.gmra.mxu0 %v766
  %v954 = vpop.f32.mrf.mxu0
  %v955 = vadd.f32 0.0, %v954
  %v956 = vpop.f32.mrf.mxu0
  %v957 = vadd.f32 0.0, %v956
  %958 = vmatprep.mubr.f32.mxu0 0.0
  %959 = vmatmul.mubr.f32.gmra.mxu0 %v769
  %v960 = vpop.f32.mrf.mxu0
  %v961 = vadd.f32 0.0, %v960
  %v962 = vpop.f32.mrf.mxu0
  %v963 = vadd.f32 0.0, %v962
  %964 = vmatprep.mubr.f32.mxu0 0.0
  %965 = vmatmul.mubr.f32.gmra.mxu0 %v772
  %v966 = vpop.f32.mrf.mxu0
  %v967 = vadd.f32 0.0, %v966
  %v968 = vpop.f32.mrf.mxu0
  %v969 = vadd.f32 0.0, %v968
  %970 = vmatprep.mubr.f32.mxu0 0.0
  %971 = vmatmul.mubr.f32.gmra.mxu0 %v775
  %v972 = vpop.f32.mrf.mxu0
  %v973 = vadd.f32 0.0, %v972
  %v974 = vpop.f32.mrf.mxu0
  %v975 = vadd.f32 0.0, %v974
  %976 = vmatprep.mubr.f32.mxu0 0.0
  %977 = vmatmul.mubr.f32.gmra.mxu0 %v778
  %v978 = vpop.f32.mrf.mxu0
  %v979 = vadd.f32 0.0, %v978
  %v980 = vpop.f32.mrf.mxu0
  %v981 = vadd.f32 0.0, %v980
  %982 = vmatprep.mubr.f32.mxu0 0.0
  %983 = vmatmul.mubr.f32.gmra.mxu0 %v781
  %v984 = vpop.f32.mrf.mxu0
  %v985 = vadd.f32 0.0, %v984
  %v986 = vpop.f32.mrf.mxu0
  %v987 = vadd.f32 0.0, %v986
  %988 = vmatprep.mubr.f32.mxu0 0.0
  %989 = vmatmul.mubr.f32.gmra.mxu0 %v784
  %v990 = vpop.f32.mrf.mxu0
  %v991 = vadd.f32 0.0, %v990
  %v992 = vpop.f32.mrf.mxu0
  %v993 = vadd.f32 0.0, %v992
  %994 = vmatprep.mubr.f32.mxu0 0.0
  %995 = vmatmul.mubr.f32.gmra.mxu0 %v787
  %v996 = vpop.f32.mrf.mxu0
  %v997 = vadd.f32 0.0, %v996
  %v998 = vpop.f32.mrf.mxu0
  %v999 = vadd.f32 0.0, %v998
  %1000 = vmatprep.mubr.f32.mxu0 0.0
  %1001 = vmatmul.mubr.f32.gmra.mxu0 %v790
  %v1002 = vpop.f32.mrf.mxu0
  %v1003 = vadd.f32 0.0, %v1002
  %v1004 = vpop.f32.mrf.mxu0
  %v1005 = vadd.f32 0.0, %v1004
  %1006 = vdwg.mxu0
  %v1007 = vadd.f32 %v544, %v865
  %v1008 = vadd.f32 %v546, %v867
  %v1009 = vadd.f32 %v550, %v871
  %v1010 = vadd.f32 %v552, %v873
  %v1011 = vadd.f32 %v556, %v877
  %v1012 = vadd.f32 %v558, %v879
  %v1013 = vadd.f32 %v562, %v883
  %v1014 = vadd.f32 %v564, %v885
  %v1015 = vadd.f32 %v568, %v889
  %v1016 = vadd.f32 %v570, %v891
  %v1017 = vadd.f32 %v574, %v895
  %v1018 = vadd.f32 %v576, %v897
  %v1019 = vadd.f32 %v580, %v901
  %v1020 = vadd.f32 %v582, %v903
  %v1021 = vadd.f32 %v586, %v907
  %v1022 = vadd.f32 %v588, %v909
  %v1023 = vadd.f32 %v592, %v913
  %v1024 = vadd.f32 %v594, %v915
  %v1025 = vadd.f32 %v598, %v919
  %v1026 = vadd.f32 %v600, %v921
  %v1027 = vadd.f32 %v604, %v925
  %v1028 = vadd.f32 %v606, %v927
  %v1029 = vadd.f32 %v610, %v931
  %v1030 = vadd.f32 %v612, %v933
  %v1031 = vadd.f32 %v616, %v937
  %v1032 = vadd.f32 %v618, %v939
  %v1033 = vadd.f32 %v622, %v943
  %v1034 = vadd.f32 %v624, %v945
  %v1035 = vadd.f32 %v628, %v949
  %v1036 = vadd.f32 %v630, %v951
  %v1037 = vadd.f32 %v634, %v955
  %v1038 = vadd.f32 %v636, %v957
  %v1039 = vadd.f32 %v640, %v961
  %v1040 = vadd.f32 %v642, %v963
  %v1041 = vadd.f32 %v646, %v967
  %v1042 = vadd.f32 %v648, %v969
  %v1043 = vadd.f32 %v652, %v973
  %v1044 = vadd.f32 %v654, %v975
  %v1045 = vadd.f32 %v658, %v979
  %v1046 = vadd.f32 %v660, %v981
  %v1047 = vadd.f32 %v664, %v985
  %v1048 = vadd.f32 %v666, %v987
  %v1049 = vadd.f32 %v670, %v991
  %v1050 = vadd.f32 %v672, %v993
  %v1051 = vadd.f32 %v676, %v997
  %v1052 = vadd.f32 %v678, %v999
  %v1053 = vadd.f32 %v682, %v1003
  %v1054 = vadd.f32 %v684, %v1005
  %s1055 = scalar_lea.vmem %s0, 24
  %v1056 = vld [vmem:[%s1055] sm:$0xff]
  %v1057 = vld [vmem:[%s1055 + $0x8] sm:$0xff]
  %v1058 = vld [vmem:[%s1055 + $0x10] sm:$0xff]
  %v1059 = vld [vmem:[%s1055 + $0x18] sm:$0xff]
  %v1060 = vld [vmem:[%s1055 + $0x20] sm:$0xff]
  %v1061 = vld [vmem:[%s1055 + $0x28] sm:$0xff]
  %v1062 = vld [vmem:[%s1055 + $0x30] sm:$0xff]
  %v1063 = vld [vmem:[%s1055 + $0x38] sm:$0xff]
  %v1064 = vld [vmem:[%s1055 + $0x40] sm:$0xff]
  %v1065 = vld [vmem:[%s1055 + $0x48] sm:$0xff]
  %v1066 = vld [vmem:[%s1055 + $0x50] sm:$0xff]
  %v1067 = vld [vmem:[%s1055 + $0x58] sm:$0xff]
  %v1068 = vld [vmem:[%s1055 + $0x60] sm:$0xff]
  %v1069 = vld [vmem:[%s1055 + $0x68] sm:$0xff]
  %v1070 = vld [vmem:[%s1055 + $0x70] sm:$0xff]
  %v1071 = vld [vmem:[%s1055 + $0x78] sm:$0xff]
  %v1072 = vld [vmem:[%s1055 + $0x80] sm:$0xff]
  %v1073 = vld [vmem:[%s1055 + $0x88] sm:$0xff]
  %v1074 = vld [vmem:[%s1055 + $0x90] sm:$0xff]
  %v1075 = vld [vmem:[%s1055 + $0x98] sm:$0xff]
  %v1076 = vld [vmem:[%s1055 + $0xa0] sm:$0xff]
  %v1077 = vld [vmem:[%s1055 + $0xa8] sm:$0xff]
  %v1078 = vld [vmem:[%s1055 + $0xb0] sm:$0xff]
  %v1079 = vld [vmem:[%s1055 + $0xb8] sm:$0xff]
  %s1080 = scalar_lea.vmem %s1, 192
  %v1081 = vld [vmem:[%s1080] sm:$0xff]
  %v1082 = vld [vmem:[%s1080 + $0x8] sm:$0xff]
  %v1083 = vld [vmem:[%s1080 + $0x10] sm:$0xff]
  %v1084 = vld [vmem:[%s1080 + $0x18] sm:$0xff]
  %v1085 = vld [vmem:[%s1080 + $0x20] sm:$0xff]
  %v1086 = vld [vmem:[%s1080 + $0x28] sm:$0xff]
  %v1087 = vld [vmem:[%s1080 + $0x30] sm:$0xf]
  %v1088 = vld [vmem:[%s1080 + $0x38] sm:$0xf]
  %v1090 = vsel %vm110, %v1056, 0
  %v1093 = vsel %vm110, %v1057, 0
  %v1096 = vsel %vm110, %v1058, 0
  %v1099 = vsel %vm110, %v1059, 0
  %v1102 = vsel %vm110, %v1060, 0
  %v1105 = vsel %vm110, %v1061, 0
  %v1108 = vsel %vm110, %v1062, 0
  %v1111 = vsel %vm110, %v1063, 0
  %v1114 = vsel %vm110, %v1064, 0
  %v1117 = vsel %vm110, %v1065, 0
  %v1120 = vsel %vm110, %v1066, 0
  %v1123 = vsel %vm110, %v1067, 0
  %v1126 = vsel %vm110, %v1068, 0
  %v1129 = vsel %vm110, %v1069, 0
  %v1132 = vsel %vm110, %v1070, 0
  %v1135 = vsel %vm110, %v1071, 0
  %v1138 = vsel %vm110, %v1072, 0
  %v1141 = vsel %vm110, %v1073, 0
  %v1144 = vsel %vm110, %v1074, 0
  %v1147 = vsel %vm110, %v1075, 0
  %v1150 = vsel %vm110, %v1076, 0
  %v1153 = vsel %vm110, %v1077, 0
  %v1156 = vsel %vm110, %v1078, 0
  %v1159 = vsel %vm110, %v1079, 0
  %v1162 = vsel %vm183, %v1087, 0
  %v1165 = vsel %vm183, %v1088, 0
  %1167 = vmatprep.subr.mxu0 0.0
  %1168 = vmatpush1.msra.mxu0 0.0
  %1169 = vmatprep.subr.mxu0 0.0
  %1170 = vmatpush1.msra.mxu0 0.0
  %1171 = vmatprep.subr.mxu0 0.0
  %1172 = vmatpush1.msra.mxu0 0.0
  %1173 = vmatprep.subr.mxu0 0.0
  %1174 = vmatpush1.msra.mxu0 0.0
  %1175 = vmatprep.subr.mxu0 0.0
  %1176 = vmatpush1.msra.mxu0 0.0
  %1177 = vmatprep.subr.mxu0 0.0
  %1178 = vmatpush1.msra.mxu0 0.0
  %1179 = vmatprep.subr.mxu0 0.0
  %1180 = vmatpush1.msra.mxu0 0.0
  %1181 = vmatprep.subr.mxu0 0.0
  %1182 = vmatpush1.msra.mxu0 0.0
  %1183 = vmatprep.subr.mxu0 0.0
  %1184 = vmatpush1.msra.mxu0 0.0
  %1185 = vmatprep.subr.mxu0 0.0
  %1186 = vmatpush1.msra.mxu0 0.0
  %1187 = vmatprep.subr.mxu0 0.0
  %1188 = vmatpush1.msra.mxu0 0.0
  %1189 = vmatprep.subr.mxu0 0.0
  %1190 = vmatpush1.msra.mxu0 0.0
  %1191 = vmatprep.subr.mxu0 %v1165
  %1192 = vmatpush1.msra.mxu0 %v1162
  %1193 = vmatprep.subr.mxu0 %v1086
  %1194 = vmatpush1.msra.mxu0 %v1085
  %1195 = vmatprep.subr.mxu0 %v1084
  %1196 = vmatpush1.msra.mxu0 %v1083
  %1197 = vmatprep.subr.mxu0 %v1082
  %1198 = vmatpush1.msra.mxu0 %v1081
  %1199 = vmatprep.subr.mxu0 0.0
  %1200 = vmatpush2.msra.mxu0 0.0
  %1201 = vmatprep.subr.mxu0 0.0
  %1202 = vmatpush2.msra.mxu0 0.0
  %1203 = vmatprep.subr.mxu0 0.0
  %1204 = vmatpush2.msra.mxu0 0.0
  %1205 = vmatprep.subr.mxu0 0.0
  %1206 = vmatpush2.msra.mxu0 0.0
  %1207 = vmatprep.subr.mxu0 0.0
  %1208 = vmatpush2.msra.mxu0 0.0
  %1209 = vmatprep.subr.mxu0 0.0
  %1210 = vmatpush2.msra.mxu0 0.0
  %1211 = vmatprep.subr.mxu0 0.0
  %1212 = vmatpush2.msra.mxu0 0.0
  %1213 = vmatprep.subr.mxu0 0.0
  %1214 = vmatpush2.msra.mxu0 0.0
  %1215 = vmatprep.subr.mxu0 0.0
  %1216 = vmatpush2.msra.mxu0 0.0
  %1217 = vmatprep.subr.mxu0 0.0
  %1218 = vmatpush2.msra.mxu0 0.0
  %1219 = vmatprep.subr.mxu0 0.0
  %1220 = vmatpush2.msra.mxu0 0.0
  %1221 = vmatprep.subr.mxu0 0.0
  %1222 = vmatpush2.msra.mxu0 0.0
  %1223 = vmatprep.subr.mxu0 0.0
  %1224 = vmatpush2.msra.mxu0 0.0
  %1225 = vmatprep.subr.mxu0 0.0
  %1226 = vmatpush2.msra.mxu0 0.0
  %1227 = vmatprep.subr.mxu0 0.0
  %1228 = vmatpush2.msra.mxu0 0.0
  %1229 = vmatprep.subr.mxu0 0.0
  %1230 = vmatpush2.msra.mxu0 0.0
  %1231 = vmatprep.mubr.f32.mxu0 0.0
  %1232 = vmatmul.mubr.f32.gmra.mxu0 %v1090
  %v1233 = vpop.f32.mrf.mxu0
  %v1234 = vadd.f32 0.0, %v1233
  %v1235 = vpop.f32.mrf.mxu0
  %v1236 = vadd.f32 0.0, %v1235
  %1237 = vmatprep.mubr.f32.mxu0 0.0
  %1238 = vmatmul.mubr.f32.gmra.mxu0 %v1093
  %v1239 = vpop.f32.mrf.mxu0
  %v1240 = vadd.f32 0.0, %v1239
  %v1241 = vpop.f32.mrf.mxu0
  %v1242 = vadd.f32 0.0, %v1241
  %1243 = vmatprep.mubr.f32.mxu0 0.0
  %1244 = vmatmul.mubr.f32.gmra.mxu0 %v1096
  %v1245 = vpop.f32.mrf.mxu0
  %v1246 = vadd.f32 0.0, %v1245
  %v1247 = vpop.f32.mrf.mxu0
  %v1248 = vadd.f32 0.0, %v1247
  %1249 = vmatprep.mubr.f32.mxu0 0.0
  %1250 = vmatmul.mubr.f32.gmra.mxu0 %v1099
  %v1251 = vpop.f32.mrf.mxu0
  %v1252 = vadd.f32 0.0, %v1251
  %v1253 = vpop.f32.mrf.mxu0
  %v1254 = vadd.f32 0.0, %v1253
  %1255 = vmatprep.mubr.f32.mxu0 0.0
  %1256 = vmatmul.mubr.f32.gmra.mxu0 %v1102
  %v1257 = vpop.f32.mrf.mxu0
  %v1258 = vadd.f32 0.0, %v1257
  %v1259 = vpop.f32.mrf.mxu0
  %v1260 = vadd.f32 0.0, %v1259
  %1261 = vmatprep.mubr.f32.mxu0 0.0
  %1262 = vmatmul.mubr.f32.gmra.mxu0 %v1105
  %v1263 = vpop.f32.mrf.mxu0
  %v1264 = vadd.f32 0.0, %v1263
  %v1265 = vpop.f32.mrf.mxu0
  %v1266 = vadd.f32 0.0, %v1265
  %1267 = vmatprep.mubr.f32.mxu0 0.0
  %1268 = vmatmul.mubr.f32.gmra.mxu0 %v1108
  %v1269 = vpop.f32.mrf.mxu0
  %v1270 = vadd.f32 0.0, %v1269
  %v1271 = vpop.f32.mrf.mxu0
  %v1272 = vadd.f32 0.0, %v1271
  %1273 = vmatprep.mubr.f32.mxu0 0.0
  %1274 = vmatmul.mubr.f32.gmra.mxu0 %v1111
  %v1275 = vpop.f32.mrf.mxu0
  %v1276 = vadd.f32 0.0, %v1275
  %v1277 = vpop.f32.mrf.mxu0
  %v1278 = vadd.f32 0.0, %v1277
  %1279 = vmatprep.mubr.f32.mxu0 0.0
  %1280 = vmatmul.mubr.f32.gmra.mxu0 %v1114
  %v1281 = vpop.f32.mrf.mxu0
  %v1282 = vadd.f32 0.0, %v1281
  %v1283 = vpop.f32.mrf.mxu0
  %v1284 = vadd.f32 0.0, %v1283
  %1285 = vmatprep.mubr.f32.mxu0 0.0
  %1286 = vmatmul.mubr.f32.gmra.mxu0 %v1117
  %v1287 = vpop.f32.mrf.mxu0
  %v1288 = vadd.f32 0.0, %v1287
  %v1289 = vpop.f32.mrf.mxu0
  %v1290 = vadd.f32 0.0, %v1289
  %1291 = vmatprep.mubr.f32.mxu0 0.0
  %1292 = vmatmul.mubr.f32.gmra.mxu0 %v1120
  %v1293 = vpop.f32.mrf.mxu0
  %v1294 = vadd.f32 0.0, %v1293
  %v1295 = vpop.f32.mrf.mxu0
  %v1296 = vadd.f32 0.0, %v1295
  %1297 = vmatprep.mubr.f32.mxu0 0.0
  %1298 = vmatmul.mubr.f32.gmra.mxu0 %v1123
  %v1299 = vpop.f32.mrf.mxu0
  %v1300 = vadd.f32 0.0, %v1299
  %v1301 = vpop.f32.mrf.mxu0
  %v1302 = vadd.f32 0.0, %v1301
  %1303 = vmatprep.mubr.f32.mxu0 0.0
  %1304 = vmatmul.mubr.f32.gmra.mxu0 %v1126
  %v1305 = vpop.f32.mrf.mxu0
  %v1306 = vadd.f32 0.0, %v1305
  %v1307 = vpop.f32.mrf.mxu0
  %v1308 = vadd.f32 0.0, %v1307
  %1309 = vmatprep.mubr.f32.mxu0 0.0
  %1310 = vmatmul.mubr.f32.gmra.mxu0 %v1129
  %v1311 = vpop.f32.mrf.mxu0
  %v1312 = vadd.f32 0.0, %v1311
  %v1313 = vpop.f32.mrf.mxu0
  %v1314 = vadd.f32 0.0, %v1313
  %1315 = vmatprep.mubr.f32.mxu0 0.0
  %1316 = vmatmul.mubr.f32.gmra.mxu0 %v1132
  %v1317 = vpop.f32.mrf.mxu0
  %v1318 = vadd.f32 0.0, %v1317
  %v1319 = vpop.f32.mrf.mxu0
  %v1320 = vadd.f32 0.0, %v1319
  %1321 = vmatprep.mubr.f32.mxu0 0.0
  %1322 = vmatmul.mubr.f32.gmra.mxu0 %v1135
  %v1323 = vpop.f32.mrf.mxu0
  %v1324 = vadd.f32 0.0, %v1323
  %v1325 = vpop.f32.mrf.mxu0
  %v1326 = vadd.f32 0.0, %v1325
  %1327 = vmatprep.mubr.f32.mxu0 0.0
  %1328 = vmatmul.mubr.f32.gmra.mxu0 %v1138
  %v1329 = vpop.f32.mrf.mxu0
  %v1330 = vadd.f32 0.0, %v1329
  %v1331 = vpop.f32.mrf.mxu0
  %v1332 = vadd.f32 0.0, %v1331
  %1333 = vmatprep.mubr.f32.mxu0 0.0
  %1334 = vmatmul.mubr.f32.gmra.mxu0 %v1141
  %v1335 = vpop.f32.mrf.mxu0
  %v1336 = vadd.f32 0.0, %v1335
  %v1337 = vpop.f32.mrf.mxu0
  %v1338 = vadd.f32 0.0, %v1337
  %1339 = vmatprep.mubr.f32.mxu0 0.0
  %1340 = vmatmul.mubr.f32.gmra.mxu0 %v1144
  %v1341 = vpop.f32.mrf.mxu0
  %v1342 = vadd.f32 0.0, %v1341
  %v1343 = vpop.f32.mrf.mxu0
  %v1344 = vadd.f32 0.0, %v1343
  %1345 = vmatprep.mubr.f32.mxu0 0.0
  %1346 = vmatmul.mubr.f32.gmra.mxu0 %v1147
  %v1347 = vpop.f32.mrf.mxu0
  %v1348 = vadd.f32 0.0, %v1347
  %v1349 = vpop.f32.mrf.mxu0
  %v1350 = vadd.f32 0.0, %v1349
  %1351 = vmatprep.mubr.f32.mxu0 0.0
  %1352 = vmatmul.mubr.f32.gmra.mxu0 %v1150
  %v1353 = vpop.f32.mrf.mxu0
  %v1354 = vadd.f32 0.0, %v1353
  %v1355 = vpop.f32.mrf.mxu0
  %v1356 = vadd.f32 0.0, %v1355
  %1357 = vmatprep.mubr.f32.mxu0 0.0
  %1358 = vmatmul.mubr.f32.gmra.mxu0 %v1153
  %v1359 = vpop.f32.mrf.mxu0
  %v1360 = vadd.f32 0.0, %v1359
  %v1361 = vpop.f32.mrf.mxu0
  %v1362 = vadd.f32 0.0, %v1361
  %1363 = vmatprep.mubr.f32.mxu0 0.0
  %1364 = vmatmul.mubr.f32.gmra.mxu0 %v1156
  %v1365 = vpop.f32.mrf.mxu0
  %v1366 = vadd.f32 0.0, %v1365
  %v1367 = vpop.f32.mrf.mxu0
  %v1368 = vadd.f32 0.0, %v1367
  %1369 = vmatprep.mubr.f32.mxu0 0.0
  %1370 = vmatmul.mubr.f32.gmra.mxu0 %v1159
  %v1371 = vpop.f32.mrf.mxu0
  %v1372 = vadd.f32 0.0, %v1371
  %v1373 = vpop.f32.mrf.mxu0
  %v1374 = vadd.f32 0.0, %v1373
  %1375 = vdwg.mxu0
  %v1376 = vadd.f32 %v1007, %v1234
  %v1377 = vadd.f32 %v1008, %v1236
  %v1378 = vadd.f32 %v1009, %v1240
  %v1379 = vadd.f32 %v1010, %v1242
  %v1380 = vadd.f32 %v1011, %v1246
  %v1381 = vadd.f32 %v1012, %v1248
  %v1382 = vadd.f32 %v1013, %v1252
  %v1383 = vadd.f32 %v1014, %v1254
  %v1384 = vadd.f32 %v1015, %v1258
  %v1385 = vadd.f32 %v1016, %v1260
  %v1386 = vadd.f32 %v1017, %v1264
  %v1387 = vadd.f32 %v1018, %v1266
  %v1388 = vadd.f32 %v1019, %v1270
  %v1389 = vadd.f32 %v1020, %v1272
  %v1390 = vadd.f32 %v1021, %v1276
  %v1391 = vadd.f32 %v1022, %v1278
  %v1392 = vadd.f32 %v1023, %v1282
  %v1393 = vadd.f32 %v1024, %v1284
  %v1394 = vadd.f32 %v1025, %v1288
  %v1395 = vadd.f32 %v1026, %v1290
  %v1396 = vadd.f32 %v1027, %v1294
  %v1397 = vadd.f32 %v1028, %v1296
  %v1398 = vadd.f32 %v1029, %v1300
  %v1399 = vadd.f32 %v1030, %v1302
  %v1400 = vadd.f32 %v1031, %v1306
  %v1401 = vadd.f32 %v1032, %v1308
  %v1402 = vadd.f32 %v1033, %v1312
  %v1403 = vadd.f32 %v1034, %v1314
  %v1404 = vadd.f32 %v1035, %v1318
  %v1405 = vadd.f32 %v1036, %v1320
  %v1406 = vadd.f32 %v1037, %v1324
  %v1407 = vadd.f32 %v1038, %v1326
  %v1408 = vadd.f32 %v1039, %v1330
  %v1409 = vadd.f32 %v1040, %v1332
  %v1410 = vadd.f32 %v1041, %v1336
  %v1411 = vadd.f32 %v1042, %v1338
  %v1412 = vadd.f32 %v1043, %v1342
  %v1413 = vadd.f32 %v1044, %v1344
  %v1414 = vadd.f32 %v1045, %v1348
  %v1415 = vadd.f32 %v1046, %v1350
  %v1416 = vadd.f32 %v1047, %v1354
  %v1417 = vadd.f32 %v1048, %v1356
  %v1418 = vadd.f32 %v1049, %v1360
  %v1419 = vadd.f32 %v1050, %v1362
  %v1420 = vadd.f32 %v1051, %v1366
  %v1421 = vadd.f32 %v1052, %v1368
  %v1422 = vadd.f32 %v1053, %v1372
  %v1423 = vadd.f32 %v1054, %v1374
  %s1424 = scalar_lea.vmem %s0, 32
  %v1425 = vld [vmem:[%s1424] sm:$0xff]
  %v1426 = vld [vmem:[%s1424 + $0x8] sm:$0xff]
  %v1427 = vld [vmem:[%s1424 + $0x10] sm:$0xff]
  %v1428 = vld [vmem:[%s1424 + $0x18] sm:$0xff]
  %v1429 = vld [vmem:[%s1424 + $0x20] sm:$0xff]
  %v1430 = vld [vmem:[%s1424 + $0x28] sm:$0xff]
  %v1431 = vld [vmem:[%s1424 + $0x30] sm:$0xff]
  %v1432 = vld [vmem:[%s1424 + $0x38] sm:$0xff]
  %v1433 = vld [vmem:[%s1424 + $0x40] sm:$0xff]
  %v1434 = vld [vmem:[%s1424 + $0x48] sm:$0xff]
  %v1435 = vld [vmem:[%s1424 + $0x50] sm:$0xff]
  %v1436 = vld [vmem:[%s1424 + $0x58] sm:$0xff]
  %v1437 = vld [vmem:[%s1424 + $0x60] sm:$0xff]
  %v1438 = vld [vmem:[%s1424 + $0x68] sm:$0xff]
  %v1439 = vld [vmem:[%s1424 + $0x70] sm:$0xff]
  %v1440 = vld [vmem:[%s1424 + $0x78] sm:$0xff]
  %v1441 = vld [vmem:[%s1424 + $0x80] sm:$0xff]
  %v1442 = vld [vmem:[%s1424 + $0x88] sm:$0xff]
  %v1443 = vld [vmem:[%s1424 + $0x90] sm:$0xff]
  %v1444 = vld [vmem:[%s1424 + $0x98] sm:$0xff]
  %v1445 = vld [vmem:[%s1424 + $0xa0] sm:$0xff]
  %v1446 = vld [vmem:[%s1424 + $0xa8] sm:$0xff]
  %v1447 = vld [vmem:[%s1424 + $0xb0] sm:$0xff]
  %v1448 = vld [vmem:[%s1424 + $0xb8] sm:$0xff]
  %s1449 = scalar_lea.vmem %s1, 256
  %v1450 = vld [vmem:[%s1449] sm:$0xff]
  %v1451 = vld [vmem:[%s1449 + $0x8] sm:$0xff]
  %v1452 = vld [vmem:[%s1449 + $0x10] sm:$0xff]
  %v1453 = vld [vmem:[%s1449 + $0x18] sm:$0xff]
  %v1454 = vld [vmem:[%s1449 + $0x20] sm:$0xff]
  %v1455 = vld [vmem:[%s1449 + $0x28] sm:$0xff]
  %v1456 = vld [vmem:[%s1449 + $0x30] sm:$0xf]
  %v1457 = vld [vmem:[%s1449 + $0x38] sm:$0xf]
  %v1459 = vsel %vm110, %v1425, 0
  %v1462 = vsel %vm110, %v1426, 0
  %v1465 = vsel %vm110, %v1427, 0
  %v1468 = vsel %vm110, %v1428, 0
  %v1471 = vsel %vm110, %v1429, 0
  %v1474 = vsel %vm110, %v1430, 0
  %v1477 = vsel %vm110, %v1431, 0
  %v1480 = vsel %vm110, %v1432, 0
  %v1483 = vsel %vm110, %v1433, 0
  %v1486 = vsel %vm110, %v1434, 0
  %v1489 = vsel %vm110, %v1435, 0
  %v1492 = vsel %vm110, %v1436, 0
  %v1495 = vsel %vm110, %v1437, 0
  %v1498 = vsel %vm110, %v1438, 0
  %v1501 = vsel %vm110, %v1439, 0
  %v1504 = vsel %vm110, %v1440, 0
  %v1507 = vsel %vm110, %v1441, 0
  %v1510 = vsel %vm110, %v1442, 0
  %v1513 = vsel %vm110, %v1443, 0
  %v1516 = vsel %vm110, %v1444, 0
  %v1519 = vsel %vm110, %v1445, 0
  %v1522 = vsel %vm110, %v1446, 0
  %v1525 = vsel %vm110, %v1447, 0
  %v1528 = vsel %vm110, %v1448, 0
  %v1531 = vsel %vm183, %v1456, 0
  %v1534 = vsel %vm183, %v1457, 0
  %1536 = vmatprep.subr.mxu0 0.0
  %1537 = vmatpush1.msra.mxu0 0.0
  %1538 = vmatprep.subr.mxu0 0.0
  %1539 = vmatpush1.msra.mxu0 0.0
  %1540 = vmatprep.subr.mxu0 0.0
  %1541 = vmatpush1.msra.mxu0 0.0
  %1542 = vmatprep.subr.mxu0 0.0
  %1543 = vmatpush1.msra.mxu0 0.0
  %1544 = vmatprep.subr.mxu0 0.0
  %1545 = vmatpush1.msra.mxu0 0.0
  %1546 = vmatprep.subr.mxu0 0.0
  %1547 = vmatpush1.msra.mxu0 0.0
  %1548 = vmatprep.subr.mxu0 0.0
  %1549 = vmatpush1.msra.mxu0 0.0
  %1550 = vmatprep.subr.mxu0 0.0
  %1551 = vmatpush1.msra.mxu0 0.0
  %1552 = vmatprep.subr.mxu0 0.0
  %1553 = vmatpush1.msra.mxu0 0.0
  %1554 = vmatprep.subr.mxu0 0.0
  %1555 = vmatpush1.msra.mxu0 0.0
  %1556 = vmatprep.subr.mxu0 0.0
  %1557 = vmatpush1.msra.mxu0 0.0
  %1558 = vmatprep.subr.mxu0 0.0
  %1559 = vmatpush1.msra.mxu0 0.0
  %1560 = vmatprep.subr.mxu0 %v1534
  %1561 = vmatpush1.msra.mxu0 %v1531
  %1562 = vmatprep.subr.mxu0 %v1455
  %1563 = vmatpush1.msra.mxu0 %v1454
  %1564 = vmatprep.subr.mxu0 %v1453
  %1565 = vmatpush1.msra.mxu0 %v1452
  %1566 = vmatprep.subr.mxu0 %v1451
  %1567 = vmatpush1.msra.mxu0 %v1450
  %1568 = vmatprep.subr.mxu0 0.0
  %1569 = vmatpush2.msra.mxu0 0.0
  %1570 = vmatprep.subr.mxu0 0.0
  %1571 = vmatpush2.msra.mxu0 0.0
  %1572 = vmatprep.subr.mxu0 0.0
  %1573 = vmatpush2.msra.mxu0 0.0
  %1574 = vmatprep.subr.mxu0 0.0
  %1575 = vmatpush2.msra.mxu0 0.0
  %1576 = vmatprep.subr.mxu0 0.0
  %1577 = vmatpush2.msra.mxu0 0.0
  %1578 = vmatprep.subr.mxu0 0.0
  %1579 = vmatpush2.msra.mxu0 0.0
  %1580 = vmatprep.subr.mxu0 0.0
  %1581 = vmatpush2.msra.mxu0 0.0
  %1582 = vmatprep.subr.mxu0 0.0
  %1583 = vmatpush2.msra.mxu0 0.0
  %1584 = vmatprep.subr.mxu0 0.0
  %1585 = vmatpush2.msra.mxu0 0.0
  %1586 = vmatprep.subr.mxu0 0.0
  %1587 = vmatpush2.msra.mxu0 0.0
  %1588 = vmatprep.subr.mxu0 0.0
  %1589 = vmatpush2.msra.mxu0 0.0
  %1590 = vmatprep.subr.mxu0 0.0
  %1591 = vmatpush2.msra.mxu0 0.0
  %1592 = vmatprep.subr.mxu0 0.0
  %1593 = vmatpush2.msra.mxu0 0.0
  %1594 = vmatprep.subr.mxu0 0.0
  %1595 = vmatpush2.msra.mxu0 0.0
  %1596 = vmatprep.subr.mxu0 0.0
  %1597 = vmatpush2.msra.mxu0 0.0
  %1598 = vmatprep.subr.mxu0 0.0
  %1599 = vmatpush2.msra.mxu0 0.0
  %1600 = vmatprep.mubr.f32.mxu0 0.0
  %1601 = vmatmul.mubr.f32.gmra.mxu0 %v1459
  %v1602 = vpop.f32.mrf.mxu0
  %v1603 = vadd.f32 0.0, %v1602
  %v1604 = vpop.f32.mrf.mxu0
  %v1605 = vadd.f32 0.0, %v1604
  %1606 = vmatprep.mubr.f32.mxu0 0.0
  %1607 = vmatmul.mubr.f32.gmra.mxu0 %v1462
  %v1608 = vpop.f32.mrf.mxu0
  %v1609 = vadd.f32 0.0, %v1608
  %v1610 = vpop.f32.mrf.mxu0
  %v1611 = vadd.f32 0.0, %v1610
  %1612 = vmatprep.mubr.f32.mxu0 0.0
  %1613 = vmatmul.mubr.f32.gmra.mxu0 %v1465
  %v1614 = vpop.f32.mrf.mxu0
  %v1615 = vadd.f32 0.0, %v1614
  %v1616 = vpop.f32.mrf.mxu0
  %v1617 = vadd.f32 0.0, %v1616
  %1618 = vmatprep.mubr.f32.mxu0 0.0
  %1619 = vmatmul.mubr.f32.gmra.mxu0 %v1468
  %v1620 = vpop.f32.mrf.mxu0
  %v1621 = vadd.f32 0.0, %v1620
  %v1622 = vpop.f32.mrf.mxu0
  %v1623 = vadd.f32 0.0, %v1622
  %1624 = vmatprep.mubr.f32.mxu0 0.0
  %1625 = vmatmul.mubr.f32.gmra.mxu0 %v1471
  %v1626 = vpop.f32.mrf.mxu0
  %v1627 = vadd.f32 0.0, %v1626
  %v1628 = vpop.f32.mrf.mxu0
  %v1629 = vadd.f32 0.0, %v1628
  %1630 = vmatprep.mubr.f32.mxu0 0.0
  %1631 = vmatmul.mubr.f32.gmra.mxu0 %v1474
  %v1632 = vpop.f32.mrf.mxu0
  %v1633 = vadd.f32 0.0, %v1632
  %v1634 = vpop.f32.mrf.mxu0
  %v1635 = vadd.f32 0.0, %v1634
  %1636 = vmatprep.mubr.f32.mxu0 0.0
  %1637 = vmatmul.mubr.f32.gmra.mxu0 %v1477
  %v1638 = vpop.f32.mrf.mxu0
  %v1639 = vadd.f32 0.0, %v1638
  %v1640 = vpop.f32.mrf.mxu0
  %v1641 = vadd.f32 0.0, %v1640
  %1642 = vmatprep.mubr.f32.mxu0 0.0
  %1643 = vmatmul.mubr.f32.gmra.mxu0 %v1480
  %v1644 = vpop.f32.mrf.mxu0
  %v1645 = vadd.f32 0.0, %v1644
  %v1646 = vpop.f32.mrf.mxu0
  %v1647 = vadd.f32 0.0, %v1646
  %1648 = vmatprep.mubr.f32.mxu0 0.0
  %1649 = vmatmul.mubr.f32.gmra.mxu0 %v1483
  %v1650 = vpop.f32.mrf.mxu0
  %v1651 = vadd.f32 0.0, %v1650
  %v1652 = vpop.f32.mrf.mxu0
  %v1653 = vadd.f32 0.0, %v1652
  %1654 = vmatprep.mubr.f32.mxu0 0.0
  %1655 = vmatmul.mubr.f32.gmra.mxu0 %v1486
  %v1656 = vpop.f32.mrf.mxu0
  %v1657 = vadd.f32 0.0, %v1656
  %v1658 = vpop.f32.mrf.mxu0
  %v1659 = vadd.f32 0.0, %v1658
  %1660 = vmatprep.mubr.f32.mxu0 0.0
  %1661 = vmatmul.mubr.f32.gmra.mxu0 %v1489
  %v1662 = vpop.f32.mrf.mxu0
  %v1663 = vadd.f32 0.0, %v1662
  %v1664 = vpop.f32.mrf.mxu0
  %v1665 = vadd.f32 0.0, %v1664
  %1666 = vmatprep.mubr.f32.mxu0 0.0
  %1667 = vmatmul.mubr.f32.gmra.mxu0 %v1492
  %v1668 = vpop.f32.mrf.mxu0
  %v1669 = vadd.f32 0.0, %v1668
  %v1670 = vpop.f32.mrf.mxu0
  %v1671 = vadd.f32 0.0, %v1670
  %1672 = vmatprep.mubr.f32.mxu0 0.0
  %1673 = vmatmul.mubr.f32.gmra.mxu0 %v1495
  %v1674 = vpop.f32.mrf.mxu0
  %v1675 = vadd.f32 0.0, %v1674
  %v1676 = vpop.f32.mrf.mxu0
  %v1677 = vadd.f32 0.0, %v1676
  %1678 = vmatprep.mubr.f32.mxu0 0.0
  %1679 = vmatmul.mubr.f32.gmra.mxu0 %v1498
  %v1680 = vpop.f32.mrf.mxu0
  %v1681 = vadd.f32 0.0, %v1680
  %v1682 = vpop.f32.mrf.mxu0
  %v1683 = vadd.f32 0.0, %v1682
  %1684 = vmatprep.mubr.f32.mxu0 0.0
  %1685 = vmatmul.mubr.f32.gmra.mxu0 %v1501
  %v1686 = vpop.f32.mrf.mxu0
  %v1687 = vadd.f32 0.0, %v1686
  %v1688 = vpop.f32.mrf.mxu0
  %v1689 = vadd.f32 0.0, %v1688
  %1690 = vmatprep.mubr.f32.mxu0 0.0
  %1691 = vmatmul.mubr.f32.gmra.mxu0 %v1504
  %v1692 = vpop.f32.mrf.mxu0
  %v1693 = vadd.f32 0.0, %v1692
  %v1694 = vpop.f32.mrf.mxu0
  %v1695 = vadd.f32 0.0, %v1694
  %1696 = vmatprep.mubr.f32.mxu0 0.0
  %1697 = vmatmul.mubr.f32.gmra.mxu0 %v1507
  %v1698 = vpop.f32.mrf.mxu0
  %v1699 = vadd.f32 0.0, %v1698
  %v1700 = vpop.f32.mrf.mxu0
  %v1701 = vadd.f32 0.0, %v1700
  %1702 = vmatprep.mubr.f32.mxu0 0.0
  %1703 = vmatmul.mubr.f32.gmra.mxu0 %v1510
  %v1704 = vpop.f32.mrf.mxu0
  %v1705 = vadd.f32 0.0, %v1704
  %v1706 = vpop.f32.mrf.mxu0
  %v1707 = vadd.f32 0.0, %v1706
  %1708 = vmatprep.mubr.f32.mxu0 0.0
  %1709 = vmatmul.mubr.f32.gmra.mxu0 %v1513
  %v1710 = vpop.f32.mrf.mxu0
  %v1711 = vadd.f32 0.0, %v1710
  %v1712 = vpop.f32.mrf.mxu0
  %v1713 = vadd.f32 0.0, %v1712
  %1714 = vmatprep.mubr.f32.mxu0 0.0
  %1715 = vmatmul.mubr.f32.gmra.mxu0 %v1516
  %v1716 = vpop.f32.mrf.mxu0
  %v1717 = vadd.f32 0.0, %v1716
  %v1718 = vpop.f32.mrf.mxu0
  %v1719 = vadd.f32 0.0, %v1718
  %1720 = vmatprep.mubr.f32.mxu0 0.0
  %1721 = vmatmul.mubr.f32.gmra.mxu0 %v1519
  %v1722 = vpop.f32.mrf.mxu0
  %v1723 = vadd.f32 0.0, %v1722
  %v1724 = vpop.f32.mrf.mxu0
  %v1725 = vadd.f32 0.0, %v1724
  %1726 = vmatprep.mubr.f32.mxu0 0.0
  %1727 = vmatmul.mubr.f32.gmra.mxu0 %v1522
  %v1728 = vpop.f32.mrf.mxu0
  %v1729 = vadd.f32 0.0, %v1728
  %v1730 = vpop.f32.mrf.mxu0
  %v1731 = vadd.f32 0.0, %v1730
  %1732 = vmatprep.mubr.f32.mxu0 0.0
  %1733 = vmatmul.mubr.f32.gmra.mxu0 %v1525
  %v1734 = vpop.f32.mrf.mxu0
  %v1735 = vadd.f32 0.0, %v1734
  %v1736 = vpop.f32.mrf.mxu0
  %v1737 = vadd.f32 0.0, %v1736
  %1738 = vmatprep.mubr.f32.mxu0 0.0
  %1739 = vmatmul.mubr.f32.gmra.mxu0 %v1528
  %v1740 = vpop.f32.mrf.mxu0
  %v1741 = vadd.f32 0.0, %v1740
  %v1742 = vpop.f32.mrf.mxu0
  %v1743 = vadd.f32 0.0, %v1742
  %1744 = vdwg.mxu0
  %v1745 = vadd.f32 %v1376, %v1603
  %v1746 = vadd.f32 %v1377, %v1605
  %v1747 = vadd.f32 %v1378, %v1609
  %v1748 = vadd.f32 %v1379, %v1611
  %v1749 = vadd.f32 %v1380, %v1615
  %v1750 = vadd.f32 %v1381, %v1617
  %v1751 = vadd.f32 %v1382, %v1621
  %v1752 = vadd.f32 %v1383, %v1623
  %v1753 = vadd.f32 %v1384, %v1627
  %v1754 = vadd.f32 %v1385, %v1629
  %v1755 = vadd.f32 %v1386, %v1633
  %v1756 = vadd.f32 %v1387, %v1635
  %v1757 = vadd.f32 %v1388, %v1639
  %v1758 = vadd.f32 %v1389, %v1641
  %v1759 = vadd.f32 %v1390, %v1645
  %v1760 = vadd.f32 %v1391, %v1647
  %v1761 = vadd.f32 %v1392, %v1651
  %v1762 = vadd.f32 %v1393, %v1653
  %v1763 = vadd.f32 %v1394, %v1657
  %v1764 = vadd.f32 %v1395, %v1659
  %v1765 = vadd.f32 %v1396, %v1663
  %v1766 = vadd.f32 %v1397, %v1665
  %v1767 = vadd.f32 %v1398, %v1669
  %v1768 = vadd.f32 %v1399, %v1671
  %v1769 = vadd.f32 %v1400, %v1675
  %v1770 = vadd.f32 %v1401, %v1677
  %v1771 = vadd.f32 %v1402, %v1681
  %v1772 = vadd.f32 %v1403, %v1683
  %v1773 = vadd.f32 %v1404, %v1687
  %v1774 = vadd.f32 %v1405, %v1689
  %v1775 = vadd.f32 %v1406, %v1693
  %v1776 = vadd.f32 %v1407, %v1695
  %v1777 = vadd.f32 %v1408, %v1699
  %v1778 = vadd.f32 %v1409, %v1701
  %v1779 = vadd.f32 %v1410, %v1705
  %v1780 = vadd.f32 %v1411, %v1707
  %v1781 = vadd.f32 %v1412, %v1711
  %v1782 = vadd.f32 %v1413, %v1713
  %v1783 = vadd.f32 %v1414, %v1717
  %v1784 = vadd.f32 %v1415, %v1719
  %v1785 = vadd.f32 %v1416, %v1723
  %v1786 = vadd.f32 %v1417, %v1725
  %v1787 = vadd.f32 %v1418, %v1729
  %v1788 = vadd.f32 %v1419, %v1731
  %v1789 = vadd.f32 %v1420, %v1735
  %v1790 = vadd.f32 %v1421, %v1737
  %v1791 = vadd.f32 %v1422, %v1741
  %v1792 = vadd.f32 %v1423, %v1743
  %v1793 = vld [vmem:[%s2] sm:$0x3]
  %v1795 = vlaneseq
  %v1796 = vshrl.u32 %v1795, 7
  %v1797 = vsub.s32 0, %v1796
  %v1798 = vrot.slane %v1793, %v1797
  %v1799 = vlaneseq
  %v1800 = vshrl.u32 %v1799, 7
  %v1801 = vsub.s32 1, %v1800
  %v1802 = vrot.slane %v1793, %v1801
  %v1805 = vadd.f32 %v1745, %v1798
  %v1806 = vadd.f32 %v1746, %v1802
  %v1807 = vadd.f32 %v1747, %v1798
  %v1808 = vadd.f32 %v1748, %v1802
  %v1809 = vadd.f32 %v1749, %v1798
  %v1810 = vadd.f32 %v1750, %v1802
  %v1811 = vadd.f32 %v1751, %v1798
  %v1812 = vadd.f32 %v1752, %v1802
  %v1813 = vadd.f32 %v1753, %v1798
  %v1814 = vadd.f32 %v1754, %v1802
  %v1815 = vadd.f32 %v1755, %v1798
  %v1816 = vadd.f32 %v1756, %v1802
  %v1817 = vadd.f32 %v1757, %v1798
  %v1818 = vadd.f32 %v1758, %v1802
  %v1819 = vadd.f32 %v1759, %v1798
  %v1820 = vadd.f32 %v1760, %v1802
  %v1821 = vadd.f32 %v1761, %v1798
  %v1822 = vadd.f32 %v1762, %v1802
  %v1823 = vadd.f32 %v1763, %v1798
  %v1824 = vadd.f32 %v1764, %v1802
  %v1825 = vadd.f32 %v1765, %v1798
  %v1826 = vadd.f32 %v1766, %v1802
  %v1827 = vadd.f32 %v1767, %v1798
  %v1828 = vadd.f32 %v1768, %v1802
  %v1829 = vadd.f32 %v1769, %v1798
  %v1830 = vadd.f32 %v1770, %v1802
  %v1831 = vadd.f32 %v1771, %v1798
  %v1832 = vadd.f32 %v1772, %v1802
  %v1833 = vadd.f32 %v1773, %v1798
  %v1834 = vadd.f32 %v1774, %v1802
  %v1835 = vadd.f32 %v1775, %v1798
  %v1836 = vadd.f32 %v1776, %v1802
  %v1837 = vadd.f32 %v1777, %v1798
  %v1838 = vadd.f32 %v1778, %v1802
  %v1839 = vadd.f32 %v1779, %v1798
  %v1840 = vadd.f32 %v1780, %v1802
  %v1841 = vadd.f32 %v1781, %v1798
  %v1842 = vadd.f32 %v1782, %v1802
  %v1843 = vadd.f32 %v1783, %v1798
  %v1844 = vadd.f32 %v1784, %v1802
  %v1845 = vadd.f32 %v1785, %v1798
  %v1846 = vadd.f32 %v1786, %v1802
  %v1847 = vadd.f32 %v1787, %v1798
  %v1848 = vadd.f32 %v1788, %v1802
  %v1849 = vadd.f32 %v1789, %v1798
  %v1850 = vadd.f32 %v1790, %v1802
  %v1851 = vadd.f32 %v1791, %v1798
  %v1852 = vadd.f32 %v1792, %v1802
  %1853 = vst [vmem:[#allocation2] sm:$0xff] %v1805
  %vm1854 = vcmask 916480
  %1855 = vst.msk [vmem:[#allocation2 + $0x8] sm:$0xff] %vm1854, %v1806
  %1856 = vst [vmem:[#allocation2 + $0x10] sm:$0xff] %v1807
  %1857 = vst.msk [vmem:[#allocation2 + $0x18] sm:$0xff] %vm1854, %v1808
  %1858 = vst [vmem:[#allocation2 + $0x20] sm:$0xff] %v1809
  %1859 = vst.msk [vmem:[#allocation2 + $0x28] sm:$0xff] %vm1854, %v1810
  %1860 = vst [vmem:[#allocation2 + $0x30] sm:$0xff] %v1811
  %1861 = vst.msk [vmem:[#allocation2 + $0x38] sm:$0xff] %vm1854, %v1812
  %1862 = vst [vmem:[#allocation2 + $0x40] sm:$0xff] %v1813
  %1863 = vst.msk [vmem:[#allocation2 + $0x48] sm:$0xff] %vm1854, %v1814
  %1864 = vst [vmem:[#allocation2 + $0x50] sm:$0xff] %v1815
  %1865 = vst.msk [vmem:[#allocation2 + $0x58] sm:$0xff] %vm1854, %v1816
  %1866 = vst [vmem:[#allocation2 + $0x60] sm:$0xff] %v1817
  %1867 = vst.msk [vmem:[#allocation2 + $0x68] sm:$0xff] %vm1854, %v1818
  %1868 = vst [vmem:[#allocation2 + $0x70] sm:$0xff] %v1819
  %1869 = vst.msk [vmem:[#allocation2 + $0x78] sm:$0xff] %vm1854, %v1820
  %1870 = vst [vmem:[#allocation2 + $0x80] sm:$0xff] %v1821
  %1871 = vst.msk [vmem:[#allocation2 + $0x88] sm:$0xff] %vm1854, %v1822
  %1872 = vst [vmem:[#allocation2 + $0x90] sm:$0xff] %v1823
  %1873 = vst.msk [vmem:[#allocation2 + $0x98] sm:$0xff] %vm1854, %v1824
  %1874 = vst [vmem:[#allocation2 + $0xa0] sm:$0xff] %v1825
  %1875 = vst.msk [vmem:[#allocation2 + $0xa8] sm:$0xff] %vm1854, %v1826
  %1876 = vst [vmem:[#allocation2 + $0xb0] sm:$0xff] %v1827
  %1877 = vst.msk [vmem:[#allocation2 + $0xb8] sm:$0xff] %vm1854, %v1828
  %1878 = vst [vmem:[#allocation2 + $0xc0] sm:$0xff] %v1829
  %1879 = vst.msk [vmem:[#allocation2 + $0xc8] sm:$0xff] %vm1854, %v1830
  %1880 = vst [vmem:[#allocation2 + $0xd0] sm:$0xff] %v1831
  %1881 = vst.msk [vmem:[#allocation2 + $0xd8] sm:$0xff] %vm1854, %v1832
  %1882 = vst [vmem:[#allocation2 + $0xe0] sm:$0xff] %v1833
  %1883 = vst.msk [vmem:[#allocation2 + $0xe8] sm:$0xff] %vm1854, %v1834
  %1884 = vst [vmem:[#allocation2 + $0xf0] sm:$0xff] %v1835
  %1885 = vst.msk [vmem:[#allocation2 + $0xf8] sm:$0xff] %vm1854, %v1836
  %1886 = vst [vmem:[#allocation2 + $0x100] sm:$0xff] %v1837
  %1887 = vst.msk [vmem:[#allocation2 + $0x108] sm:$0xff] %vm1854, %v1838
  %1888 = vst [vmem:[#allocation2 + $0x110] sm:$0xff] %v1839
  %1889 = vst.msk [vmem:[#allocation2 + $0x118] sm:$0xff] %vm1854, %v1840
  %1890 = vst [vmem:[#allocation2 + $0x120] sm:$0xff] %v1841
  %1891 = vst.msk [vmem:[#allocation2 + $0x128] sm:$0xff] %vm1854, %v1842
  %1892 = vst [vmem:[#allocation2 + $0x130] sm:$0xff] %v1843
  %1893 = vst.msk [vmem:[#allocation2 + $0x138] sm:$0xff] %vm1854, %v1844
  %1894 = vst [vmem:[#allocation2 + $0x140] sm:$0xff] %v1845
  %1895 = vst.msk [vmem:[#allocation2 + $0x148] sm:$0xff] %vm1854, %v1846
  %1896 = vst [vmem:[#allocation2 + $0x150] sm:$0xff] %v1847
  %1897 = vst.msk [vmem:[#allocation2 + $0x158] sm:$0xff] %vm1854, %v1848
  %1898 = vst [vmem:[#allocation2 + $0x160] sm:$0xff] %v1849
  %1899 = vst.msk [vmem:[#allocation2 + $0x168] sm:$0xff] %vm1854, %v1850
  %1900 = vst [vmem:[#allocation2 + $0x170] sm:$0xff] %v1851
  %1901 = vst.msk [vmem:[#allocation2 + $0x178] sm:$0xff] %vm1854, %v1852
  %v1902 = vld [vmem:[#allocation2] sm:$0xff]
  %v1903 = vld [vmem:[#allocation2 + $0x8] sm:$0xff]
  %v1904 = vld [vmem:[#allocation2 + $0x20] sm:$0xff]
  %v1905 = vld [vmem:[#allocation2 + $0x28] sm:$0xff]
  %v1906 = vld [vmem:[#allocation2 + $0x40] sm:$0xff]
  %v1907 = vld [vmem:[#allocation2 + $0x48] sm:$0xff]
  %v1908 = vld [vmem:[#allocation2 + $0x60] sm:$0xff]
  %v1909 = vld [vmem:[#allocation2 + $0x68] sm:$0xff]
  %v1910 = vld [vmem:[#allocation2 + $0x80] sm:$0xff]
  %v1911 = vld [vmem:[#allocation2 + $0x88] sm:$0xff]
  %v1912 = vld [vmem:[#allocation2 + $0xa0] sm:$0xff]
  %v1913 = vld [vmem:[#allocation2 + $0xa8] sm:$0xff]
  %v1914 = vld [vmem:[#allocation2 + $0xc0] sm:$0xff]
  %v1915 = vld [vmem:[#allocation2 + $0xc8] sm:$0xff]
  %v1916 = vld [vmem:[#allocation2 + $0xe0] sm:$0xff]
  %v1917 = vld [vmem:[#allocation2 + $0xe8] sm:$0xff]
  %v1918 = vld [vmem:[#allocation2 + $0x100] sm:$0xff]
  %v1919 = vld [vmem:[#allocation2 + $0x108] sm:$0xff]
  %v1920 = vld [vmem:[#allocation2 + $0x120] sm:$0xff]
  %v1921 = vld [vmem:[#allocation2 + $0x128] sm:$0xff]
  %v1922 = vld [vmem:[#allocation2 + $0x140] sm:$0xff]
  %v1923 = vld [vmem:[#allocation2 + $0x148] sm:$0xff]
  %v1924 = vld [vmem:[#allocation2 + $0x160] sm:$0xff]
  %v1925 = vld [vmem:[#allocation2 + $0x168] sm:$0xff]
  %s1926 = scalar_lea.vmem [#allocation2], 16
  %v1927 = vld [vmem:[%s1926] sm:$0xff]
  %v1928 = vld [vmem:[%s1926 + $0x8] sm:$0xff]
  %v1929 = vld [vmem:[%s1926 + $0x20] sm:$0xff]
  %v1930 = vld [vmem:[%s1926 + $0x28] sm:$0xff]
  %v1931 = vld [vmem:[%s1926 + $0x40] sm:$0xff]
  %v1932 = vld [vmem:[%s1926 + $0x48] sm:$0xff]
  %v1933 = vld [vmem:[%s1926 + $0x60] sm:$0xff]
  %v1934 = vld [vmem:[%s1926 + $0x68] sm:$0xff]
  %v1935 = vld [vmem:[%s1926 + $0x80] sm:$0xff]
  %v1936 = vld [vmem:[%s1926 + $0x88] sm:$0xff]
  %v1937 = vld [vmem:[%s1926 + $0xa0] sm:$0xff]
  %v1938 = vld [vmem:[%s1926 + $0xa8] sm:$0xff]
  %v1939 = vld [vmem:[%s1926 + $0xc0] sm:$0xff]
  %v1940 = vld [vmem:[%s1926 + $0xc8] sm:$0xff]
  %v1941 = vld [vmem:[%s1926 + $0xe0] sm:$0xff]
  %v1942 = vld [vmem:[%s1926 + $0xe8] sm:$0xff]
  %v1943 = vld [vmem:[%s1926 + $0x100] sm:$0xff]
  %v1944 = vld [vmem:[%s1926 + $0x108] sm:$0xff]
  %v1945 = vld [vmem:[%s1926 + $0x120] sm:$0xff]
  %v1946 = vld [vmem:[%s1926 + $0x128] sm:$0xff]
  %v1947 = vld [vmem:[%s1926 + $0x140] sm:$0xff]
  %v1948 = vld [vmem:[%s1926 + $0x148] sm:$0xff]
  %v1949 = vld [vmem:[%s1926 + $0x160] sm:$0xff]
  %v1950 = vld [vmem:[%s1926 + $0x168] sm:$0xff]
  %v1951 = vmax.f32 %v1902, %v1927
  %v1952 = vmax.f32 %v1903, %v1928
  %v1953 = vmax.f32 %v1904, %v1929
  %v1954 = vmax.f32 %v1905, %v1930
  %v1955 = vmax.f32 %v1906, %v1931
  %v1956 = vmax.f32 %v1907, %v1932
  %v1957 = vmax.f32 %v1908, %v1933
  %v1958 = vmax.f32 %v1909, %v1934
  %v1959 = vmax.f32 %v1910, %v1935
  %v1960 = vmax.f32 %v1911, %v1936
  %v1961 = vmax.f32 %v1912, %v1937
  %v1962 = vmax.f32 %v1913, %v1938
  %v1963 = vmax.f32 %v1914, %v1939
  %v1964 = vmax.f32 %v1915, %v1940
  %v1965 = vmax.f32 %v1916, %v1941
  %v1966 = vmax.f32 %v1917, %v1942
  %v1967 = vmax.f32 %v1918, %v1943
  %v1968 = vmax.f32 %v1919, %v1944
  %v1969 = vmax.f32 %v1920, %v1945
  %v1970 = vmax.f32 %v1921, %v1946
  %v1971 = vmax.f32 %v1922, %v1947
  %v1972 = vmax.f32 %v1923, %v1948
  %v1973 = vmax.f32 %v1924, %v1949
  %v1974 = vmax.f32 %v1925, %v1950
  %v1975 = vld [vmem:[%s5] sm:$0xff]
  %v1976 = vld [vmem:[%s5 + $0x8] sm:$0xff]
  %v1977 = vld [vmem:[%s5 + $0x10] sm:$0xff]
  %v1978 = vld [vmem:[%s5 + $0x18] sm:$0xff]
  %v1979 = vld [vmem:[%s5 + $0x20] sm:$0xff]
  %v1980 = vld [vmem:[%s5 + $0x28] sm:$0xff]
  %v1981 = vld [vmem:[%s5 + $0x30] sm:$0xff]
  %v1982 = vld [vmem:[%s5 + $0x38] sm:$0xff]
  %v1983 = vld [vmem:[%s5 + $0x40] sm:$0xff]
  %v1984 = vld [vmem:[%s5 + $0x48] sm:$0xff]
  %v1985 = vld [vmem:[%s5 + $0x50] sm:$0xff]
  %v1986 = vld [vmem:[%s5 + $0x58] sm:$0xff]
  %v1987 = vld [vmem:[%s5 + $0x60] sm:$0xff]
  %v1988 = vld [vmem:[%s5 + $0x68] sm:$0xff]
  %v1989 = vld [vmem:[%s5 + $0x70] sm:$0xff]
  %v1990 = vld [vmem:[%s5 + $0x78] sm:$0xff]
  %v1991 = vld [vmem:[%s5 + $0x80] sm:$0xff]
  %v1992 = vld [vmem:[%s5 + $0x88] sm:$0xff]
  %v1993 = vld [vmem:[%s5 + $0x90] sm:$0xff]
  %v1994 = vld [vmem:[%s5 + $0x98] sm:$0xff]
  %v1995 = vld [vmem:[%s5 + $0xa0] sm:$0xff]
  %v1996 = vld [vmem:[%s5 + $0xa8] sm:$0xff]
  %v1997 = vld [vmem:[%s5 + $0xb0] sm:$0xff]
  %v1998 = vld [vmem:[%s5 + $0xb8] sm:$0xff]
  %v1999 = vld [vmem:[%s5 + $0xc0] sm:$0xff]
  %v2000 = vld [vmem:[%s5 + $0xc8] sm:$0xff]
  %v2001 = vld [vmem:[%s5 + $0xd0] sm:$0xff]
  %v2002 = vld [vmem:[%s5 + $0xd8] sm:$0xff]
  %v2003 = vld [vmem:[%s5 + $0xe0] sm:$0xff]
  %v2004 = vld [vmem:[%s5 + $0xe8] sm:$0xff]
  %v2006 = vsel %vm1854, %v1952, 0
  %v2009 = vsel %vm1854, %v1954, 0
  %v2012 = vsel %vm1854, %v1956, 0
  %v2015 = vsel %vm1854, %v1958, 0
  %v2018 = vsel %vm1854, %v1960, 0
  %v2021 = vsel %vm1854, %v1962, 0
  %v2024 = vsel %vm1854, %v1964, 0
  %v2027 = vsel %vm1854, %v1966, 0
  %v2030 = vsel %vm1854, %v1968, 0
  %v2033 = vsel %vm1854, %v1970, 0
  %v2036 = vsel %vm1854, %v1972, 0
  %v2039 = vsel %vm1854, %v1974, 0
  %2041 = vmatprep.subr.mxu0 0.0
  %2042 = vmatpush1.msra.mxu0 %v1990
  %2043 = vmatprep.subr.mxu0 0.0
  %2044 = vmatpush1.msra.mxu0 %v1989
  %2045 = vmatprep.subr.mxu0 0.0
  %2046 = vmatpush1.msra.mxu0 %v1988
  %2047 = vmatprep.subr.mxu0 0.0
  %2048 = vmatpush1.msra.mxu0 %v1987
  %2049 = vmatprep.subr.mxu0 0.0
  %2050 = vmatpush1.msra.mxu0 %v1986
  %2051 = vmatprep.subr.mxu0 0.0
  %2052 = vmatpush1.msra.mxu0 %v1985
  %2053 = vmatprep.subr.mxu0 0.0
  %2054 = vmatpush1.msra.mxu0 %v1984
  %2055 = vmatprep.subr.mxu0 0.0
  %2056 = vmatpush1.msra.mxu0 %v1983
  %2057 = vmatprep.subr.mxu0 0.0
  %2058 = vmatpush1.msra.mxu0 %v1982
  %2059 = vmatprep.subr.mxu0 0.0
  %2060 = vmatpush1.msra.mxu0 %v1981
  %2061 = vmatprep.subr.mxu0 0.0
  %2062 = vmatpush1.msra.mxu0 %v1980
  %2063 = vmatprep.subr.mxu0 0.0
  %2064 = vmatpush1.msra.mxu0 %v1979
  %2065 = vmatprep.subr.mxu0 0.0
  %2066 = vmatpush1.msra.mxu0 %v1978
  %2067 = vmatprep.subr.mxu0 0.0
  %2068 = vmatpush1.msra.mxu0 %v1977
  %2069 = vmatprep.subr.mxu0 0.0
  %2070 = vmatpush1.msra.mxu0 %v1976
  %2071 = vmatprep.subr.mxu0 0.0
  %2072 = vmatpush1.msra.mxu0 %v1975
  %2073 = vmatprep.subr.mxu0 0.0
  %2074 = vmatpush2.msra.mxu0 0.0
  %2075 = vmatprep.subr.mxu0 0.0
  %2076 = vmatpush2.msra.mxu0 0.0
  %2077 = vmatprep.subr.mxu0 0.0
  %2078 = vmatpush2.msra.mxu0 %v2004
  %2079 = vmatprep.subr.mxu0 0.0
  %2080 = vmatpush2.msra.mxu0 %v2003
  %2081 = vmatprep.subr.mxu0 0.0
  %2082 = vmatpush2.msra.mxu0 %v2002
  %2083 = vmatprep.subr.mxu0 0.0
  %2084 = vmatpush2.msra.mxu0 %v2001
  %2085 = vmatprep.subr.mxu0 0.0
  %2086 = vmatpush2.msra.mxu0 %v2000
  %2087 = vmatprep.subr.mxu0 0.0
  %2088 = vmatpush2.msra.mxu0 %v1999
  %2089 = vmatprep.subr.mxu0 0.0
  %2090 = vmatpush2.msra.mxu0 %v1998
  %2091 = vmatprep.subr.mxu0 0.0
  %2092 = vmatpush2.msra.mxu0 %v1997
  %2093 = vmatprep.subr.mxu0 0.0
  %2094 = vmatpush2.msra.mxu0 %v1996
  %2095 = vmatprep.subr.mxu0 0.0
  %2096 = vmatpush2.msra.mxu0 %v1995
  %2097 = vmatprep.subr.mxu0 0.0
  %2098 = vmatpush2.msra.mxu0 %v1994
  %2099 = vmatprep.subr.mxu0 0.0
  %2100 = vmatpush2.msra.mxu0 %v1993
  %2101 = vmatprep.subr.mxu0 0.0
  %2102 = vmatpush2.msra.mxu0 %v1992
  %2103 = vmatprep.subr.mxu0 0.0
  %2104 = vmatpush2.msra.mxu0 %v1991
  %2105 = vmatprep.mubr.f32.mxu0 %v2006
  %2106 = vmatmul.mubr.f32.gmra.mxu0 %v1951
  %v2107 = vpop.f32.mrf.mxu0
  %v2108 = vadd.f32 0.0, %v2107
  %v2109 = vpop.f32.mrf.mxu0
  %2110 = vmatprep.mubr.f32.mxu0 %v2009
  %2111 = vmatmul.mubr.f32.gmra.mxu0 %v1953
  %v2112 = vpop.f32.mrf.mxu0
  %v2113 = vadd.f32 0.0, %v2112
  %v2114 = vpop.f32.mrf.mxu0
  %2115 = vmatprep.mubr.f32.mxu0 %v2012
  %2116 = vmatmul.mubr.f32.gmra.mxu0 %v1955
  %v2117 = vpop.f32.mrf.mxu0
  %v2118 = vadd.f32 0.0, %v2117
  %v2119 = vpop.f32.mrf.mxu0
  %2120 = vmatprep.mubr.f32.mxu0 %v2015
  %2121 = vmatmul.mubr.f32.gmra.mxu0 %v1957
  %v2122 = vpop.f32.mrf.mxu0
  %v2123 = vadd.f32 0.0, %v2122
  %v2124 = vpop.f32.mrf.mxu0
  %2125 = vmatprep.mubr.f32.mxu0 %v2018
  %2126 = vmatmul.mubr.f32.gmra.mxu0 %v1959
  %v2127 = vpop.f32.mrf.mxu0
  %v2128 = vadd.f32 0.0, %v2127
  %v2129 = vpop.f32.mrf.mxu0
  %2130 = vmatprep.mubr.f32.mxu0 %v2021
  %2131 = vmatmul.mubr.f32.gmra.mxu0 %v1961
  %v2132 = vpop.f32.mrf.mxu0
  %v2133 = vadd.f32 0.0, %v2132
  %v2134 = vpop.f32.mrf.mxu0
  %2135 = vmatprep.mubr.f32.mxu0 %v2024
  %2136 = vmatmul.mubr.f32.gmra.mxu0 %v1963
  %v2137 = vpop.f32.mrf.mxu0
  %v2138 = vadd.f32 0.0, %v2137
  %v2139 = vpop.f32.mrf.mxu0
  %2140 = vmatprep.mubr.f32.mxu0 %v2027
  %2141 = vmatmul.mubr.f32.gmra.mxu0 %v1965
  %v2142 = vpop.f32.mrf.mxu0
  %v2143 = vadd.f32 0.0, %v2142
  %v2144 = vpop.f32.mrf.mxu0
  %2145 = vmatprep.mubr.f32.mxu0 %v2030
  %2146 = vmatmul.mubr.f32.gmra.mxu0 %v1967
  %v2147 = vpop.f32.mrf.mxu0
  %v2148 = vadd.f32 0.0, %v2147
  %v2149 = vpop.f32.mrf.mxu0
  %2150 = vmatprep.mubr.f32.mxu0 %v2033
  %2151 = vmatmul.mubr.f32.gmra.mxu0 %v1969
  %v2152 = vpop.f32.mrf.mxu0
  %v2153 = vadd.f32 0.0, %v2152
  %v2154 = vpop.f32.mrf.mxu0
  %2155 = vmatprep.mubr.f32.mxu0 %v2036
  %2156 = vmatmul.mubr.f32.gmra.mxu0 %v1971
  %v2157 = vpop.f32.mrf.mxu0
  %v2158 = vadd.f32 0.0, %v2157
  %v2159 = vpop.f32.mrf.mxu0
  %2160 = vmatprep.mubr.f32.mxu0 %v2039
  %2161 = vmatmul.mubr.f32.gmra.mxu0 %v1973
  %v2162 = vpop.f32.mrf.mxu0
  %v2163 = vadd.f32 0.0, %v2162
  %v2164 = vpop.f32.mrf.mxu0
  %2165 = vdwg.mxu0
  %v2166 = vld [vmem:[%s6] sm:$0xff]
  %v2167 = vld [vmem:[%s6 + $0x8] sm:$0xff]
  %v2168 = vld [vmem:[%s6 + $0x10] sm:$0xff]
  %v2169 = vld [vmem:[%s6 + $0x18] sm:$0xff]
  %v2170 = vld [vmem:[%s6 + $0x20] sm:$0xff]
  %v2171 = vld [vmem:[%s6 + $0x28] sm:$0xff]
  %v2172 = vld [vmem:[%s6 + $0x30] sm:$0xff]
  %v2173 = vld [vmem:[%s6 + $0x38] sm:$0xff]
  %v2174 = vld [vmem:[%s6 + $0x40] sm:$0xff]
  %v2175 = vld [vmem:[%s6 + $0x48] sm:$0xff]
  %v2176 = vld [vmem:[%s6 + $0x50] sm:$0xff]
  %v2177 = vld [vmem:[%s6 + $0x58] sm:$0xff]
  %v2178 = vld [vmem:[%s6 + $0x60] sm:$0xff]
  %v2179 = vld [vmem:[%s6 + $0x68] sm:$0xff]
  %v2180 = vld [vmem:[%s6 + $0x70] sm:$0xff]
  %v2181 = vld [vmem:[%s6 + $0x78] sm:$0xff]
  %v2182 = vld [vmem:[%s6 + $0x80] sm:$0xff]
  %v2183 = vld [vmem:[%s6 + $0x88] sm:$0xff]
  %v2184 = vld [vmem:[%s6 + $0x90] sm:$0xff]
  %v2185 = vld [vmem:[%s6 + $0x98] sm:$0xff]
  %v2186 = vld [vmem:[%s6 + $0xa0] sm:$0xff]
  %v2187 = vld [vmem:[%s6 + $0xa8] sm:$0xff]
  %v2188 = vld [vmem:[%s6 + $0xb0] sm:$0xff]
  %v2189 = vld [vmem:[%s6 + $0xb8] sm:$0xff]
  %v2190 = vld [vmem:[%s6 + $0xc0] sm:$0xff]
  %v2191 = vld [vmem:[%s6 + $0xc8] sm:$0xff]
  %v2192 = vld [vmem:[%s6 + $0xd0] sm:$0xff]
  %v2193 = vld [vmem:[%s6 + $0xd8] sm:$0xff]
  %v2194 = vld [vmem:[%s6 + $0xe0] sm:$0xff]
  %v2195 = vld [vmem:[%s6 + $0xe8] sm:$0xff]
  %2196 = vmatprep.subr.mxu0 0.0
  %2197 = vmatpush1.msra.mxu0 %v2181
  %2198 = vmatprep.subr.mxu0 0.0
  %2199 = vmatpush1.msra.mxu0 %v2180
  %2200 = vmatprep.subr.mxu0 0.0
  %2201 = vmatpush1.msra.mxu0 %v2179
  %2202 = vmatprep.subr.mxu0 0.0
  %2203 = vmatpush1.msra.mxu0 %v2178
  %2204 = vmatprep.subr.mxu0 0.0
  %2205 = vmatpush1.msra.mxu0 %v2177
  %2206 = vmatprep.subr.mxu0 0.0
  %2207 = vmatpush1.msra.mxu0 %v2176
  %2208 = vmatprep.subr.mxu0 0.0
  %2209 = vmatpush1.msra.mxu0 %v2175
  %2210 = vmatprep.subr.mxu0 0.0
  %2211 = vmatpush1.msra.mxu0 %v2174
  %2212 = vmatprep.subr.mxu0 0.0
  %2213 = vmatpush1.msra.mxu0 %v2173
  %2214 = vmatprep.subr.mxu0 0.0
  %2215 = vmatpush1.msra.mxu0 %v2172
  %2216 = vmatprep.subr.mxu0 0.0
  %2217 = vmatpush1.msra.mxu0 %v2171
  %2218 = vmatprep.subr.mxu0 0.0
  %2219 = vmatpush1.msra.mxu0 %v2170
  %2220 = vmatprep.subr.mxu0 0.0
  %2221 = vmatpush1.msra.mxu0 %v2169
  %2222 = vmatprep.subr.mxu0 0.0
  %2223 = vmatpush1.msra.mxu0 %v2168
  %2224 = vmatprep.subr.mxu0 0.0
  %2225 = vmatpush1.msra.mxu0 %v2167
  %2226 = vmatprep.subr.mxu0 0.0
  %2227 = vmatpush1.msra.mxu0 %v2166
  %2228 = vmatprep.subr.mxu0 0.0
  %2229 = vmatpush2.msra.mxu0 0.0
  %2230 = vmatprep.subr.mxu0 0.0
  %2231 = vmatpush2.msra.mxu0 0.0
  %2232 = vmatprep.subr.mxu0 0.0
  %2233 = vmatpush2.msra.mxu0 %v2195
  %2234 = vmatprep.subr.mxu0 0.0
  %2235 = vmatpush2.msra.mxu0 %v2194
  %2236 = vmatprep.subr.mxu0 0.0
  %2237 = vmatpush2.msra.mxu0 %v2193
  %2238 = vmatprep.subr.mxu0 0.0
  %2239 = vmatpush2.msra.mxu0 %v2192
  %2240 = vmatprep.subr.mxu0 0.0
  %2241 = vmatpush2.msra.mxu0 %v2191
  %2242 = vmatprep.subr.mxu0 0.0
  %2243 = vmatpush2.msra.mxu0 %v2190
  %2244 = vmatprep.subr.mxu0 0.0
  %2245 = vmatpush2.msra.mxu0 %v2189
  %2246 = vmatprep.subr.mxu0 0.0
  %2247 = vmatpush2.msra.mxu0 %v2188
  %2248 = vmatprep.subr.mxu0 0.0
  %2249 = vmatpush2.msra.mxu0 %v2187
  %2250 = vmatprep.subr.mxu0 0.0
  %2251 = vmatpush2.msra.mxu0 %v2186
  %2252 = vmatprep.subr.mxu0 0.0
  %2253 = vmatpush2.msra.mxu0 %v2185
  %2254 = vmatprep.subr.mxu0 0.0
  %2255 = vmatpush2.msra.mxu0 %v2184
  %2256 = vmatprep.subr.mxu0 0.0
  %2257 = vmatpush2.msra.mxu0 %v2183
  %2258 = vmatprep.subr.mxu0 0.0
  %2259 = vmatpush2.msra.mxu0 %v2182
  %2260 = vmatprep.mubr.f32.mxu0 %v2006
  %2261 = vmatmul.mubr.f32.gmra.mxu0 %v1951
  %v2262 = vpop.f32.mrf.mxu0
  %v2263 = vadd.f32 0.0, %v2262
  %v2264 = vpop.f32.mrf.mxu0
  %2265 = vmatprep.mubr.f32.mxu0 %v2009
  %2266 = vmatmul.mubr.f32.gmra.mxu0 %v1953
  %v2267 = vpop.f32.mrf.mxu0
  %v2268 = vadd.f32 0.0, %v2267
  %v2269 = vpop.f32.mrf.mxu0
  %2270 = vmatprep.mubr.f32.mxu0 %v2012
  %2271 = vmatmul.mubr.f32.gmra.mxu0 %v1955
  %v2272 = vpop.f32.mrf.mxu0
  %v2273 = vadd.f32 0.0, %v2272
  %v2274 = vpop.f32.mrf.mxu0
  %2275 = vmatprep.mubr.f32.mxu0 %v2015
  %2276 = vmatmul.mubr.f32.gmra.mxu0 %v1957
  %v2277 = vpop.f32.mrf.mxu0
  %v2278 = vadd.f32 0.0, %v2277
  %v2279 = vpop.f32.mrf.mxu0
  %2280 = vmatprep.mubr.f32.mxu0 %v2018
  %2281 = vmatmul.mubr.f32.gmra.mxu0 %v1959
  %v2282 = vpop.f32.mrf.mxu0
  %v2283 = vadd.f32 0.0, %v2282
  %v2284 = vpop.f32.mrf.mxu0
  %2285 = vmatprep.mubr.f32.mxu0 %v2021
  %2286 = vmatmul.mubr.f32.gmra.mxu0 %v1961
  %v2287 = vpop.f32.mrf.mxu0
  %v2288 = vadd.f32 0.0, %v2287
  %v2289 = vpop.f32.mrf.mxu0
  %2290 = vmatprep.mubr.f32.mxu0 %v2024
  %2291 = vmatmul.mubr.f32.gmra.mxu0 %v1963
  %v2292 = vpop.f32.mrf.mxu0
  %v2293 = vadd.f32 0.0, %v2292
  %v2294 = vpop.f32.mrf.mxu0
  %2295 = vmatprep.mubr.f32.mxu0 %v2027
  %2296 = vmatmul.mubr.f32.gmra.mxu0 %v1965
  %v2297 = vpop.f32.mrf.mxu0
  %v2298 = vadd.f32 0.0, %v2297
  %v2299 = vpop.f32.mrf.mxu0
  %2300 = vmatprep.mubr.f32.mxu0 %v2030
  %2301 = vmatmul.mubr.f32.gmra.mxu0 %v1967
  %v2302 = vpop.f32.mrf.mxu0
  %v2303 = vadd.f32 0.0, %v2302
  %v2304 = vpop.f32.mrf.mxu0
  %2305 = vmatprep.mubr.f32.mxu0 %v2033
  %2306 = vmatmul.mubr.f32.gmra.mxu0 %v1969
  %v2307 = vpop.f32.mrf.mxu0
  %v2308 = vadd.f32 0.0, %v2307
  %v2309 = vpop.f32.mrf.mxu0
  %2310 = vmatprep.mubr.f32.mxu0 %v2036
  %2311 = vmatmul.mubr.f32.gmra.mxu0 %v1971
  %v2312 = vpop.f32.mrf.mxu0
  %v2313 = vadd.f32 0.0, %v2312
  %v2314 = vpop.f32.mrf.mxu0
  %2315 = vmatprep.mubr.f32.mxu0 %v2039
  %2316 = vmatmul.mubr.f32.gmra.mxu0 %v1973
  %v2317 = vpop.f32.mrf.mxu0
  %v2318 = vadd.f32 0.0, %v2317
  %v2319 = vpop.f32.mrf.mxu0
  %2320 = vdwg.mxu0
  %v2321 = vmax.f32 %v2108, %v2263
  %v2322 = vmax.f32 %v2113, %v2268
  %v2323 = vmax.f32 %v2118, %v2273
  %v2324 = vmax.f32 %v2123, %v2278
  %v2325 = vmax.f32 %v2128, %v2283
  %v2326 = vmax.f32 %v2133, %v2288
  %v2327 = vmax.f32 %v2138, %v2293
  %v2328 = vmax.f32 %v2143, %v2298
  %v2329 = vmax.f32 %v2148, %v2303
  %v2330 = vmax.f32 %v2153, %v2308
  %v2331 = vmax.f32 %v2158, %v2313
  %v2332 = vmax.f32 %v2163, %v2318
  %v2333 = vmax.f32 %v2321, 0.0
  %v2334 = vmax.f32 %v2322, 0.0
  %v2335 = vmax.f32 %v2323, 0.0
  %v2336 = vmax.f32 %v2324, 0.0
  %v2337 = vmax.f32 %v2325, 0.0
  %v2338 = vmax.f32 %v2326, 0.0
  %v2339 = vmax.f32 %v2327, 0.0
  %v2340 = vmax.f32 %v2328, 0.0
  %v2341 = vmax.f32 %v2329, 0.0
  %v2342 = vmax.f32 %v2330, 0.0
  %v2343 = vmax.f32 %v2331, 0.0
  %v2344 = vmax.f32 %v2332, 0.0
  %vm2345 = vcmask 982016
  %2346 = vst.msk [vmem:[#allocation3] sm:$0xff] %vm2345, %v2333
  %2347 = vst.msk [vmem:[#allocation3 + $0x8] sm:$0xff] %vm2345, %v2334
  %2348 = vst.msk [vmem:[#allocation3 + $0x10] sm:$0xff] %vm2345, %v2335
  %2349 = vst.msk [vmem:[#allocation3 + $0x18] sm:$0xff] %vm2345, %v2336
  %2350 = vst.msk [vmem:[#allocation3 + $0x20] sm:$0xff] %vm2345, %v2337
  %2351 = vst.msk [vmem:[#allocation3 + $0x28] sm:$0xff] %vm2345, %v2338
  %2352 = vst.msk [vmem:[#allocation3 + $0x30] sm:$0xff] %vm2345, %v2339
  %2353 = vst.msk [vmem:[#allocation3 + $0x38] sm:$0xff] %vm2345, %v2340
  %2354 = vst.msk [vmem:[#allocation3 + $0x40] sm:$0xff] %vm2345, %v2341
  %2355 = vst.msk [vmem:[#allocation3 + $0x48] sm:$0xff] %vm2345, %v2342
  %2356 = vst.msk [vmem:[#allocation3 + $0x50] sm:$0xff] %vm2345, %v2343
  %2357 = vst.msk [vmem:[#allocation3 + $0x58] sm:$0xff] %vm2345, %v2344
  %v2358 = vld [vmem:[#allocation3] sm:$0xff]
  %v2359 = vld [vmem:[#allocation3 + $0x8] sm:$0xff]
  %v2360 = vld [vmem:[#allocation3 + $0x10] sm:$0xff]
  %v2361 = vld [vmem:[#allocation3 + $0x18] sm:$0xff]
  %v2362 = vld [vmem:[#allocation3 + $0x20] sm:$0xff]
  %v2363 = vld [vmem:[#allocation3 + $0x28] sm:$0xff]
  %v2364 = vld [vmem:[#allocation3 + $0x30] sm:$0xff]
  %v2365 = vld [vmem:[#allocation3 + $0x38] sm:$0xff]
  %v2366 = vld [vmem:[%s3] sm:$0xff]
  %v2367 = vld [vmem:[%s3 + $0x8] sm:$0xff]
  %v2368 = vld [vmem:[%s3 + $0x10] sm:$0xff]
  %v2369 = vld [vmem:[%s3 + $0x18] sm:$0xff]
  %v2370 = vld [vmem:[%s3 + $0x20] sm:$0xff]
  %v2371 = vld [vmem:[%s3 + $0x28] sm:$0xff]
  %v2372 = vld [vmem:[%s3 + $0x30] sm:$0xff]
  %v2373 = vld [vmem:[%s3 + $0x38] sm:$0xff]
  %v2374 = vld [vmem:[%s3 + $0x40] sm:$0xff]
  %v2375 = vld [vmem:[%s3 + $0x48] sm:$0xff]
  %v2376 = vld [vmem:[%s3 + $0x50] sm:$0xff]
  %v2377 = vld [vmem:[%s3 + $0x58] sm:$0xff]
  %v2378 = vld [vmem:[%s3 + $0x60] sm:$0xff]
  %v2379 = vld [vmem:[%s3 + $0x68] sm:$0xff]
  %v2380 = vld [vmem:[%s3 + $0x70] sm:$0xff]
  %v2381 = vld [vmem:[%s3 + $0x78] sm:$0xff]
  %v2382 = vld [vmem:[%s3 + $0x80] sm:$0xff]
  %v2383 = vld [vmem:[%s3 + $0x88] sm:$0xff]
  %v2384 = vld [vmem:[%s3 + $0x90] sm:$0xff]
  %v2385 = vld [vmem:[%s3 + $0x98] sm:$0xff]
  %v2386 = vld [vmem:[%s3 + $0xa0] sm:$0xff]
  %v2387 = vld [vmem:[%s3 + $0xa8] sm:$0xff]
  %v2388 = vld [vmem:[%s3 + $0xb0] sm:$0xff]
  %v2389 = vld [vmem:[%s3 + $0xb8] sm:$0xff]
  %v2390 = vld [vmem:[%s3 + $0xc0] sm:$0xff]
  %v2391 = vld [vmem:[%s3 + $0xc8] sm:$0xff]
  %v2392 = vld [vmem:[%s3 + $0xd0] sm:$0xff]
  %v2393 = vld [vmem:[%s3 + $0xd8] sm:$0xff]
  %v2394 = vld [vmem:[%s3 + $0xe0] sm:$0xff]
  %v2395 = vld [vmem:[%s3 + $0xe8] sm:$0xff]
  %s2396 = scalar_lea.vmem [#allocation3], 8
  %v2397 = vld [vmem:[%s2396] sm:$0xff]
  %v2398 = vld [vmem:[%s2396 + $0x8] sm:$0xff]
  %v2399 = vld [vmem:[%s2396 + $0x10] sm:$0xff]
  %v2400 = vld [vmem:[%s2396 + $0x18] sm:$0xff]
  %v2401 = vld [vmem:[%s2396 + $0x20] sm:$0xff]
  %v2402 = vld [vmem:[%s2396 + $0x28] sm:$0xff]
  %v2403 = vld [vmem:[%s2396 + $0x30] sm:$0xff]
  %v2404 = vld [vmem:[%s2396 + $0x38] sm:$0xff]
  %s2405 = scalar_lea.vmem %s3, 240
  %v2406 = vld [vmem:[%s2405] sm:$0xff]
  %v2407 = vld [vmem:[%s2405 + $0x8] sm:$0xff]
  %v2408 = vld [vmem:[%s2405 + $0x10] sm:$0xff]
  %v2409 = vld [vmem:[%s2405 + $0x18] sm:$0xff]
  %v2410 = vld [vmem:[%s2405 + $0x20] sm:$0xff]
  %v2411 = vld [vmem:[%s2405 + $0x28] sm:$0xff]
  %v2412 = vld [vmem:[%s2405 + $0x30] sm:$0xff]
  %v2413 = vld [vmem:[%s2405 + $0x38] sm:$0xff]
  %v2414 = vld [vmem:[%s2405 + $0x40] sm:$0xff]
  %v2415 = vld [vmem:[%s2405 + $0x48] sm:$0xff]
  %v2416 = vld [vmem:[%s2405 + $0x50] sm:$0xff]
  %v2417 = vld [vmem:[%s2405 + $0x58] sm:$0xff]
  %v2418 = vld [vmem:[%s2405 + $0x60] sm:$0xff]
  %v2419 = vld [vmem:[%s2405 + $0x68] sm:$0xff]
  %v2420 = vld [vmem:[%s2405 + $0x70] sm:$0xff]
  %v2421 = vld [vmem:[%s2405 + $0x78] sm:$0xff]
  %v2422 = vld [vmem:[%s2405 + $0x80] sm:$0xff]
  %v2423 = vld [vmem:[%s2405 + $0x88] sm:$0xff]
  %v2424 = vld [vmem:[%s2405 + $0x90] sm:$0xff]
  %v2425 = vld [vmem:[%s2405 + $0x98] sm:$0xff]
  %v2426 = vld [vmem:[%s2405 + $0xa0] sm:$0xff]
  %v2427 = vld [vmem:[%s2405 + $0xa8] sm:$0xff]
  %v2428 = vld [vmem:[%s2405 + $0xb0] sm:$0xff]
  %v2429 = vld [vmem:[%s2405 + $0xb8] sm:$0xff]
  %v2430 = vld [vmem:[%s2405 + $0xc0] sm:$0xff]
  %v2431 = vld [vmem:[%s2405 + $0xc8] sm:$0xff]
  %v2432 = vld [vmem:[%s2405 + $0xd0] sm:$0xff]
  %v2433 = vld [vmem:[%s2405 + $0xd8] sm:$0xff]
  %v2434 = vld [vmem:[%s2405 + $0xe0] sm:$0xff]
  %v2435 = vld [vmem:[%s2405 + $0xe8] sm:$0xff]
  %v2437 = vsel %vm2345, %v2397, 0
  %v2440 = vsel %vm2345, %v2398, 0
  %v2443 = vsel %vm2345, %v2399, 0
  %v2446 = vsel %vm2345, %v2400, 0
  %v2449 = vsel %vm2345, %v2401, 0
  %v2452 = vsel %vm2345, %v2402, 0
  %v2455 = vsel %vm2345, %v2403, 0
  %v2458 = vsel %vm2345, %v2404, 0
  %2460 = vmatprep.subr.mxu0 0.0
  %2461 = vmatpush1.msra.mxu0 0.0
  %2462 = vmatprep.subr.mxu0 %v2435
  %2463 = vmatpush1.msra.mxu0 %v2434
  %2464 = vmatprep.subr.mxu0 %v2433
  %2465 = vmatpush1.msra.mxu0 %v2432
  %2466 = vmatprep.subr.mxu0 %v2431
  %2467 = vmatpush1.msra.mxu0 %v2430
  %2468 = vmatprep.subr.mxu0 %v2429
  %2469 = vmatpush1.msra.mxu0 %v2428
  %2470 = vmatprep.subr.mxu0 %v2427
  %2471 = vmatpush1.msra.mxu0 %v2426
  %2472 = vmatprep.subr.mxu0 %v2425
  %2473 = vmatpush1.msra.mxu0 %v2424
  %2474 = vmatprep.subr.mxu0 %v2423
  %2475 = vmatpush1.msra.mxu0 %v2422
  %2476 = vmatprep.subr.mxu0 %v2421
  %2477 = vmatpush1.msra.mxu0 %v2420
  %2478 = vmatprep.subr.mxu0 %v2419
  %2479 = vmatpush1.msra.mxu0 %v2418
  %2480 = vmatprep.subr.mxu0 %v2417
  %2481 = vmatpush1.msra.mxu0 %v2416
  %2482 = vmatprep.subr.mxu0 %v2415
  %2483 = vmatpush1.msra.mxu0 %v2414
  %2484 = vmatprep.subr.mxu0 %v2413
  %2485 = vmatpush1.msra.mxu0 %v2412
  %2486 = vmatprep.subr.mxu0 %v2411
  %2487 = vmatpush1.msra.mxu0 %v2410
  %2488 = vmatprep.subr.mxu0 %v2409
  %2489 = vmatpush1.msra.mxu0 %v2408
  %2490 = vmatprep.subr.mxu0 %v2407
  %2491 = vmatpush1.msra.mxu0 %v2406
  %2492 = vmatprep.subr.mxu0 0.0
  %2493 = vmatpush2.msra.mxu0 0.0
  %2494 = vmatprep.subr.mxu0 0.0
  %2495 = vmatpush2.msra.mxu0 0.0
  %2496 = vmatprep.subr.mxu0 0.0
  %2497 = vmatpush2.msra.mxu0 0.0
  %2498 = vmatprep.subr.mxu0 0.0
  %2499 = vmatpush2.msra.mxu0 0.0
  %2500 = vmatprep.subr.mxu0 0.0
  %2501 = vmatpush2.msra.mxu0 0.0
  %2502 = vmatprep.subr.mxu0 0.0
  %2503 = vmatpush2.msra.mxu0 0.0
  %2504 = vmatprep.subr.mxu0 0.0
  %2505 = vmatpush2.msra.mxu0 0.0
  %2506 = vmatprep.subr.mxu0 0.0
  %2507 = vmatpush2.msra.mxu0 0.0
  %2508 = vmatprep.subr.mxu0 0.0
  %2509 = vmatpush2.msra.mxu0 0.0
  %2510 = vmatprep.subr.mxu0 0.0
  %2511 = vmatpush2.msra.mxu0 0.0
  %2512 = vmatprep.subr.mxu0 0.0
  %2513 = vmatpush2.msra.mxu0 0.0
  %2514 = vmatprep.subr.mxu0 0.0
  %2515 = vmatpush2.msra.mxu0 0.0
  %2516 = vmatprep.subr.mxu0 0.0
  %2517 = vmatpush2.msra.mxu0 0.0
  %2518 = vmatprep.subr.mxu0 0.0
  %2519 = vmatpush2.msra.mxu0 0.0
  %2520 = vmatprep.subr.mxu0 0.0
  %2521 = vmatpush2.msra.mxu0 0.0
  %2522 = vmatprep.subr.mxu0 0.0
  %2523 = vmatpush2.msra.mxu0 0.0
  %2524 = vmatprep.mubr.f32.mxu0 0.0
  %2525 = vmatmul.mubr.f32.gmra.mxu0 %v2437
  %v2526 = vpop.f32.mrf.mxu0
  %v2527 = vadd.f32 0.0, %v2526
  %v2528 = vpop.f32.mrf.mxu0
  %v2529 = vadd.f32 0.0, %v2528
  %2530 = vmatprep.mubr.f32.mxu0 0.0
  %2531 = vmatmul.mubr.f32.gmra.mxu0 %v2440
  %v2532 = vpop.f32.mrf.mxu0
  %v2533 = vadd.f32 0.0, %v2532
  %v2534 = vpop.f32.mrf.mxu0
  %v2535 = vadd.f32 0.0, %v2534
  %2536 = vmatprep.mubr.f32.mxu0 0.0
  %2537 = vmatmul.mubr.f32.gmra.mxu0 %v2443
  %v2538 = vpop.f32.mrf.mxu0
  %v2539 = vadd.f32 0.0, %v2538
  %v2540 = vpop.f32.mrf.mxu0
  %v2541 = vadd.f32 0.0, %v2540
  %2542 = vmatprep.mubr.f32.mxu0 0.0
  %2543 = vmatmul.mubr.f32.gmra.mxu0 %v2446
  %v2544 = vpop.f32.mrf.mxu0
  %v2545 = vadd.f32 0.0, %v2544
  %v2546 = vpop.f32.mrf.mxu0
  %v2547 = vadd.f32 0.0, %v2546
  %2548 = vmatprep.mubr.f32.mxu0 0.0
  %2549 = vmatmul.mubr.f32.gmra.mxu0 %v2449
  %v2550 = vpop.f32.mrf.mxu0
  %v2551 = vadd.f32 0.0, %v2550
  %v2552 = vpop.f32.mrf.mxu0
  %v2553 = vadd.f32 0.0, %v2552
  %2554 = vmatprep.mubr.f32.mxu0 0.0
  %2555 = vmatmul.mubr.f32.gmra.mxu0 %v2452
  %v2556 = vpop.f32.mrf.mxu0
  %v2557 = vadd.f32 0.0, %v2556
  %v2558 = vpop.f32.mrf.mxu0
  %v2559 = vadd.f32 0.0, %v2558
  %2560 = vmatprep.mubr.f32.mxu0 0.0
  %2561 = vmatmul.mubr.f32.gmra.mxu0 %v2455
  %v2562 = vpop.f32.mrf.mxu0
  %v2563 = vadd.f32 0.0, %v2562
  %v2564 = vpop.f32.mrf.mxu0
  %v2565 = vadd.f32 0.0, %v2564
  %2566 = vmatprep.mubr.f32.mxu0 0.0
  %2567 = vmatmul.mubr.f32.gmra.mxu0 %v2458
  %v2568 = vpop.f32.mrf.mxu0
  %v2569 = vadd.f32 0.0, %v2568
  %v2570 = vpop.f32.mrf.mxu0
  %v2571 = vadd.f32 0.0, %v2570
  %2572 = vdwg.mxu0
  %v2574 = vsel %vm2345, %v2358, 0
  %v2577 = vsel %vm2345, %v2359, 0
  %v2580 = vsel %vm2345, %v2360, 0
  %v2583 = vsel %vm2345, %v2361, 0
  %v2586 = vsel %vm2345, %v2362, 0
  %v2589 = vsel %vm2345, %v2363, 0
  %v2592 = vsel %vm2345, %v2364, 0
  %v2595 = vsel %vm2345, %v2365, 0
  %2597 = vmatprep.subr.mxu0 0.0
  %2598 = vmatpush1.msra.mxu0 0.0
  %2599 = vmatprep.subr.mxu0 %v2395
  %2600 = vmatpush1.msra.mxu0 %v2394
  %2601 = vmatprep.subr.mxu0 %v2393
  %2602 = vmatpush1.msra.mxu0 %v2392
  %2603 = vmatprep.subr.mxu0 %v2391
  %2604 = vmatpush1.msra.mxu0 %v2390
  %2605 = vmatprep.subr.mxu0 %v2389
  %2606 = vmatpush1.msra.mxu0 %v2388
  %2607 = vmatprep.subr.mxu0 %v2387
  %2608 = vmatpush1.msra.mxu0 %v2386
  %2609 = vmatprep.subr.mxu0 %v2385
  %2610 = vmatpush1.msra.mxu0 %v2384
  %2611 = vmatprep.subr.mxu0 %v2383
  %2612 = vmatpush1.msra.mxu0 %v2382
  %2613 = vmatprep.subr.mxu0 %v2381
  %2614 = vmatpush1.msra.mxu0 %v2380
  %2615 = vmatprep.subr.mxu0 %v2379
  %2616 = vmatpush1.msra.mxu0 %v2378
  %2617 = vmatprep.subr.mxu0 %v2377
  %2618 = vmatpush1.msra.mxu0 %v2376
  %2619 = vmatprep.subr.mxu0 %v2375
  %2620 = vmatpush1.msra.mxu0 %v2374
  %2621 = vmatprep.subr.mxu0 %v2373
  %2622 = vmatpush1.msra.mxu0 %v2372
  %2623 = vmatprep.subr.mxu0 %v2371
  %2624 = vmatpush1.msra.mxu0 %v2370
  %2625 = vmatprep.subr.mxu0 %v2369
  %2626 = vmatpush1.msra.mxu0 %v2368
  %2627 = vmatprep.subr.mxu0 %v2367
  %2628 = vmatpush1.msra.mxu0 %v2366
  %2629 = vmatprep.subr.mxu0 0.0
  %2630 = vmatpush2.msra.mxu0 0.0
  %2631 = vmatprep.subr.mxu0 0.0
  %2632 = vmatpush2.msra.mxu0 0.0
  %2633 = vmatprep.subr.mxu0 0.0
  %2634 = vmatpush2.msra.mxu0 0.0
  %2635 = vmatprep.subr.mxu0 0.0
  %2636 = vmatpush2.msra.mxu0 0.0
  %2637 = vmatprep.subr.mxu0 0.0
  %2638 = vmatpush2.msra.mxu0 0.0
  %2639 = vmatprep.subr.mxu0 0.0
  %2640 = vmatpush2.msra.mxu0 0.0
  %2641 = vmatprep.subr.mxu0 0.0
  %2642 = vmatpush2.msra.mxu0 0.0
  %2643 = vmatprep.subr.mxu0 0.0
  %2644 = vmatpush2.msra.mxu0 0.0
  %2645 = vmatprep.subr.mxu0 0.0
  %2646 = vmatpush2.msra.mxu0 0.0
  %2647 = vmatprep.subr.mxu0 0.0
  %2648 = vmatpush2.msra.mxu0 0.0
  %2649 = vmatprep.subr.mxu0 0.0
  %2650 = vmatpush2.msra.mxu0 0.0
  %2651 = vmatprep.subr.mxu0 0.0
  %2652 = vmatpush2.msra.mxu0 0.0
  %2653 = vmatprep.subr.mxu0 0.0
  %2654 = vmatpush2.msra.mxu0 0.0
  %2655 = vmatprep.subr.mxu0 0.0
  %2656 = vmatpush2.msra.mxu0 0.0
  %2657 = vmatprep.subr.mxu0 0.0
  %2658 = vmatpush2.msra.mxu0 0.0
  %2659 = vmatprep.subr.mxu0 0.0
  %2660 = vmatpush2.msra.mxu0 0.0
  %2661 = vmatprep.mubr.f32.mxu0 0.0
  %2662 = vmatmul.mubr.f32.gmra.mxu0 %v2574
  %v2663 = vpop.f32.mrf.mxu0
  %v2664 = vadd.f32 %v2527, %v2663
  %v2665 = vpop.f32.mrf.mxu0
  %v2666 = vadd.f32 %v2529, %v2665
  %2667 = vmatprep.mubr.f32.mxu0 0.0
  %2668 = vmatmul.mubr.f32.gmra.mxu0 %v2577
  %v2669 = vpop.f32.mrf.mxu0
  %v2670 = vadd.f32 %v2533, %v2669
  %v2671 = vpop.f32.mrf.mxu0
  %v2672 = vadd.f32 %v2535, %v2671
  %2673 = vmatprep.mubr.f32.mxu0 0.0
  %2674 = vmatmul.mubr.f32.gmra.mxu0 %v2580
  %v2675 = vpop.f32.mrf.mxu0
  %v2676 = vadd.f32 %v2539, %v2675
  %v2677 = vpop.f32.mrf.mxu0
  %v2678 = vadd.f32 %v2541, %v2677
  %2679 = vmatprep.mubr.f32.mxu0 0.0
  %2680 = vmatmul.mubr.f32.gmra.mxu0 %v2583
  %v2681 = vpop.f32.mrf.mxu0
  %v2682 = vadd.f32 %v2545, %v2681
  %v2683 = vpop.f32.mrf.mxu0
  %v2684 = vadd.f32 %v2547, %v2683
  %2685 = vmatprep.mubr.f32.mxu0 0.0
  %2686 = vmatmul.mubr.f32.gmra.mxu0 %v2586
  %v2687 = vpop.f32.mrf.mxu0
  %v2688 = vadd.f32 %v2551, %v2687
  %v2689 = vpop.f32.mrf.mxu0
  %v2690 = vadd.f32 %v2553, %v2689
  %2691 = vmatprep.mubr.f32.mxu0 0.0
  %2692 = vmatmul.mubr.f32.gmra.mxu0 %v2589
  %v2693 = vpop.f32.mrf.mxu0
  %v2694 = vadd.f32 %v2557, %v2693
  %v2695 = vpop.f32.mrf.mxu0
  %v2696 = vadd.f32 %v2559, %v2695
  %2697 = vmatprep.mubr.f32.mxu0 0.0
  %2698 = vmatmul.mubr.f32.gmra.mxu0 %v2592
  %v2699 = vpop.f32.mrf.mxu0
  %v2700 = vadd.f32 %v2563, %v2699
  %v2701 = vpop.f32.mrf.mxu0
  %v2702 = vadd.f32 %v2565, %v2701
  %2703 = vmatprep.mubr.f32.mxu0 0.0
  %2704 = vmatmul.mubr.f32.gmra.mxu0 %v2595
  %v2705 = vpop.f32.mrf.mxu0
  %v2706 = vadd.f32 %v2569, %v2705
  %v2707 = vpop.f32.mrf.mxu0
  %v2708 = vadd.f32 %v2571, %v2707
  %2709 = vdwg.mxu0
  %s2710 = scalar_lea.vmem [#allocation3], 16
  %v2711 = vld [vmem:[%s2710] sm:$0xff]
  %v2712 = vld [vmem:[%s2710 + $0x8] sm:$0xff]
  %v2713 = vld [vmem:[%s2710 + $0x10] sm:$0xff]
  %v2714 = vld [vmem:[%s2710 + $0x18] sm:$0xff]
  %v2715 = vld [vmem:[%s2710 + $0x20] sm:$0xff]
  %v2716 = vld [vmem:[%s2710 + $0x28] sm:$0xff]
  %v2717 = vld [vmem:[%s2710 + $0x30] sm:$0xff]
  %v2718 = vld [vmem:[%s2710 + $0x38] sm:$0xff]
  %s2719 = scalar_lea.vmem %s3, 480
  %v2720 = vld [vmem:[%s2719] sm:$0xff]
  %v2721 = vld [vmem:[%s2719 + $0x8] sm:$0xff]
  %v2722 = vld [vmem:[%s2719 + $0x10] sm:$0xff]
  %v2723 = vld [vmem:[%s2719 + $0x18] sm:$0xff]
  %v2724 = vld [vmem:[%s2719 + $0x20] sm:$0xff]
  %v2725 = vld [vmem:[%s2719 + $0x28] sm:$0xff]
  %v2726 = vld [vmem:[%s2719 + $0x30] sm:$0xff]
  %v2727 = vld [vmem:[%s2719 + $0x38] sm:$0xff]
  %v2728 = vld [vmem:[%s2719 + $0x40] sm:$0xff]
  %v2729 = vld [vmem:[%s2719 + $0x48] sm:$0xff]
  %v2730 = vld [vmem:[%s2719 + $0x50] sm:$0xff]
  %v2731 = vld [vmem:[%s2719 + $0x58] sm:$0xff]
  %v2732 = vld [vmem:[%s2719 + $0x60] sm:$0xff]
  %v2733 = vld [vmem:[%s2719 + $0x68] sm:$0xff]
  %v2734 = vld [vmem:[%s2719 + $0x70] sm:$0xff]
  %v2735 = vld [vmem:[%s2719 + $0x78] sm:$0xff]
  %v2736 = vld [vmem:[%s2719 + $0x80] sm:$0xff]
  %v2737 = vld [vmem:[%s2719 + $0x88] sm:$0xff]
  %v2738 = vld [vmem:[%s2719 + $0x90] sm:$0xff]
  %v2739 = vld [vmem:[%s2719 + $0x98] sm:$0xff]
  %v2740 = vld [vmem:[%s2719 + $0xa0] sm:$0xff]
  %v2741 = vld [vmem:[%s2719 + $0xa8] sm:$0xff]
  %v2742 = vld [vmem:[%s2719 + $0xb0] sm:$0xff]
  %v2743 = vld [vmem:[%s2719 + $0xb8] sm:$0xff]
  %v2744 = vld [vmem:[%s2719 + $0xc0] sm:$0xff]
  %v2745 = vld [vmem:[%s2719 + $0xc8] sm:$0xff]
  %v2746 = vld [vmem:[%s2719 + $0xd0] sm:$0xff]
  %v2747 = vld [vmem:[%s2719 + $0xd8] sm:$0xff]
  %v2748 = vld [vmem:[%s2719 + $0xe0] sm:$0xff]
  %v2749 = vld [vmem:[%s2719 + $0xe8] sm:$0xff]
  %v2751 = vsel %vm2345, %v2711, 0
  %v2754 = vsel %vm2345, %v2712, 0
  %v2757 = vsel %vm2345, %v2713, 0
  %v2760 = vsel %vm2345, %v2714, 0
  %v2763 = vsel %vm2345, %v2715, 0
  %v2766 = vsel %vm2345, %v2716, 0
  %v2769 = vsel %vm2345, %v2717, 0
  %v2772 = vsel %vm2345, %v2718, 0
  %2774 = vmatprep.subr.mxu0 0.0
  %2775 = vmatpush1.msra.mxu0 0.0
  %2776 = vmatprep.subr.mxu0 %v2749
  %2777 = vmatpush1.msra.mxu0 %v2748
  %2778 = vmatprep.subr.mxu0 %v2747
  %2779 = vmatpush1.msra.mxu0 %v2746
  %2780 = vmatprep.subr.mxu0 %v2745
  %2781 = vmatpush1.msra.mxu0 %v2744
  %2782 = vmatprep.subr.mxu0 %v2743
  %2783 = vmatpush1.msra.mxu0 %v2742
  %2784 = vmatprep.subr.mxu0 %v2741
  %2785 = vmatpush1.msra.mxu0 %v2740
  %2786 = vmatprep.subr.mxu0 %v2739
  %2787 = vmatpush1.msra.mxu0 %v2738
  %2788 = vmatprep.subr.mxu0 %v2737
  %2789 = vmatpush1.msra.mxu0 %v2736
  %2790 = vmatprep.subr.mxu0 %v2735
  %2791 = vmatpush1.msra.mxu0 %v2734
  %2792 = vmatprep.subr.mxu0 %v2733
  %2793 = vmatpush1.msra.mxu0 %v2732
  %2794 = vmatprep.subr.mxu0 %v2731
  %2795 = vmatpush1.msra.mxu0 %v2730
  %2796 = vmatprep.subr.mxu0 %v2729
  %2797 = vmatpush1.msra.mxu0 %v2728
  %2798 = vmatprep.subr.mxu0 %v2727
  %2799 = vmatpush1.msra.mxu0 %v2726
  %2800 = vmatprep.subr.mxu0 %v2725
  %2801 = vmatpush1.msra.mxu0 %v2724
  %2802 = vmatprep.subr.mxu0 %v2723
  %2803 = vmatpush1.msra.mxu0 %v2722
  %2804 = vmatprep.subr.mxu0 %v2721
  %2805 = vmatpush1.msra.mxu0 %v2720
  %2806 = vmatprep.subr.mxu0 0.0
  %2807 = vmatpush2.msra.mxu0 0.0
  %2808 = vmatprep.subr.mxu0 0.0
  %2809 = vmatpush2.msra.mxu0 0.0
  %2810 = vmatprep.subr.mxu0 0.0
  %2811 = vmatpush2.msra.mxu0 0.0
  %2812 = vmatprep.subr.mxu0 0.0
  %2813 = vmatpush2.msra.mxu0 0.0
  %2814 = vmatprep.subr.mxu0 0.0
  %2815 = vmatpush2.msra.mxu0 0.0
  %2816 = vmatprep.subr.mxu0 0.0
  %2817 = vmatpush2.msra.mxu0 0.0
  %2818 = vmatprep.subr.mxu0 0.0
  %2819 = vmatpush2.msra.mxu0 0.0
  %2820 = vmatprep.subr.mxu0 0.0
  %2821 = vmatpush2.msra.mxu0 0.0
  %2822 = vmatprep.subr.mxu0 0.0
  %2823 = vmatpush2.msra.mxu0 0.0
  %2824 = vmatprep.subr.mxu0 0.0
  %2825 = vmatpush2.msra.mxu0 0.0
  %2826 = vmatprep.subr.mxu0 0.0
  %2827 = vmatpush2.msra.mxu0 0.0
  %2828 = vmatprep.subr.mxu0 0.0
  %2829 = vmatpush2.msra.mxu0 0.0
  %2830 = vmatprep.subr.mxu0 0.0
  %2831 = vmatpush2.msra.mxu0 0.0
  %2832 = vmatprep.subr.mxu0 0.0
  %2833 = vmatpush2.msra.mxu0 0.0
  %2834 = vmatprep.subr.mxu0 0.0
  %2835 = vmatpush2.msra.mxu0 0.0
  %2836 = vmatprep.subr.mxu0 0.0
  %2837 = vmatpush2.msra.mxu0 0.0
  %2838 = vmatprep.mubr.f32.mxu0 0.0
  %2839 = vmatmul.mubr.f32.gmra.mxu0 %v2751
  %v2840 = vpop.f32.mrf.mxu0
  %v2841 = vadd.f32 0.0, %v2840
  %v2842 = vpop.f32.mrf.mxu0
  %v2843 = vadd.f32 0.0, %v2842
  %2844 = vmatprep.mubr.f32.mxu0 0.0
  %2845 = vmatmul.mubr.f32.gmra.mxu0 %v2754
  %v2846 = vpop.f32.mrf.mxu0
  %v2847 = vadd.f32 0.0, %v2846
  %v2848 = vpop.f32.mrf.mxu0
  %v2849 = vadd.f32 0.0, %v2848
  %2850 = vmatprep.mubr.f32.mxu0 0.0
  %2851 = vmatmul.mubr.f32.gmra.mxu0 %v2757
  %v2852 = vpop.f32.mrf.mxu0
  %v2853 = vadd.f32 0.0, %v2852
  %v2854 = vpop.f32.mrf.mxu0
  %v2855 = vadd.f32 0.0, %v2854
  %2856 = vmatprep.mubr.f32.mxu0 0.0
  %2857 = vmatmul.mubr.f32.gmra.mxu0 %v2760
  %v2858 = vpop.f32.mrf.mxu0
  %v2859 = vadd.f32 0.0, %v2858
  %v2860 = vpop.f32.mrf.mxu0
  %v2861 = vadd.f32 0.0, %v2860
  %2862 = vmatprep.mubr.f32.mxu0 0.0
  %2863 = vmatmul.mubr.f32.gmra.mxu0 %v2763
  %v2864 = vpop.f32.mrf.mxu0
  %v2865 = vadd.f32 0.0, %v2864
  %v2866 = vpop.f32.mrf.mxu0
  %v2867 = vadd.f32 0.0, %v2866
  %2868 = vmatprep.mubr.f32.mxu0 0.0
  %2869 = vmatmul.mubr.f32.gmra.mxu0 %v2766
  %v2870 = vpop.f32.mrf.mxu0
  %v2871 = vadd.f32 0.0, %v2870
  %v2872 = vpop.f32.mrf.mxu0
  %v2873 = vadd.f32 0.0, %v2872
  %2874 = vmatprep.mubr.f32.mxu0 0.0
  %2875 = vmatmul.mubr.f32.gmra.mxu0 %v2769
  %v2876 = vpop.f32.mrf.mxu0
  %v2877 = vadd.f32 0.0, %v2876
  %v2878 = vpop.f32.mrf.mxu0
  %v2879 = vadd.f32 0.0, %v2878
  %2880 = vmatprep.mubr.f32.mxu0 0.0
  %2881 = vmatmul.mubr.f32.gmra.mxu0 %v2772
  %v2882 = vpop.f32.mrf.mxu0
  %v2883 = vadd.f32 0.0, %v2882
  %v2884 = vpop.f32.mrf.mxu0
  %v2885 = vadd.f32 0.0, %v2884
  %2886 = vdwg.mxu0
  %v2887 = vadd.f32 %v2664, %v2841
  %v2888 = vadd.f32 %v2666, %v2843
  %v2889 = vadd.f32 %v2670, %v2847
  %v2890 = vadd.f32 %v2672, %v2849
  %v2891 = vadd.f32 %v2676, %v2853
  %v2892 = vadd.f32 %v2678, %v2855
  %v2893 = vadd.f32 %v2682, %v2859
  %v2894 = vadd.f32 %v2684, %v2861
  %v2895 = vadd.f32 %v2688, %v2865
  %v2896 = vadd.f32 %v2690, %v2867
  %v2897 = vadd.f32 %v2694, %v2871
  %v2898 = vadd.f32 %v2696, %v2873
  %v2899 = vadd.f32 %v2700, %v2877
  %v2900 = vadd.f32 %v2702, %v2879
  %v2901 = vadd.f32 %v2706, %v2883
  %v2902 = vadd.f32 %v2708, %v2885
  %s2903 = scalar_lea.vmem [#allocation3], 24
  %v2904 = vld [vmem:[%s2903] sm:$0xff]
  %v2905 = vld [vmem:[%s2903 + $0x8] sm:$0xff]
  %v2906 = vld [vmem:[%s2903 + $0x10] sm:$0xff]
  %v2907 = vld [vmem:[%s2903 + $0x18] sm:$0xff]
  %v2908 = vld [vmem:[%s2903 + $0x20] sm:$0xff]
  %v2909 = vld [vmem:[%s2903 + $0x28] sm:$0xff]
  %v2910 = vld [vmem:[%s2903 + $0x30] sm:$0xff]
  %v2911 = vld [vmem:[%s2903 + $0x38] sm:$0xff]
  %s2912 = scalar_lea.vmem %s3, 720
  %v2913 = vld [vmem:[%s2912] sm:$0xff]
  %v2914 = vld [vmem:[%s2912 + $0x8] sm:$0xff]
  %v2915 = vld [vmem:[%s2912 + $0x10] sm:$0xff]
  %v2916 = vld [vmem:[%s2912 + $0x18] sm:$0xff]
  %v2917 = vld [vmem:[%s2912 + $0x20] sm:$0xff]
  %v2918 = vld [vmem:[%s2912 + $0x28] sm:$0xff]
  %v2919 = vld [vmem:[%s2912 + $0x30] sm:$0xff]
  %v2920 = vld [vmem:[%s2912 + $0x38] sm:$0xff]
  %v2921 = vld [vmem:[%s2912 + $0x40] sm:$0xff]
  %v2922 = vld [vmem:[%s2912 + $0x48] sm:$0xff]
  %v2923 = vld [vmem:[%s2912 + $0x50] sm:$0xff]
  %v2924 = vld [vmem:[%s2912 + $0x58] sm:$0xff]
  %v2925 = vld [vmem:[%s2912 + $0x60] sm:$0xff]
  %v2926 = vld [vmem:[%s2912 + $0x68] sm:$0xff]
  %v2927 = vld [vmem:[%s2912 + $0x70] sm:$0xff]
  %v2928 = vld [vmem:[%s2912 + $0x78] sm:$0xff]
  %v2929 = vld [vmem:[%s2912 + $0x80] sm:$0xff]
  %v2930 = vld [vmem:[%s2912 + $0x88] sm:$0xff]
  %v2931 = vld [vmem:[%s2912 + $0x90] sm:$0xff]
  %v2932 = vld [vmem:[%s2912 + $0x98] sm:$0xff]
  %v2933 = vld [vmem:[%s2912 + $0xa0] sm:$0xff]
  %v2934 = vld [vmem:[%s2912 + $0xa8] sm:$0xff]
  %v2935 = vld [vmem:[%s2912 + $0xb0] sm:$0xff]
  %v2936 = vld [vmem:[%s2912 + $0xb8] sm:$0xff]
  %v2937 = vld [vmem:[%s2912 + $0xc0] sm:$0xff]
  %v2938 = vld [vmem:[%s2912 + $0xc8] sm:$0xff]
  %v2939 = vld [vmem:[%s2912 + $0xd0] sm:$0xff]
  %v2940 = vld [vmem:[%s2912 + $0xd8] sm:$0xff]
  %v2941 = vld [vmem:[%s2912 + $0xe0] sm:$0xff]
  %v2942 = vld [vmem:[%s2912 + $0xe8] sm:$0xff]
  %v2944 = vsel %vm2345, %v2904, 0
  %v2947 = vsel %vm2345, %v2905, 0
  %v2950 = vsel %vm2345, %v2906, 0
  %v2953 = vsel %vm2345, %v2907, 0
  %v2956 = vsel %vm2345, %v2908, 0
  %v2959 = vsel %vm2345, %v2909, 0
  %v2962 = vsel %vm2345, %v2910, 0
  %v2965 = vsel %vm2345, %v2911, 0
  %2967 = vmatprep.subr.mxu0 0.0
  %2968 = vmatpush1.msra.mxu0 0.0
  %2969 = vmatprep.subr.mxu0 %v2942
  %2970 = vmatpush1.msra.mxu0 %v2941
  %2971 = vmatprep.subr.mxu0 %v2940
  %2972 = vmatpush1.msra.mxu0 %v2939
  %2973 = vmatprep.subr.mxu0 %v2938
  %2974 = vmatpush1.msra.mxu0 %v2937
  %2975 = vmatprep.subr.mxu0 %v2936
  %2976 = vmatpush1.msra.mxu0 %v2935
  %2977 = vmatprep.subr.mxu0 %v2934
  %2978 = vmatpush1.msra.mxu0 %v2933
  %2979 = vmatprep.subr.mxu0 %v2932
  %2980 = vmatpush1.msra.mxu0 %v2931
  %2981 = vmatprep.subr.mxu0 %v2930
  %2982 = vmatpush1.msra.mxu0 %v2929
  %2983 = vmatprep.subr.mxu0 %v2928
  %2984 = vmatpush1.msra.mxu0 %v2927
  %2985 = vmatprep.subr.mxu0 %v2926
  %2986 = vmatpush1.msra.mxu0 %v2925
  %2987 = vmatprep.subr.mxu0 %v2924
  %2988 = vmatpush1.msra.mxu0 %v2923
  %2989 = vmatprep.subr.mxu0 %v2922
  %2990 = vmatpush1.msra.mxu0 %v2921
  %2991 = vmatprep.subr.mxu0 %v2920
  %2992 = vmatpush1.msra.mxu0 %v2919
  %2993 = vmatprep.subr.mxu0 %v2918
  %2994 = vmatpush1.msra.mxu0 %v2917
  %2995 = vmatprep.subr.mxu0 %v2916
  %2996 = vmatpush1.msra.mxu0 %v2915
  %2997 = vmatprep.subr.mxu0 %v2914
  %2998 = vmatpush1.msra.mxu0 %v2913
  %2999 = vmatprep.subr.mxu0 0.0
  %3000 = vmatpush2.msra.mxu0 0.0
  %3001 = vmatprep.subr.mxu0 0.0
  %3002 = vmatpush2.msra.mxu0 0.0
  %3003 = vmatprep.subr.mxu0 0.0
  %3004 = vmatpush2.msra.mxu0 0.0
  %3005 = vmatprep.subr.mxu0 0.0
  %3006 = vmatpush2.msra.mxu0 0.0
  %3007 = vmatprep.subr.mxu0 0.0
  %3008 = vmatpush2.msra.mxu0 0.0
  %3009 = vmatprep.subr.mxu0 0.0
  %3010 = vmatpush2.msra.mxu0 0.0
  %3011 = vmatprep.subr.mxu0 0.0
  %3012 = vmatpush2.msra.mxu0 0.0
  %3013 = vmatprep.subr.mxu0 0.0
  %3014 = vmatpush2.msra.mxu0 0.0
  %3015 = vmatprep.subr.mxu0 0.0
  %3016 = vmatpush2.msra.mxu0 0.0
  %3017 = vmatprep.subr.mxu0 0.0
  %3018 = vmatpush2.msra.mxu0 0.0
  %3019 = vmatprep.subr.mxu0 0.0
  %3020 = vmatpush2.msra.mxu0 0.0
  %3021 = vmatprep.subr.mxu0 0.0
  %3022 = vmatpush2.msra.mxu0 0.0
  %3023 = vmatprep.subr.mxu0 0.0
  %3024 = vmatpush2.msra.mxu0 0.0
  %3025 = vmatprep.subr.mxu0 0.0
  %3026 = vmatpush2.msra.mxu0 0.0
  %3027 = vmatprep.subr.mxu0 0.0
  %3028 = vmatpush2.msra.mxu0 0.0
  %3029 = vmatprep.subr.mxu0 0.0
  %3030 = vmatpush2.msra.mxu0 0.0
  %3031 = vmatprep.mubr.f32.mxu0 0.0
  %3032 = vmatmul.mubr.f32.gmra.mxu0 %v2944
  %v3033 = vpop.f32.mrf.mxu0
  %v3034 = vadd.f32 0.0, %v3033
  %v3035 = vpop.f32.mrf.mxu0
  %v3036 = vadd.f32 0.0, %v3035
  %3037 = vmatprep.mubr.f32.mxu0 0.0
  %3038 = vmatmul.mubr.f32.gmra.mxu0 %v2947
  %v3039 = vpop.f32.mrf.mxu0
  %v3040 = vadd.f32 0.0, %v3039
  %v3041 = vpop.f32.mrf.mxu0
  %v3042 = vadd.f32 0.0, %v3041
  %3043 = vmatprep.mubr.f32.mxu0 0.0
  %3044 = vmatmul.mubr.f32.gmra.mxu0 %v2950
  %v3045 = vpop.f32.mrf.mxu0
  %v3046 = vadd.f32 0.0, %v3045
  %v3047 = vpop.f32.mrf.mxu0
  %v3048 = vadd.f32 0.0, %v3047
  %3049 = vmatprep.mubr.f32.mxu0 0.0
  %3050 = vmatmul.mubr.f32.gmra.mxu0 %v2953
  %v3051 = vpop.f32.mrf.mxu0
  %v3052 = vadd.f32 0.0, %v3051
  %v3053 = vpop.f32.mrf.mxu0
  %v3054 = vadd.f32 0.0, %v3053
  %3055 = vmatprep.mubr.f32.mxu0 0.0
  %3056 = vmatmul.mubr.f32.gmra.mxu0 %v2956
  %v3057 = vpop.f32.mrf.mxu0
  %v3058 = vadd.f32 0.0, %v3057
  %v3059 = vpop.f32.mrf.mxu0
  %v3060 = vadd.f32 0.0, %v3059
  %3061 = vmatprep.mubr.f32.mxu0 0.0
  %3062 = vmatmul.mubr.f32.gmra.mxu0 %v2959
  %v3063 = vpop.f32.mrf.mxu0
  %v3064 = vadd.f32 0.0, %v3063
  %v3065 = vpop.f32.mrf.mxu0
  %v3066 = vadd.f32 0.0, %v3065
  %3067 = vmatprep.mubr.f32.mxu0 0.0
  %3068 = vmatmul.mubr.f32.gmra.mxu0 %v2962
  %v3069 = vpop.f32.mrf.mxu0
  %v3070 = vadd.f32 0.0, %v3069
  %v3071 = vpop.f32.mrf.mxu0
  %v3072 = vadd.f32 0.0, %v3071
  %3073 = vmatprep.mubr.f32.mxu0 0.0
  %3074 = vmatmul.mubr.f32.gmra.mxu0 %v2965
  %v3075 = vpop.f32.mrf.mxu0
  %v3076 = vadd.f32 0.0, %v3075
  %v3077 = vpop.f32.mrf.mxu0
  %v3078 = vadd.f32 0.0, %v3077
  %3079 = vdwg.mxu0
  %v3080 = vadd.f32 %v2887, %v3034
  %v3081 = vadd.f32 %v2888, %v3036
  %v3082 = vadd.f32 %v2889, %v3040
  %v3083 = vadd.f32 %v2890, %v3042
  %v3084 = vadd.f32 %v2891, %v3046
  %v3085 = vadd.f32 %v2892, %v3048
  %v3086 = vadd.f32 %v2893, %v3052
  %v3087 = vadd.f32 %v2894, %v3054
  %v3088 = vadd.f32 %v2895, %v3058
  %v3089 = vadd.f32 %v2896, %v3060
  %v3090 = vadd.f32 %v2897, %v3064
  %v3091 = vadd.f32 %v2898, %v3066
  %v3092 = vadd.f32 %v2899, %v3070
  %v3093 = vadd.f32 %v2900, %v3072
  %v3094 = vadd.f32 %v2901, %v3076
  %v3095 = vadd.f32 %v2902, %v3078
  %s3096 = scalar_lea.vmem [#allocation3], 32
  %v3097 = vld [vmem:[%s3096] sm:$0xff]
  %v3098 = vld [vmem:[%s3096 + $0x8] sm:$0xff]
  %v3099 = vld [vmem:[%s3096 + $0x10] sm:$0xff]
  %v3100 = vld [vmem:[%s3096 + $0x18] sm:$0xff]
  %v3101 = vld [vmem:[%s3096 + $0x20] sm:$0xff]
  %v3102 = vld [vmem:[%s3096 + $0x28] sm:$0xff]
  %v3103 = vld [vmem:[%s3096 + $0x30] sm:$0xff]
  %v3104 = vld [vmem:[%s3096 + $0x38] sm:$0xff]
  %s3105 = scalar_lea.vmem %s3, 960
  %v3106 = vld [vmem:[%s3105] sm:$0xff]
  %v3107 = vld [vmem:[%s3105 + $0x8] sm:$0xff]
  %v3108 = vld [vmem:[%s3105 + $0x10] sm:$0xff]
  %v3109 = vld [vmem:[%s3105 + $0x18] sm:$0xff]
  %v3110 = vld [vmem:[%s3105 + $0x20] sm:$0xff]
  %v3111 = vld [vmem:[%s3105 + $0x28] sm:$0xff]
  %v3112 = vld [vmem:[%s3105 + $0x30] sm:$0xff]
  %v3113 = vld [vmem:[%s3105 + $0x38] sm:$0xff]
  %v3114 = vld [vmem:[%s3105 + $0x40] sm:$0xff]
  %v3115 = vld [vmem:[%s3105 + $0x48] sm:$0xff]
  %v3116 = vld [vmem:[%s3105 + $0x50] sm:$0xff]
  %v3117 = vld [vmem:[%s3105 + $0x58] sm:$0xff]
  %v3118 = vld [vmem:[%s3105 + $0x60] sm:$0xff]
  %v3119 = vld [vmem:[%s3105 + $0x68] sm:$0xff]
  %v3120 = vld [vmem:[%s3105 + $0x70] sm:$0xff]
  %v3121 = vld [vmem:[%s3105 + $0x78] sm:$0xff]
  %v3122 = vld [vmem:[%s3105 + $0x80] sm:$0xff]
  %v3123 = vld [vmem:[%s3105 + $0x88] sm:$0xff]
  %v3124 = vld [vmem:[%s3105 + $0x90] sm:$0xff]
  %v3125 = vld [vmem:[%s3105 + $0x98] sm:$0xff]
  %v3126 = vld [vmem:[%s3105 + $0xa0] sm:$0xff]
  %v3127 = vld [vmem:[%s3105 + $0xa8] sm:$0xff]
  %v3128 = vld [vmem:[%s3105 + $0xb0] sm:$0xff]
  %v3129 = vld [vmem:[%s3105 + $0xb8] sm:$0xff]
  %v3130 = vld [vmem:[%s3105 + $0xc0] sm:$0xff]
  %v3131 = vld [vmem:[%s3105 + $0xc8] sm:$0xff]
  %v3132 = vld [vmem:[%s3105 + $0xd0] sm:$0xff]
  %v3133 = vld [vmem:[%s3105 + $0xd8] sm:$0xff]
  %v3134 = vld [vmem:[%s3105 + $0xe0] sm:$0xff]
  %v3135 = vld [vmem:[%s3105 + $0xe8] sm:$0xff]
  %v3137 = vsel %vm2345, %v3097, 0
  %v3140 = vsel %vm2345, %v3098, 0
  %v3143 = vsel %vm2345, %v3099, 0
  %v3146 = vsel %vm2345, %v3100, 0
  %v3149 = vsel %vm2345, %v3101, 0
  %v3152 = vsel %vm2345, %v3102, 0
  %v3155 = vsel %vm2345, %v3103, 0
  %v3158 = vsel %vm2345, %v3104, 0
  %3160 = vmatprep.subr.mxu0 0.0
  %3161 = vmatpush1.msra.mxu0 0.0
  %3162 = vmatprep.subr.mxu0 %v3135
  %3163 = vmatpush1.msra.mxu0 %v3134
  %3164 = vmatprep.subr.mxu0 %v3133
  %3165 = vmatpush1.msra.mxu0 %v3132
  %3166 = vmatprep.subr.mxu0 %v3131
  %3167 = vmatpush1.msra.mxu0 %v3130
  %3168 = vmatprep.subr.mxu0 %v3129
  %3169 = vmatpush1.msra.mxu0 %v3128
  %3170 = vmatprep.subr.mxu0 %v3127
  %3171 = vmatpush1.msra.mxu0 %v3126
  %3172 = vmatprep.subr.mxu0 %v3125
  %3173 = vmatpush1.msra.mxu0 %v3124
  %3174 = vmatprep.subr.mxu0 %v3123
  %3175 = vmatpush1.msra.mxu0 %v3122
  %3176 = vmatprep.subr.mxu0 %v3121
  %3177 = vmatpush1.msra.mxu0 %v3120
  %3178 = vmatprep.subr.mxu0 %v3119
  %3179 = vmatpush1.msra.mxu0 %v3118
  %3180 = vmatprep.subr.mxu0 %v3117
  %3181 = vmatpush1.msra.mxu0 %v3116
  %3182 = vmatprep.subr.mxu0 %v3115
  %3183 = vmatpush1.msra.mxu0 %v3114
  %3184 = vmatprep.subr.mxu0 %v3113
  %3185 = vmatpush1.msra.mxu0 %v3112
  %3186 = vmatprep.subr.mxu0 %v3111
  %3187 = vmatpush1.msra.mxu0 %v3110
  %3188 = vmatprep.subr.mxu0 %v3109
  %3189 = vmatpush1.msra.mxu0 %v3108
  %3190 = vmatprep.subr.mxu0 %v3107
  %3191 = vmatpush1.msra.mxu0 %v3106
  %3192 = vmatprep.subr.mxu0 0.0
  %3193 = vmatpush2.msra.mxu0 0.0
  %3194 = vmatprep.subr.mxu0 0.0
  %3195 = vmatpush2.msra.mxu0 0.0
  %3196 = vmatprep.subr.mxu0 0.0
  %3197 = vmatpush2.msra.mxu0 0.0
  %3198 = vmatprep.subr.mxu0 0.0
  %3199 = vmatpush2.msra.mxu0 0.0
  %3200 = vmatprep.subr.mxu0 0.0
  %3201 = vmatpush2.msra.mxu0 0.0
  %3202 = vmatprep.subr.mxu0 0.0
  %3203 = vmatpush2.msra.mxu0 0.0
  %3204 = vmatprep.subr.mxu0 0.0
  %3205 = vmatpush2.msra.mxu0 0.0
  %3206 = vmatprep.subr.mxu0 0.0
  %3207 = vmatpush2.msra.mxu0 0.0
  %3208 = vmatprep.subr.mxu0 0.0
  %3209 = vmatpush2.msra.mxu0 0.0
  %3210 = vmatprep.subr.mxu0 0.0
  %3211 = vmatpush2.msra.mxu0 0.0
  %3212 = vmatprep.subr.mxu0 0.0
  %3213 = vmatpush2.msra.mxu0 0.0
  %3214 = vmatprep.subr.mxu0 0.0
  %3215 = vmatpush2.msra.mxu0 0.0
  %3216 = vmatprep.subr.mxu0 0.0
  %3217 = vmatpush2.msra.mxu0 0.0
  %3218 = vmatprep.subr.mxu0 0.0
  %3219 = vmatpush2.msra.mxu0 0.0
  %3220 = vmatprep.subr.mxu0 0.0
  %3221 = vmatpush2.msra.mxu0 0.0
  %3222 = vmatprep.subr.mxu0 0.0
  %3223 = vmatpush2.msra.mxu0 0.0
  %3224 = vmatprep.mubr.f32.mxu0 0.0
  %3225 = vmatmul.mubr.f32.gmra.mxu0 %v3137
  %v3226 = vpop.f32.mrf.mxu0
  %v3227 = vadd.f32 0.0, %v3226
  %v3228 = vpop.f32.mrf.mxu0
  %v3229 = vadd.f32 0.0, %v3228
  %3230 = vmatprep.mubr.f32.mxu0 0.0
  %3231 = vmatmul.mubr.f32.gmra.mxu0 %v3140
  %v3232 = vpop.f32.mrf.mxu0
  %v3233 = vadd.f32 0.0, %v3232
  %v3234 = vpop.f32.mrf.mxu0
  %v3235 = vadd.f32 0.0, %v3234
  %3236 = vmatprep.mubr.f32.mxu0 0.0
  %3237 = vmatmul.mubr.f32.gmra.mxu0 %v3143
  %v3238 = vpop.f32.mrf.mxu0
  %v3239 = vadd.f32 0.0, %v3238
  %v3240 = vpop.f32.mrf.mxu0
  %v3241 = vadd.f32 0.0, %v3240
  %3242 = vmatprep.mubr.f32.mxu0 0.0
  %3243 = vmatmul.mubr.f32.gmra.mxu0 %v3146
  %v3244 = vpop.f32.mrf.mxu0
  %v3245 = vadd.f32 0.0, %v3244
  %v3246 = vpop.f32.mrf.mxu0
  %v3247 = vadd.f32 0.0, %v3246
  %3248 = vmatprep.mubr.f32.mxu0 0.0
  %3249 = vmatmul.mubr.f32.gmra.mxu0 %v3149
  %v3250 = vpop.f32.mrf.mxu0
  %v3251 = vadd.f32 0.0, %v3250
  %v3252 = vpop.f32.mrf.mxu0
  %v3253 = vadd.f32 0.0, %v3252
  %3254 = vmatprep.mubr.f32.mxu0 0.0
  %3255 = vmatmul.mubr.f32.gmra.mxu0 %v3152
  %v3256 = vpop.f32.mrf.mxu0
  %v3257 = vadd.f32 0.0, %v3256
  %v3258 = vpop.f32.mrf.mxu0
  %v3259 = vadd.f32 0.0, %v3258
  %3260 = vmatprep.mubr.f32.mxu0 0.0
  %3261 = vmatmul.mubr.f32.gmra.mxu0 %v3155
  %v3262 = vpop.f32.mrf.mxu0
  %v3263 = vadd.f32 0.0, %v3262
  %v3264 = vpop.f32.mrf.mxu0
  %v3265 = vadd.f32 0.0, %v3264
  %3266 = vmatprep.mubr.f32.mxu0 0.0
  %3267 = vmatmul.mubr.f32.gmra.mxu0 %v3158
  %v3268 = vpop.f32.mrf.mxu0
  %v3269 = vadd.f32 0.0, %v3268
  %v3270 = vpop.f32.mrf.mxu0
  %v3271 = vadd.f32 0.0, %v3270
  %3272 = vdwg.mxu0
  %v3273 = vadd.f32 %v3080, %v3227
  %v3274 = vadd.f32 %v3081, %v3229
  %v3275 = vadd.f32 %v3082, %v3233
  %v3276 = vadd.f32 %v3083, %v3235
  %v3277 = vadd.f32 %v3084, %v3239
  %v3278 = vadd.f32 %v3085, %v3241
  %v3279 = vadd.f32 %v3086, %v3245
  %v3280 = vadd.f32 %v3087, %v3247
  %v3281 = vadd.f32 %v3088, %v3251
  %v3282 = vadd.f32 %v3089, %v3253
  %v3283 = vadd.f32 %v3090, %v3257
  %v3284 = vadd.f32 %v3091, %v3259
  %v3285 = vadd.f32 %v3092, %v3263
  %v3286 = vadd.f32 %v3093, %v3265
  %v3287 = vadd.f32 %v3094, %v3269
  %v3288 = vadd.f32 %v3095, %v3271
  %v3289 = vld [vmem:[%s4] sm:$0x3]
  %v3291 = vlaneseq
  %v3292 = vshrl.u32 %v3291, 7
  %v3293 = vsub.s32 0, %v3292
  %v3294 = vrot.slane %v3289, %v3293
  %v3295 = vlaneseq
  %v3296 = vshrl.u32 %v3295, 7
  %v3297 = vsub.s32 1, %v3296
  %v3298 = vrot.slane %v3289, %v3297
  %v3301 = vadd.f32 %v3273, %v3294
  %v3302 = vadd.f32 %v3274, %v3298
  %v3303 = vadd.f32 %v3275, %v3294
  %v3304 = vadd.f32 %v3276, %v3298
  %v3305 = vadd.f32 %v3277, %v3294
  %v3306 = vadd.f32 %v3278, %v3298
  %v3307 = vadd.f32 %v3279, %v3294
  %v3308 = vadd.f32 %v3280, %v3298
  %v3309 = vadd.f32 %v3281, %v3294
  %v3310 = vadd.f32 %v3282, %v3298
  %v3311 = vadd.f32 %v3283, %v3294
  %v3312 = vadd.f32 %v3284, %v3298
  %v3313 = vadd.f32 %v3285, %v3294
  %v3314 = vadd.f32 %v3286, %v3298
  %v3315 = vadd.f32 %v3287, %v3294
  %v3316 = vadd.f32 %v3288, %v3298
  %3317 = vst [vmem:[#allocation4] sm:$0xff] %v3301
  %vm3318 = vcmask 261120
  %3319 = vst.msk [vmem:[#allocation4 + $0x8] sm:$0xff] %vm3318, %v3302
  %3320 = vst [vmem:[#allocation4 + $0x10] sm:$0xff] %v3303
  %3321 = vst.msk [vmem:[#allocation4 + $0x18] sm:$0xff] %vm3318, %v3304
  %3322 = vst [vmem:[#allocation4 + $0x20] sm:$0xff] %v3305
  %3323 = vst.msk [vmem:[#allocation4 + $0x28] sm:$0xff] %vm3318, %v3306
  %3324 = vst [vmem:[#allocation4 + $0x30] sm:$0xff] %v3307
  %3325 = vst.msk [vmem:[#allocation4 + $0x38] sm:$0xff] %vm3318, %v3308
  %3326 = vst [vmem:[#allocation4 + $0x40] sm:$0xff] %v3309
  %3327 = vst.msk [vmem:[#allocation4 + $0x48] sm:$0xff] %vm3318, %v3310
  %3328 = vst [vmem:[#allocation4 + $0x50] sm:$0xff] %v3311
  %3329 = vst.msk [vmem:[#allocation4 + $0x58] sm:$0xff] %vm3318, %v3312
  %3330 = vst [vmem:[#allocation4 + $0x60] sm:$0xff] %v3313
  %3331 = vst.msk [vmem:[#allocation4 + $0x68] sm:$0xff] %vm3318, %v3314
  %3332 = vst [vmem:[#allocation4 + $0x70] sm:$0xff] %v3315
  %3333 = vst.msk [vmem:[#allocation4 + $0x78] sm:$0xff] %vm3318, %v3316
  %v3334 = vld [vmem:[#allocation4] sm:$0xff]
  %v3335 = vld [vmem:[#allocation4 + $0x8] sm:$0xff]
  %v3336 = vld [vmem:[#allocation4 + $0x20] sm:$0xff]
  %v3337 = vld [vmem:[#allocation4 + $0x28] sm:$0xff]
  %v3338 = vld [vmem:[#allocation4 + $0x40] sm:$0xff]
  %v3339 = vld [vmem:[#allocation4 + $0x48] sm:$0xff]
  %v3340 = vld [vmem:[#allocation4 + $0x60] sm:$0xff]
  %v3341 = vld [vmem:[#allocation4 + $0x68] sm:$0xff]
  %s3342 = scalar_lea.vmem [#allocation4], 16
  %v3343 = vld [vmem:[%s3342] sm:$0xff]
  %v3344 = vld [vmem:[%s3342 + $0x8] sm:$0xff]
  %v3345 = vld [vmem:[%s3342 + $0x20] sm:$0xff]
  %v3346 = vld [vmem:[%s3342 + $0x28] sm:$0xff]
  %v3347 = vld [vmem:[%s3342 + $0x40] sm:$0xff]
  %v3348 = vld [vmem:[%s3342 + $0x48] sm:$0xff]
  %v3349 = vld [vmem:[%s3342 + $0x60] sm:$0xff]
  %v3350 = vld [vmem:[%s3342 + $0x68] sm:$0xff]
  %v3351 = vmax.f32 %v3334, %v3343
  %v3352 = vmax.f32 %v3335, %v3344
  %v3353 = vmax.f32 %v3336, %v3345
  %v3354 = vmax.f32 %v3337, %v3346
  %v3355 = vmax.f32 %v3338, %v3347
  %v3356 = vmax.f32 %v3339, %v3348
  %v3357 = vmax.f32 %v3340, %v3349
  %v3358 = vmax.f32 %v3341, %v3350
  %v3359 = vld [vmem:[%s7] sm:$0xff]
  %v3360 = vld [vmem:[%s7 + $0x8] sm:$0xff]
  %v3361 = vld [vmem:[%s7 + $0x10] sm:$0xff]
  %v3362 = vld [vmem:[%s7 + $0x18] sm:$0xff]
  %v3363 = vld [vmem:[%s7 + $0x20] sm:$0xff]
  %v3364 = vld [vmem:[%s7 + $0x28] sm:$0xff]
  %v3365 = vld [vmem:[%s7 + $0x30] sm:$0xff]
  %v3366 = vld [vmem:[%s7 + $0x38] sm:$0xff]
  %v3367 = vld [vmem:[%s7 + $0x40] sm:$0xff]
  %v3368 = vld [vmem:[%s7 + $0x48] sm:$0xff]
  %v3369 = vld [vmem:[%s7 + $0x50] sm:$0xff]
  %v3370 = vld [vmem:[%s7 + $0x58] sm:$0xff]
  %v3371 = vld [vmem:[%s7 + $0x60] sm:$0xff]
  %v3372 = vld [vmem:[%s7 + $0x68] sm:$0xff]
  %v3373 = vld [vmem:[%s7 + $0x70] sm:$0xff]
  %v3374 = vld [vmem:[%s7 + $0x78] sm:$0xff]
  %v3375 = vld [vmem:[%s7 + $0x80] sm:$0xff]
  %v3376 = vld [vmem:[%s7 + $0x88] sm:$0xff]
  %v3377 = vld [vmem:[%s7 + $0x90] sm:$0xff]
  %v3378 = vld [vmem:[%s7 + $0x98] sm:$0xff]
  %v3380 = vsel %vm3318, %v3352, 0
  %v3383 = vsel %vm3318, %v3354, 0
  %v3386 = vsel %vm3318, %v3356, 0
  %v3389 = vsel %vm3318, %v3358, 0
  %3391 = vmatprep.subr.mxu0 0.0
  %3392 = vmatpush1.msra.mxu0 %v3374
  %3393 = vmatprep.subr.mxu0 0.0
  %3394 = vmatpush1.msra.mxu0 %v3373
  %3395 = vmatprep.subr.mxu0 0.0
  %3396 = vmatpush1.msra.mxu0 %v3372
  %3397 = vmatprep.subr.mxu0 0.0
  %3398 = vmatpush1.msra.mxu0 %v3371
  %3399 = vmatprep.subr.mxu0 0.0
  %3400 = vmatpush1.msra.mxu0 %v3370
  %3401 = vmatprep.subr.mxu0 0.0
  %3402 = vmatpush1.msra.mxu0 %v3369
  %3403 = vmatprep.subr.mxu0 0.0
  %3404 = vmatpush1.msra.mxu0 %v3368
  %3405 = vmatprep.subr.mxu0 0.0
  %3406 = vmatpush1.msra.mxu0 %v3367
  %3407 = vmatprep.subr.mxu0 0.0
  %3408 = vmatpush1.msra.mxu0 %v3366
  %3409 = vmatprep.subr.mxu0 0.0
  %3410 = vmatpush1.msra.mxu0 %v3365
  %3411 = vmatprep.subr.mxu0 0.0
  %3412 = vmatpush1.msra.mxu0 %v3364
  %3413 = vmatprep.subr.mxu0 0.0
  %3414 = vmatpush1.msra.mxu0 %v3363
  %3415 = vmatprep.subr.mxu0 0.0
  %3416 = vmatpush1.msra.mxu0 %v3362
  %3417 = vmatprep.subr.mxu0 0.0
  %3418 = vmatpush1.msra.mxu0 %v3361
  %3419 = vmatprep.subr.mxu0 0.0
  %3420 = vmatpush1.msra.mxu0 %v3360
  %3421 = vmatprep.subr.mxu0 0.0
  %3422 = vmatpush1.msra.mxu0 %v3359
  %3423 = vmatprep.subr.mxu0 0.0
  %3424 = vmatpush2.msra.mxu0 0.0
  %3425 = vmatprep.subr.mxu0 0.0
  %3426 = vmatpush2.msra.mxu0 0.0
  %3427 = vmatprep.subr.mxu0 0.0
  %3428 = vmatpush2.msra.mxu0 0.0
  %3429 = vmatprep.subr.mxu0 0.0
  %3430 = vmatpush2.msra.mxu0 0.0
  %3431 = vmatprep.subr.mxu0 0.0
  %3432 = vmatpush2.msra.mxu0 0.0
  %3433 = vmatprep.subr.mxu0 0.0
  %3434 = vmatpush2.msra.mxu0 0.0
  %3435 = vmatprep.subr.mxu0 0.0
  %3436 = vmatpush2.msra.mxu0 0.0
  %3437 = vmatprep.subr.mxu0 0.0
  %3438 = vmatpush2.msra.mxu0 0.0
  %3439 = vmatprep.subr.mxu0 0.0
  %3440 = vmatpush2.msra.mxu0 0.0
  %3441 = vmatprep.subr.mxu0 0.0
  %3442 = vmatpush2.msra.mxu0 0.0
  %3443 = vmatprep.subr.mxu0 0.0
  %3444 = vmatpush2.msra.mxu0 0.0
  %3445 = vmatprep.subr.mxu0 0.0
  %3446 = vmatpush2.msra.mxu0 0.0
  %3447 = vmatprep.subr.mxu0 0.0
  %3448 = vmatpush2.msra.mxu0 %v3378
  %3449 = vmatprep.subr.mxu0 0.0
  %3450 = vmatpush2.msra.mxu0 %v3377
  %3451 = vmatprep.subr.mxu0 0.0
  %3452 = vmatpush2.msra.mxu0 %v3376
  %3453 = vmatprep.subr.mxu0 0.0
  %3454 = vmatpush2.msra.mxu0 %v3375
  %3455 = vmatprep.mubr.f32.mxu0 %v3380
  %3456 = vmatmul.mubr.f32.gmra.mxu0 %v3351
  %v3457 = vpop.f32.mrf.mxu0
  %v3458 = vadd.f32 0.0, %v3457
  %v3459 = vpop.f32.mrf.mxu0
  %3460 = vmatprep.mubr.f32.mxu0 %v3383
  %3461 = vmatmul.mubr.f32.gmra.mxu0 %v3353
  %v3462 = vpop.f32.mrf.mxu0
  %v3463 = vadd.f32 0.0, %v3462
  %v3464 = vpop.f32.mrf.mxu0
  %3465 = vmatprep.mubr.f32.mxu0 %v3386
  %3466 = vmatmul.mubr.f32.gmra.mxu0 %v3355
  %v3467 = vpop.f32.mrf.mxu0
  %v3468 = vadd.f32 0.0, %v3467
  %v3469 = vpop.f32.mrf.mxu0
  %3470 = vmatprep.mubr.f32.mxu0 %v3389
  %3471 = vmatmul.mubr.f32.gmra.mxu0 %v3357
  %v3472 = vpop.f32.mrf.mxu0
  %v3473 = vadd.f32 0.0, %v3472
  %v3474 = vpop.f32.mrf.mxu0
  %3475 = vdwg.mxu0
  %v3476 = vld [vmem:[%s8] sm:$0xff]
  %v3477 = vld [vmem:[%s8 + $0x8] sm:$0xff]
  %v3478 = vld [vmem:[%s8 + $0x10] sm:$0xff]
  %v3479 = vld [vmem:[%s8 + $0x18] sm:$0xff]
  %v3480 = vld [vmem:[%s8 + $0x20] sm:$0xff]
  %v3481 = vld [vmem:[%s8 + $0x28] sm:$0xff]
  %v3482 = vld [vmem:[%s8 + $0x30] sm:$0xff]
  %v3483 = vld [vmem:[%s8 + $0x38] sm:$0xff]
  %v3484 = vld [vmem:[%s8 + $0x40] sm:$0xff]
  %v3485 = vld [vmem:[%s8 + $0x48] sm:$0xff]
  %v3486 = vld [vmem:[%s8 + $0x50] sm:$0xff]
  %v3487 = vld [vmem:[%s8 + $0x58] sm:$0xff]
  %v3488 = vld [vmem:[%s8 + $0x60] sm:$0xff]
  %v3489 = vld [vmem:[%s8 + $0x68] sm:$0xff]
  %v3490 = vld [vmem:[%s8 + $0x70] sm:$0xff]
  %v3491 = vld [vmem:[%s8 + $0x78] sm:$0xff]
  %v3492 = vld [vmem:[%s8 + $0x80] sm:$0xff]
  %v3493 = vld [vmem:[%s8 + $0x88] sm:$0xff]
  %v3494 = vld [vmem:[%s8 + $0x90] sm:$0xff]
  %v3495 = vld [vmem:[%s8 + $0x98] sm:$0xff]
  %3496 = vmatprep.subr.mxu0 0.0
  %3497 = vmatpush1.msra.mxu0 %v3491
  %3498 = vmatprep.subr.mxu0 0.0
  %3499 = vmatpush1.msra.mxu0 %v3490
  %3500 = vmatprep.subr.mxu0 0.0
  %3501 = vmatpush1.msra.mxu0 %v3489
  %3502 = vmatprep.subr.mxu0 0.0
  %3503 = vmatpush1.msra.mxu0 %v3488
  %3504 = vmatprep.subr.mxu0 0.0
  %3505 = vmatpush1.msra.mxu0 %v3487
  %3506 = vmatprep.subr.mxu0 0.0
  %3507 = vmatpush1.msra.mxu0 %v3486
  %3508 = vmatprep.subr.mxu0 0.0
  %3509 = vmatpush1.msra.mxu0 %v3485
  %3510 = vmatprep.subr.mxu0 0.0
  %3511 = vmatpush1.msra.mxu0 %v3484
  %3512 = vmatprep.subr.mxu0 0.0
  %3513 = vmatpush1.msra.mxu0 %v3483
  %3514 = vmatprep.subr.mxu0 0.0
  %3515 = vmatpush1.msra.mxu0 %v3482
  %3516 = vmatprep.subr.mxu0 0.0
  %3517 = vmatpush1.msra.mxu0 %v3481
  %3518 = vmatprep.subr.mxu0 0.0
  %3519 = vmatpush1.msra.mxu0 %v3480
  %3520 = vmatprep.subr.mxu0 0.0
  %3521 = vmatpush1.msra.mxu0 %v3479
  %3522 = vmatprep.subr.mxu0 0.0
  %3523 = vmatpush1.msra.mxu0 %v3478
  %3524 = vmatprep.subr.mxu0 0.0
  %3525 = vmatpush1.msra.mxu0 %v3477
  %3526 = vmatprep.subr.mxu0 0.0
  %3527 = vmatpush1.msra.mxu0 %v3476
  %3528 = vmatprep.subr.mxu0 0.0
  %3529 = vmatpush2.msra.mxu0 0.0
  %3530 = vmatprep.subr.mxu0 0.0
  %3531 = vmatpush2.msra.mxu0 0.0
  %3532 = vmatprep.subr.mxu0 0.0
  %3533 = vmatpush2.msra.mxu0 0.0
  %3534 = vmatprep.subr.mxu0 0.0
  %3535 = vmatpush2.msra.mxu0 0.0
  %3536 = vmatprep.subr.mxu0 0.0
  %3537 = vmatpush2.msra.mxu0 0.0
  %3538 = vmatprep.subr.mxu0 0.0
  %3539 = vmatpush2.msra.mxu0 0.0
  %3540 = vmatprep.subr.mxu0 0.0
  %3541 = vmatpush2.msra.mxu0 0.0
  %3542 = vmatprep.subr.mxu0 0.0
  %3543 = vmatpush2.msra.mxu0 0.0
  %3544 = vmatprep.subr.mxu0 0.0
  %3545 = vmatpush2.msra.mxu0 0.0
  %3546 = vmatprep.subr.mxu0 0.0
  %3547 = vmatpush2.msra.mxu0 0.0
  %3548 = vmatprep.subr.mxu0 0.0
  %3549 = vmatpush2.msra.mxu0 0.0
  %3550 = vmatprep.subr.mxu0 0.0
  %3551 = vmatpush2.msra.mxu0 0.0
  %3552 = vmatprep.subr.mxu0 0.0
  %3553 = vmatpush2.msra.mxu0 %v3495
  %3554 = vmatprep.subr.mxu0 0.0
  %3555 = vmatpush2.msra.mxu0 %v3494
  %3556 = vmatprep.subr.mxu0 0.0
  %3557 = vmatpush2.msra.mxu0 %v3493
  %3558 = vmatprep.subr.mxu0 0.0
  %3559 = vmatpush2.msra.mxu0 %v3492
  %3560 = vmatprep.mubr.f32.mxu0 %v3380
  %3561 = vmatmul.mubr.f32.gmra.mxu0 %v3351
  %v3562 = vpop.f32.mrf.mxu0
  %v3563 = vadd.f32 0.0, %v3562
  %v3564 = vpop.f32.mrf.mxu0
  %3565 = vmatprep.mubr.f32.mxu0 %v3383
  %3566 = vmatmul.mubr.f32.gmra.mxu0 %v3353
  %v3567 = vpop.f32.mrf.mxu0
  %v3568 = vadd.f32 0.0, %v3567
  %v3569 = vpop.f32.mrf.mxu0
  %3570 = vmatprep.mubr.f32.mxu0 %v3386
  %3571 = vmatmul.mubr.f32.gmra.mxu0 %v3355
  %v3572 = vpop.f32.mrf.mxu0
  %v3573 = vadd.f32 0.0, %v3572
  %v3574 = vpop.f32.mrf.mxu0
  %3575 = vmatprep.mubr.f32.mxu0 %v3389
  %3576 = vmatmul.mubr.f32.gmra.mxu0 %v3357
  %v3577 = vpop.f32.mrf.mxu0
  %v3578 = vadd.f32 0.0, %v3577
  %v3579 = vpop.f32.mrf.mxu0
  %3580 = vdwg.mxu0
  %v3581 = vmax.f32 %v3458, %v3563
  %v3582 = vmax.f32 %v3463, %v3568
  %v3583 = vmax.f32 %v3468, %v3573
  %v3584 = vmax.f32 %v3473, %v3578
  %v3585 = vmax.f32 %v3581, 0.0
  %v3586 = vmax.f32 %v3582, 0.0
  %v3587 = vmax.f32 %v3583, 0.0
  %v3588 = vmax.f32 %v3584, 0.0
  %vm3589 = vcmask 654336
  %3590 = vst.msk [vmem:[#allocation5] sm:$0xff] %vm3589, %v3585
  %3591 = vst.msk [vmem:[#allocation5 + $0x8] sm:$0xff] %vm3589, %v3586
  %3592 = vst.msk [vmem:[#allocation5 + $0x10] sm:$0xff] %vm3589, %v3587
  %3593 = vst.msk [vmem:[#allocation5 + $0x18] sm:$0xff] %vm3589, %v3588
  %v3594 = vld [vmem:[#allocation5] sm:$0xff]
  %v3595 = vld [vmem:[%s9] sm:$0xff]
  %v3596 = vld [vmem:[%s9 + $0x8] sm:$0xff]
  %v3597 = vld [vmem:[%s9 + $0x10] sm:$0xff]
  %v3598 = vld [vmem:[%s9 + $0x18] sm:$0xff]
  %v3599 = vld [vmem:[%s9 + $0x20] sm:$0xff]
  %v3600 = vld [vmem:[%s9 + $0x28] sm:$0xff]
  %v3601 = vld [vmem:[%s9 + $0x30] sm:$0xff]
  %v3602 = vld [vmem:[%s9 + $0x38] sm:$0xff]
  %v3603 = vld [vmem:[%s9 + $0x40] sm:$0xff]
  %v3604 = vld [vmem:[%s9 + $0x48] sm:$0xff]
  %s3605 = scalar_lea.vmem [#allocation5], 8
  %v3606 = vld [vmem:[%s3605] sm:$0xff]
  %s3607 = scalar_lea.vmem %s9, 80
  %v3608 = vld [vmem:[%s3607] sm:$0xff]
  %v3609 = vld [vmem:[%s3607 + $0x8] sm:$0xff]
  %v3610 = vld [vmem:[%s3607 + $0x10] sm:$0xff]
  %v3611 = vld [vmem:[%s3607 + $0x18] sm:$0xff]
  %v3612 = vld [vmem:[%s3607 + $0x20] sm:$0xff]
  %v3613 = vld [vmem:[%s3607 + $0x28] sm:$0xff]
  %v3614 = vld [vmem:[%s3607 + $0x30] sm:$0xff]
  %v3615 = vld [vmem:[%s3607 + $0x38] sm:$0xff]
  %v3616 = vld [vmem:[%s3607 + $0x40] sm:$0xff]
  %v3617 = vld [vmem:[%s3607 + $0x48] sm:$0xff]
  %v3619 = vsel %vm3589, %v3606, 0
  %3621 = vmatprep.subr.mxu0 0.0
  %3622 = vmatpush1.msra.mxu0 0.0
  %3623 = vmatprep.subr.mxu0 0.0
  %3624 = vmatpush1.msra.mxu0 0.0
  %3625 = vmatprep.subr.mxu0 0.0
  %3626 = vmatpush1.msra.mxu0 0.0
  %3627 = vmatprep.subr.mxu0 0.0
  %3628 = vmatpush1.msra.mxu0 0.0
  %3629 = vmatprep.subr.mxu0 0.0
  %3630 = vmatpush1.msra.mxu0 0.0
  %3631 = vmatprep.subr.mxu0 0.0
  %3632 = vmatpush1.msra.mxu0 0.0
  %3633 = vmatprep.subr.mxu0 0.0
  %3634 = vmatpush1.msra.mxu0 %v3617
  %3635 = vmatprep.subr.mxu0 0.0
  %3636 = vmatpush1.msra.mxu0 %v3616
  %3637 = vmatprep.subr.mxu0 0.0
  %3638 = vmatpush1.msra.mxu0 %v3615
  %3639 = vmatprep.subr.mxu0 0.0
  %3640 = vmatpush1.msra.mxu0 %v3614
  %3641 = vmatprep.subr.mxu0 0.0
  %3642 = vmatpush1.msra.mxu0 %v3613
  %3643 = vmatprep.subr.mxu0 0.0
  %3644 = vmatpush1.msra.mxu0 %v3612
  %3645 = vmatprep.subr.mxu0 0.0
  %3646 = vmatpush1.msra.mxu0 %v3611
  %3647 = vmatprep.subr.mxu0 0.0
  %3648 = vmatpush1.msra.mxu0 %v3610
  %3649 = vmatprep.subr.mxu0 0.0
  %3650 = vmatpush1.msra.mxu0 %v3609
  %3651 = vmatprep.subr.mxu0 0.0
  %3652 = vmatpush1.msra.mxu0 %v3608
  %3653 = vmatprep.subr.mxu0 0.0
  %3654 = vmatpush2.msra.mxu0 0.0
  %3655 = vmatprep.subr.mxu0 0.0
  %3656 = vmatpush2.msra.mxu0 0.0
  %3657 = vmatprep.subr.mxu0 0.0
  %3658 = vmatpush2.msra.mxu0 0.0
  %3659 = vmatprep.subr.mxu0 0.0
  %3660 = vmatpush2.msra.mxu0 0.0
  %3661 = vmatprep.subr.mxu0 0.0
  %3662 = vmatpush2.msra.mxu0 0.0
  %3663 = vmatprep.subr.mxu0 0.0
  %3664 = vmatpush2.msra.mxu0 0.0
  %3665 = vmatprep.subr.mxu0 0.0
  %3666 = vmatpush2.msra.mxu0 0.0
  %3667 = vmatprep.subr.mxu0 0.0
  %3668 = vmatpush2.msra.mxu0 0.0
  %3669 = vmatprep.subr.mxu0 0.0
  %3670 = vmatpush2.msra.mxu0 0.0
  %3671 = vmatprep.subr.mxu0 0.0
  %3672 = vmatpush2.msra.mxu0 0.0
  %3673 = vmatprep.subr.mxu0 0.0
  %3674 = vmatpush2.msra.mxu0 0.0
  %3675 = vmatprep.subr.mxu0 0.0
  %3676 = vmatpush2.msra.mxu0 0.0
  %3677 = vmatprep.subr.mxu0 0.0
  %3678 = vmatpush2.msra.mxu0 0.0
  %3679 = vmatprep.subr.mxu0 0.0
  %3680 = vmatpush2.msra.mxu0 0.0
  %3681 = vmatprep.subr.mxu0 0.0
  %3682 = vmatpush2.msra.mxu0 0.0
  %3683 = vmatprep.subr.mxu0 0.0
  %3684 = vmatpush2.msra.mxu0 0.0
  %3685 = vmatprep.mubr.f32.mxu0 0.0
  %3686 = vmatmul.mubr.f32.gmra.mxu0 %v3619
  %v3687 = vpop.f32.mrf.mxu0
  %v3688 = vadd.f32 0.0, %v3687
  %v3689 = vpop.f32.mrf.mxu0
  %3690 = vdwg.mxu0
  %v3692 = vsel %vm3589, %v3594, 0
  %3694 = vmatprep.subr.mxu0 0.0
  %3695 = vmatpush1.msra.mxu0 0.0
  %3696 = vmatprep.subr.mxu0 0.0
  %3697 = vmatpush1.msra.mxu0 0.0
  %3698 = vmatprep.subr.mxu0 0.0
  %3699 = vmatpush1.msra.mxu0 0.0
  %3700 = vmatprep.subr.mxu0 0.0
  %3701 = vmatpush1.msra.mxu0 0.0
  %3702 = vmatprep.subr.mxu0 0.0
  %3703 = vmatpush1.msra.mxu0 0.0
  %3704 = vmatprep.subr.mxu0 0.0
  %3705 = vmatpush1.msra.mxu0 0.0
  %3706 = vmatprep.subr.mxu0 0.0
  %3707 = vmatpush1.msra.mxu0 %v3604
  %3708 = vmatprep.subr.mxu0 0.0
  %3709 = vmatpush1.msra.mxu0 %v3603
  %3710 = vmatprep.subr.mxu0 0.0
  %3711 = vmatpush1.msra.mxu0 %v3602
  %3712 = vmatprep.subr.mxu0 0.0
  %3713 = vmatpush1.msra.mxu0 %v3601
  %3714 = vmatprep.subr.mxu0 0.0
  %3715 = vmatpush1.msra.mxu0 %v3600
  %3716 = vmatprep.subr.mxu0 0.0
  %3717 = vmatpush1.msra.mxu0 %v3599
  %3718 = vmatprep.subr.mxu0 0.0
  %3719 = vmatpush1.msra.mxu0 %v3598
  %3720 = vmatprep.subr.mxu0 0.0
  %3721 = vmatpush1.msra.mxu0 %v3597
  %3722 = vmatprep.subr.mxu0 0.0
  %3723 = vmatpush1.msra.mxu0 %v3596
  %3724 = vmatprep.subr.mxu0 0.0
  %3725 = vmatpush1.msra.mxu0 %v3595
  %3726 = vmatprep.subr.mxu0 0.0
  %3727 = vmatpush2.msra.mxu0 0.0
  %3728 = vmatprep.subr.mxu0 0.0
  %3729 = vmatpush2.msra.mxu0 0.0
  %3730 = vmatprep.subr.mxu0 0.0
  %3731 = vmatpush2.msra.mxu0 0.0
  %3732 = vmatprep.subr.mxu0 0.0
  %3733 = vmatpush2.msra.mxu0 0.0
  %3734 = vmatprep.subr.mxu0 0.0
  %3735 = vmatpush2.msra.mxu0 0.0
  %3736 = vmatprep.subr.mxu0 0.0
  %3737 = vmatpush2.msra.mxu0 0.0
  %3738 = vmatprep.subr.mxu0 0.0
  %3739 = vmatpush2.msra.mxu0 0.0
  %3740 = vmatprep.subr.mxu0 0.0
  %3741 = vmatpush2.msra.mxu0 0.0
  %3742 = vmatprep.subr.mxu0 0.0
  %3743 = vmatpush2.msra.mxu0 0.0
  %3744 = vmatprep.subr.mxu0 0.0
  %3745 = vmatpush2.msra.mxu0 0.0
  %3746 = vmatprep.subr.mxu0 0.0
  %3747 = vmatpush2.msra.mxu0 0.0
  %3748 = vmatprep.subr.mxu0 0.0
  %3749 = vmatpush2.msra.mxu0 0.0
  %3750 = vmatprep.subr.mxu0 0.0
  %3751 = vmatpush2.msra.mxu0 0.0
  %3752 = vmatprep.subr.mxu0 0.0
  %3753 = vmatpush2.msra.mxu0 0.0
  %3754 = vmatprep.subr.mxu0 0.0
  %3755 = vmatpush2.msra.mxu0 0.0
  %3756 = vmatprep.subr.mxu0 0.0
  %3757 = vmatpush2.msra.mxu0 0.0
  %3758 = vmatprep.mubr.f32.mxu0 0.0
  %3759 = vmatmul.mubr.f32.gmra.mxu0 %v3692
  %v3760 = vpop.f32.mrf.mxu0
  %v3761 = vadd.f32 %v3688, %v3760
  %v3762 = vpop.f32.mrf.mxu0
  %3763 = vdwg.mxu0
  %s3764 = scalar_lea.vmem [#allocation5], 16
  %v3765 = vld [vmem:[%s3764] sm:$0xff]
  %s3766 = scalar_lea.vmem %s9, 160
  %v3767 = vld [vmem:[%s3766] sm:$0xff]
  %v3768 = vld [vmem:[%s3766 + $0x8] sm:$0xff]
  %v3769 = vld [vmem:[%s3766 + $0x10] sm:$0xff]
  %v3770 = vld [vmem:[%s3766 + $0x18] sm:$0xff]
  %v3771 = vld [vmem:[%s3766 + $0x20] sm:$0xff]
  %v3772 = vld [vmem:[%s3766 + $0x28] sm:$0xff]
  %v3773 = vld [vmem:[%s3766 + $0x30] sm:$0xff]
  %v3774 = vld [vmem:[%s3766 + $0x38] sm:$0xff]
  %v3775 = vld [vmem:[%s3766 + $0x40] sm:$0xff]
  %v3776 = vld [vmem:[%s3766 + $0x48] sm:$0xff]
  %v3778 = vsel %vm3589, %v3765, 0
  %3780 = vmatprep.subr.mxu0 0.0
  %3781 = vmatpush1.msra.mxu0 0.0
  %3782 = vmatprep.subr.mxu0 0.0
  %3783 = vmatpush1.msra.mxu0 0.0
  %3784 = vmatprep.subr.mxu0 0.0
  %3785 = vmatpush1.msra.mxu0 0.0
  %3786 = vmatprep.subr.mxu0 0.0
  %3787 = vmatpush1.msra.mxu0 0.0
  %3788 = vmatprep.subr.mxu0 0.0
  %3789 = vmatpush1.msra.mxu0 0.0
  %3790 = vmatprep.subr.mxu0 0.0
  %3791 = vmatpush1.msra.mxu0 0.0
  %3792 = vmatprep.subr.mxu0 0.0
  %3793 = vmatpush1.msra.mxu0 %v3776
  %3794 = vmatprep.subr.mxu0 0.0
  %3795 = vmatpush1.msra.mxu0 %v3775
  %3796 = vmatprep.subr.mxu0 0.0
  %3797 = vmatpush1.msra.mxu0 %v3774
  %3798 = vmatprep.subr.mxu0 0.0
  %3799 = vmatpush1.msra.mxu0 %v3773
  %3800 = vmatprep.subr.mxu0 0.0
  %3801 = vmatpush1.msra.mxu0 %v3772
  %3802 = vmatprep.subr.mxu0 0.0
  %3803 = vmatpush1.msra.mxu0 %v3771
  %3804 = vmatprep.subr.mxu0 0.0
  %3805 = vmatpush1.msra.mxu0 %v3770
  %3806 = vmatprep.subr.mxu0 0.0
  %3807 = vmatpush1.msra.mxu0 %v3769
  %3808 = vmatprep.subr.mxu0 0.0
  %3809 = vmatpush1.msra.mxu0 %v3768
  %3810 = vmatprep.subr.mxu0 0.0
  %3811 = vmatpush1.msra.mxu0 %v3767
  %3812 = vmatprep.subr.mxu0 0.0
  %3813 = vmatpush2.msra.mxu0 0.0
  %3814 = vmatprep.subr.mxu0 0.0
  %3815 = vmatpush2.msra.mxu0 0.0
  %3816 = vmatprep.subr.mxu0 0.0
  %3817 = vmatpush2.msra.mxu0 0.0
  %3818 = vmatprep.subr.mxu0 0.0
  %3819 = vmatpush2.msra.mxu0 0.0
  %3820 = vmatprep.subr.mxu0 0.0
  %3821 = vmatpush2.msra.mxu0 0.0
  %3822 = vmatprep.subr.mxu0 0.0
  %3823 = vmatpush2.msra.mxu0 0.0
  %3824 = vmatprep.subr.mxu0 0.0
  %3825 = vmatpush2.msra.mxu0 0.0
  %3826 = vmatprep.subr.mxu0 0.0
  %3827 = vmatpush2.msra.mxu0 0.0
  %3828 = vmatprep.subr.mxu0 0.0
  %3829 = vmatpush2.msra.mxu0 0.0
  %3830 = vmatprep.subr.mxu0 0.0
  %3831 = vmatpush2.msra.mxu0 0.0
  %3832 = vmatprep.subr.mxu0 0.0
  %3833 = vmatpush2.msra.mxu0 0.0
  %3834 = vmatprep.subr.mxu0 0.0
  %3835 = vmatpush2.msra.mxu0 0.0
  %3836 = vmatprep.subr.mxu0 0.0
  %3837 = vmatpush2.msra.mxu0 0.0
  %3838 = vmatprep.subr.mxu0 0.0
  %3839 = vmatpush2.msra.mxu0 0.0
  %3840 = vmatprep.subr.mxu0 0.0
  %3841 = vmatpush2.msra.mxu0 0.0
  %3842 = vmatprep.subr.mxu0 0.0
  %3843 = vmatpush2.msra.mxu0 0.0
  %3844 = vmatprep.mubr.f32.mxu0 0.0
  %3845 = vmatmul.mubr.f32.gmra.mxu0 %v3778
  %v3846 = vpop.f32.mrf.mxu0
  %v3847 = vadd.f32 0.0, %v3846
  %v3848 = vpop.f32.mrf.mxu0
  %3849 = vdwg.mxu0
  %v3850 = vadd.f32 %v3761, %v3847
  %s3851 = scalar_lea.vmem [#allocation5], 24
  %v3852 = vld [vmem:[%s3851] sm:$0xff]
  %s3853 = scalar_lea.vmem %s9, 240
  %v3854 = vld [vmem:[%s3853] sm:$0xff]
  %v3855 = vld [vmem:[%s3853 + $0x8] sm:$0xff]
  %v3856 = vld [vmem:[%s3853 + $0x10] sm:$0xff]
  %v3857 = vld [vmem:[%s3853 + $0x18] sm:$0xff]
  %v3858 = vld [vmem:[%s3853 + $0x20] sm:$0xff]
  %v3859 = vld [vmem:[%s3853 + $0x28] sm:$0xff]
  %v3860 = vld [vmem:[%s3853 + $0x30] sm:$0xff]
  %v3861 = vld [vmem:[%s3853 + $0x38] sm:$0xff]
  %v3862 = vld [vmem:[%s3853 + $0x40] sm:$0xff]
  %v3863 = vld [vmem:[%s3853 + $0x48] sm:$0xff]
  %v3865 = vsel %vm3589, %v3852, 0
  %3867 = vmatprep.subr.mxu0 0.0
  %3868 = vmatpush1.msra.mxu0 0.0
  %3869 = vmatprep.subr.mxu0 0.0
  %3870 = vmatpush1.msra.mxu0 0.0
  %3871 = vmatprep.subr.mxu0 0.0
  %3872 = vmatpush1.msra.mxu0 0.0
  %3873 = vmatprep.subr.mxu0 0.0
  %3874 = vmatpush1.msra.mxu0 0.0
  %3875 = vmatprep.subr.mxu0 0.0
  %3876 = vmatpush1.msra.mxu0 0.0
  %3877 = vmatprep.subr.mxu0 0.0
  %3878 = vmatpush1.msra.mxu0 0.0
  %3879 = vmatprep.subr.mxu0 0.0
  %3880 = vmatpush1.msra.mxu0 %v3863
  %3881 = vmatprep.subr.mxu0 0.0
  %3882 = vmatpush1.msra.mxu0 %v3862
  %3883 = vmatprep.subr.mxu0 0.0
  %3884 = vmatpush1.msra.mxu0 %v3861
  %3885 = vmatprep.subr.mxu0 0.0
  %3886 = vmatpush1.msra.mxu0 %v3860
  %3887 = vmatprep.subr.mxu0 0.0
  %3888 = vmatpush1.msra.mxu0 %v3859
  %3889 = vmatprep.subr.mxu0 0.0
  %3890 = vmatpush1.msra.mxu0 %v3858
  %3891 = vmatprep.subr.mxu0 0.0
  %3892 = vmatpush1.msra.mxu0 %v3857
  %3893 = vmatprep.subr.mxu0 0.0
  %3894 = vmatpush1.msra.mxu0 %v3856
  %3895 = vmatprep.subr.mxu0 0.0
  %3896 = vmatpush1.msra.mxu0 %v3855
  %3897 = vmatprep.subr.mxu0 0.0
  %3898 = vmatpush1.msra.mxu0 %v3854
  %3899 = vmatprep.subr.mxu0 0.0
  %3900 = vmatpush2.msra.mxu0 0.0
  %3901 = vmatprep.subr.mxu0 0.0
  %3902 = vmatpush2.msra.mxu0 0.0
  %3903 = vmatprep.subr.mxu0 0.0
  %3904 = vmatpush2.msra.mxu0 0.0
  %3905 = vmatprep.subr.mxu0 0.0
  %3906 = vmatpush2.msra.mxu0 0.0
  %3907 = vmatprep.subr.mxu0 0.0
  %3908 = vmatpush2.msra.mxu0 0.0
  %3909 = vmatprep.subr.mxu0 0.0
  %3910 = vmatpush2.msra.mxu0 0.0
  %3911 = vmatprep.subr.mxu0 0.0
  %3912 = vmatpush2.msra.mxu0 0.0
  %3913 = vmatprep.subr.mxu0 0.0
  %3914 = vmatpush2.msra.mxu0 0.0
  %3915 = vmatprep.subr.mxu0 0.0
  %3916 = vmatpush2.msra.mxu0 0.0
  %3917 = vmatprep.subr.mxu0 0.0
  %3918 = vmatpush2.msra.mxu0 0.0
  %3919 = vmatprep.subr.mxu0 0.0
  %3920 = vmatpush2.msra.mxu0 0.0
  %3921 = vmatprep.subr.mxu0 0.0
  %3922 = vmatpush2.msra.mxu0 0.0
  %3923 = vmatprep.subr.mxu0 0.0
  %3924 = vmatpush2.msra.mxu0 0.0
  %3925 = vmatprep.subr.mxu0 0.0
  %3926 = vmatpush2.msra.mxu0 0.0
  %3927 = vmatprep.subr.mxu0 0.0
  %3928 = vmatpush2.msra.mxu0 0.0
  %3929 = vmatprep.subr.mxu0 0.0
  %3930 = vmatpush2.msra.mxu0 0.0
  %3931 = vmatprep.mubr.f32.mxu0 0.0
  %3932 = vmatmul.mubr.f32.gmra.mxu0 %v3865
  %v3933 = vpop.f32.mrf.mxu0
  %v3934 = vadd.f32 0.0, %v3933
  %v3935 = vpop.f32.mrf.mxu0
  %3936 = vdwg.mxu0
  %v3937 = vadd.f32 %v3850, %v3934
  %v3938 = vld [vmem:[%s10] sm:$0x1]
  %v3940 = vlaneseq
  %v3941 = vshrl.u32 %v3940, 7
  %v3942 = vsub.s32 0, %v3941
  %v3943 = vrot.slane %v3938, %v3942
  %v3945 = vadd.f32 %v3937, %v3943
  %v3946 = vmax.f32 %v3945, 0.0
  %v3947 = vld [vmem:[%s11] sm:$0xff]
  %v3948 = vld [vmem:[%s11 + $0x8] sm:$0xff]
  %v3949 = vld [vmem:[%s11 + $0x10] sm:$0xff]
  %v3950 = vld [vmem:[%s11 + $0x18] sm:$0xff]
  %v3951 = vld [vmem:[%s11 + $0x20] sm:$0xff]
  %v3952 = vld [vmem:[%s11 + $0x28] sm:$0xff]
  %v3953 = vld [vmem:[%s11 + $0x30] sm:$0x3]
  %v3954 = vld [vmem:[%s12] sm:$0x1]
  %v3956 = vlaneseq
  %v3957 = vshrl.u32 %v3956, 7
  %v3958 = vsub.s32 0, %v3957
  %v3959 = vrot.slane %v3954, %v3958
  %vm3961 = vcmask 408576
  %v3963 = vsel %vm3961, %v3946, 0
  %vm3965 = vcmask 1041408
  %v3967 = vsel %vm3965, %v3953, 0
  %3969 = vmatprep.subr.mxu0 0.0
  %3970 = vmatpush1.msra.mxu0 0.0
  %3971 = vmatprep.subr.mxu0 0.0
  %3972 = vmatpush1.msra.mxu0 0.0
  %3973 = vmatprep.subr.mxu0 0.0
  %3974 = vmatpush1.msra.mxu0 0.0
  %3975 = vmatprep.subr.mxu0 0.0
  %3976 = vmatpush1.msra.mxu0 0.0
  %3977 = vmatprep.subr.mxu0 0.0
  %3978 = vmatpush1.msra.mxu0 0.0
  %3979 = vmatprep.subr.mxu0 0.0
  %3980 = vmatpush1.msra.mxu0 0.0
  %3981 = vmatprep.subr.mxu0 0.0
  %3982 = vmatpush1.msra.mxu0 0.0
  %3983 = vmatprep.subr.mxu0 0.0
  %3984 = vmatpush1.msra.mxu0 0.0
  %3985 = vmatprep.subr.mxu0 0.0
  %3986 = vmatpush1.msra.mxu0 0.0
  %3987 = vmatprep.subr.mxu0 0.0
  %3988 = vmatpush1.msra.mxu0 %v3967
  %3989 = vmatprep.subr.mxu0 0.0
  %3990 = vmatpush1.msra.mxu0 %v3952
  %3991 = vmatprep.subr.mxu0 0.0
  %3992 = vmatpush1.msra.mxu0 %v3951
  %3993 = vmatprep.subr.mxu0 0.0
  %3994 = vmatpush1.msra.mxu0 %v3950
  %3995 = vmatprep.subr.mxu0 0.0
  %3996 = vmatpush1.msra.mxu0 %v3949
  %3997 = vmatprep.subr.mxu0 0.0
  %3998 = vmatpush1.msra.mxu0 %v3948
  %3999 = vmatprep.subr.mxu0 0.0
  %4000 = vmatpush1.msra.mxu0 %v3947
  %4001 = vmatprep.subr.mxu0 0.0
  %4002 = vmatpush2.msra.mxu0 0.0
  %4003 = vmatprep.subr.mxu0 0.0
  %4004 = vmatpush2.msra.mxu0 0.0
  %4005 = vmatprep.subr.mxu0 0.0
  %4006 = vmatpush2.msra.mxu0 0.0
  %4007 = vmatprep.subr.mxu0 0.0
  %4008 = vmatpush2.msra.mxu0 0.0
  %4009 = vmatprep.subr.mxu0 0.0
  %4010 = vmatpush2.msra.mxu0 0.0
  %4011 = vmatprep.subr.mxu0 0.0
  %4012 = vmatpush2.msra.mxu0 0.0
  %4013 = vmatprep.subr.mxu0 0.0
  %4014 = vmatpush2.msra.mxu0 0.0
  %4015 = vmatprep.subr.mxu0 0.0
  %4016 = vmatpush2.msra.mxu0 0.0
  %4017 = vmatprep.subr.mxu0 0.0
  %4018 = vmatpush2.msra.mxu0 0.0
  %4019 = vmatprep.subr.mxu0 0.0
  %4020 = vmatpush2.msra.mxu0 0.0
  %4021 = vmatprep.subr.mxu0 0.0
  %4022 = vmatpush2.msra.mxu0 0.0
  %4023 = vmatprep.subr.mxu0 0.0
  %4024 = vmatpush2.msra.mxu0 0.0
  %4025 = vmatprep.subr.mxu0 0.0
  %4026 = vmatpush2.msra.mxu0 0.0
  %4027 = vmatprep.subr.mxu0 0.0
  %4028 = vmatpush2.msra.mxu0 0.0
  %4029 = vmatprep.subr.mxu0 0.0
  %4030 = vmatpush2.msra.mxu0 0.0
  %4031 = vmatprep.subr.mxu0 0.0
  %4032 = vmatpush2.msra.mxu0 0.0
  %4033 = vmatprep.mubr.f32.mxu0 0.0
  %4034 = vmatmul.mubr.f32.gmra.mxu0 %v3963
  %v4035 = vpop.f32.mrf.mxu0
  %v4036 = vadd.f32 %v3959, %v4035
  %v4037 = vpop.f32.mrf.mxu0
  %4038 = vdwg.mxu0
  %vm4039 = vcmask 80896
  %v4040 = vsel %vm4039, %v4036, -inf
  %4041 = vmax.xlane.f32.xlu0 %v4040
  %v4042 = vpop.xlane.xlu0 %4041
  %v4043 = vsub.f32 %v4036, %v4042
  %v4044 = vmul.f32 %v4043, 1.442695
  %v4045 = vpow.pop %v4044
  %v4046 = vsel %vm4039, %v4045, 0.0
  %4047 = vadd.xlane.f32.xlu0 %v4046
  %v4048 = vpop.xlane.xlu0 %4047
  %v4049 = vlog2.pop %v4048
  %v4050 = vmul.f32 %v4049, 0.6931472
  %v4051 = vsub.f32 %v4043, %v4050
  %4052 = vst.msk [vmem:[%s13] sm:$0xff] %vm4039, %v4051
  // Predicated region
  $region54: #{net_forward.1} parent=0 // pred_check
    _
  $region55: #{net_forward.1} parent=0 // pred_check_branch
    %4054 = sbr.rel (0) target = $region57
  $region56: #{net_forward.1} parent=0 // pred_region
    _
  $region57: #{net_forward.1} parent=0 // pred_fallthru
    _
  // Predicated region
  $region58: #{net_forward.1} parent=0 // pred_check
    _
  $region59: #{net_forward.1} parent=0 // pred_check_branch
    %4056 = sbr.rel (0) target = $region61
  $region60: #{net_forward.1} parent=0 // pred_region
    _
  $region61: #{net_forward.1} parent=0 // pred_fallthru
    _

</llo_original>
